<compile_context>
chip_gen: v6e
topology: v6e:2x2x1
jax: 0.10.0
libtpu: 0.0.40
codegen_flags: <defaults>
</compile_context>

<pallas_src>
import math
import functools

import jax
import jax.numpy as jnp
from jax.experimental import pallas as pl
from jax.experimental.pallas import tpu as pltpu


def _self_attention_kernel(x_ref, wk_ref, wq_ref, wv_ref, wu_ref, bu_ref,
                           o_ref, k_scr, v_scr, head_scr,
                           *, num_heads: int, mask: bool, q_tile: int):
    """One (batch, query-tile) grid step.

    x_ref   : (1, S, E) bf16 — full sequence for this batch (resident per b)
    wk/wq/wv/wu_ref : (E, E) bf16, (in, out) layout
    bu_ref  : (1, E) f32
    o_ref   : (1, q_tile, E) output dtype
    k_scr/v_scr : (S, E) bf16 VMEM — K/V cache, carried across the q-tile axis
    head_scr    : (q_tile, E) bf16 VMEM — concatenated per-head outputs
    """
    qi = pl.program_id(1)
    _, S, E = x_ref.shape
    hs = E // num_heads

    # --- K/V projections: computed ONCE per batch (qi == 0), cached in VMEM. ---
    @pl.when(qi == 0)
    def _():
        x_full = x_ref[0]                                             # (S, E) bf16
        k_scr[...] = jnp.dot(x_full, wk_ref[...],
                             preferred_element_type=jnp.float32).astype(jnp.bfloat16)
        v_scr[...] = jnp.dot(x_full, wv_ref[...],
                             preferred_element_type=jnp.float32).astype(jnp.bfloat16)

    # --- Query projection for this q-tile, rows sliced from the resident x block. ---
    q0 = pl.multiple_of(qi * q_tile, q_tile)
    xq = x_ref[0, pl.ds(q0, q_tile), :]                               # (Sq, E) bf16
    qf = jnp.dot(xq, wq_ref[...], preferred_element_type=jnp.float32)  # (Sq, E) f32
    # Both 1/E**0.25 scalings (applied to q and k in the PyTorch code) folded
    # into a single f32 multiply on q before the bf16 cast.
    qb = (qf * (float(E) ** -0.5)).astype(jnp.bfloat16)

    # Hoisted causal mask (strictly-upper triangle == mask_(..., mask_diagonal=False)),
    # built once per grid step and reused by every head; finite negative, not -inf.
    if mask:
        row = q0 + jax.lax.broadcasted_iota(jnp.int32, (q_tile, S), 0)
        col = jax.lax.broadcasted_iota(jnp.int32, (q_tile, S), 1)
        masked = col > row

    # --- Per-head attention.  Each head writes its (Sq, hs) output into its lane
    # slot of head_scr so unify_heads runs as one full-K matmul afterwards. ---
    # TODO(synk): switch to lax.fori_loop / a head-group grid axis when num_heads
    # is large (bounds per-head live ranges); static unroll is fine for H = 8.
    for h in range(num_heads):
        sl = slice(h * hs, (h + 1) * hs)
        qh = qb[:, sl]                                  # (Sq, hs) bf16
        kh = k_scr[:, sl]                               # (S,  hs) bf16 from cache
        vh = v_scr[:, sl]                               # (S,  hs) bf16 from cache

        # scores = qh @ kh^T via contraction of the last dims (MXU trans_b path).
        s = jax.lax.dot_general(qh, kh, (((1,), (1,)), ((), ())),
                                preferred_element_type=jnp.float32)   # (Sq, S) f32
        if mask:
            s = jnp.where(masked, jnp.float32(-1e30), s)

        # Numerically-stable softmax in f32.
        m = jnp.max(s, axis=-1, keepdims=True)
        e = jnp.exp(s - m)                                            # (Sq, S) f32
        inv_l = pl.reciprocal(jnp.sum(e, axis=-1, keepdims=True), approx=True)

        # Deferred normalization: matmul the un-normalized probs, then scale the
        # small (Sq, hs) result instead of the (Sq, S) probability matrix.
        oh = jnp.dot(e.astype(jnp.bfloat16), vh,
                     preferred_element_type=jnp.float32)              # (Sq, hs) f32
        head_scr[:, sl] = (oh * inv_l).astype(jnp.bfloat16)

    # --- unify_heads as a single (Sq, E) @ (E, E) matmul (contraction K = E). ---
    y = jnp.dot(head_scr[...], wu_ref[...], preferred_element_type=jnp.float32)
    o_ref[0] = (y + bu_ref[...]).astype(o_ref.dtype)


def _default_vmem_limit_bytes():
    try:
        cap = pltpu.get_tpu_info().vmem_capacity_bytes
    except Exception:
        cap = 64 * 1024 * 1024
    # ~112 MiB on v5e/v6e (128 MiB physical), ~56 MiB on v7x (64 MiB physical).
    return int(cap * 7 // 8)


def self_attention(x, wk, wq, wv, wu, bu, *, num_heads: int, mask: bool = False,
                   q_tile=None, vmem_limit_bytes=None):
    """x: (B, S, E); wk/wq/wv/wu: (E, E) in (in, out) layout; bu: (E,)."""
    B, S, E = x.shape
    assert E % num_heads == 0

    # Query-tile axis: whole sequence at small S; otherwise 256, dropping to 128
    # when the resident working set (weights + K/V cache) is already large
    # (keeps v7x inside its 64 MiB VMEM).  Callers may override.
    if q_tile is None:
        if S <= 256:
            q_tile = S
        else:
            resident_bytes = (2 * S * E + 4 * E * E) * 2   # bf16 K/V scratch + weights
            q_tile = 128 if resident_bytes > (24 << 20) else 256
    assert S % q_tile == 0 and (q_tile == S or q_tile % 8 == 0)
    n_q = S // q_tile

    if vmem_limit_bytes is None:
        vmem_limit_bytes = _default_vmem_limit_bytes()

    # bf16 MXU operands; bias stays f32 (added after f32 accumulation).
    xb = x.astype(jnp.bfloat16)
    wkb = wk.astype(jnp.bfloat16)
    wqb = wq.astype(jnp.bfloat16)
    wvb = wv.astype(jnp.bfloat16)
    wub = wu.astype(jnp.bfloat16)
    bu2 = bu.reshape(1, E).astype(jnp.float32)

    kernel = functools.partial(_self_attention_kernel,
                               num_heads=num_heads, mask=mask, q_tile=q_tile)

    def build_and_run(single_buffer_weights: bool):
        wmode = ({"pipeline_mode": pl.Buffered(1)} if single_buffer_weights else {})

        def w_spec():
            return pl.BlockSpec((E, E), lambda b, qi: (0, 0), **wmode)

        return pl.pallas_call(
            kernel,
            out_shape=jax.ShapeDtypeStruct((B, S, E), x.dtype),
            grid_spec=pltpu.PrefetchScalarGridSpec(
                num_scalar_prefetch=0,
                grid=(B, n_q),
                in_specs=[
                    # x: one full (S, E) block per batch; re-DMA'd only when b changes.
                    pl.BlockSpec((1, S, E), lambda b, qi: (b, 0, 0)),
                    w_spec(),                                     # Wk
                    w_spec(),                                     # Wq
                    w_spec(),                                     # Wv
                    w_spec(),                                     # Wu
                    pl.BlockSpec((1, E), lambda b, qi: (0, 0), **wmode),  # bu
                ],
                out_specs=pl.BlockSpec((1, q_tile, E), lambda b, qi: (b, qi, 0)),
                scratch_shapes=[
                    pltpu.VMEM((S, E), jnp.bfloat16),       # K cache (per batch)
                    pltpu.VMEM((S, E), jnp.bfloat16),       # V cache (per batch)
                    pltpu.VMEM((q_tile, E), jnp.bfloat16),  # concatenated head outputs
                ],
            ),
            compiler_params=pltpu.CompilerParams(
                # q-tile axis MUST be "arbitrary": K/V scratch is carried across it.
                dimension_semantics=("parallel", "arbitrary"),
                vmem_limit_bytes=vmem_limit_bytes,
            ),
        )(xb, wkb, wqb, wvb, wub, bu2)

    try:
        return build_and_run(True)
    except Exception:
        # Fallback for JAX builds that reject pl.Buffered(1) single-buffering.
        return build_and_run(False)


def self_attention_reference(x, wk, wq, wv, wu, bu, *, num_heads: int, mask: bool = False):
    """Pure-JAX f32 reference replicating the PyTorch forward exactly."""
    B, S, E = x.shape
    hs = E // num_heads
    scale = E ** (1 / 4)
    k = (x @ wk).reshape(B, S, num_heads, hs).transpose(0, 2, 1, 3) / scale
    q = (x @ wq).reshape(B, S, num_heads, hs).transpose(0, 2, 1, 3) / scale
    v = (x @ wv).reshape(B, S, num_heads, hs).transpose(0, 2, 1, 3)
    dot = jnp.einsum('bhqd,bhkd->bhqk', q, k)
    if mask:
        row = jax.lax.broadcasted_iota(jnp.int32, (S, S), 0)
        col = jax.lax.broadcasted_iota(jnp.int32, (S, S), 1)
        dot = jnp.where((col > row)[None, None], -jnp.inf, dot)
    att = jax.nn.softmax(dot, axis=-1)
    out = jnp.einsum('bhqk,bhkd->bhqd', att, v)
    out = out.transpose(0, 2, 1, 3).reshape(B, S, E)
    return out @ wu + bu


if __name__ == "__main__":
    # Small shapes consistent with the module: batch=2, seq=8, emb=32, heads=8.
    B, S, E, H = 2, 8, 32, 8

    key = jax.random.PRNGKey(0)
    kx, kk, kq, kv, ku, kb = jax.random.split(key, 6)

    x = jax.random.normal(kx, (B, S, E), dtype=jnp.float32)

    # Deterministic synthetic parameters.  nn.Linear stores W as (out, in) and
    # computes x @ W^T; here we directly build the (in, out) matrices.
    bound = 1.0 / math.sqrt(E)
    wk = jax.random.uniform(kk, (E, E), jnp.float32, -bound, bound)
    wq = jax.random.uniform(kq, (E, E), jnp.float32, -bound, bound)
    wv = jax.random.uniform(kv, (E, E), jnp.float32, -bound, bound)
    wu = jax.random.uniform(ku, (E, E), jnp.float32, -bound, bound)
    bu = jax.random.uniform(kb, (E,), jnp.float32, -bound, bound)

    for use_mask in (False, True):
        out = self_attention(x, wk, wq, wv, wu, bu, num_heads=H, mask=use_mask)
        out = jax.block_until_ready(out)
        ref = self_attention_reference(x, wk, wq, wv, wu, bu, num_heads=H, mask=use_mask)
        assert out.shape == (B, S, E)
        # bf16 MXU operands (f32 accumulation) => loosened tolerance vs f32 reference.
        assert jnp.allclose(out, ref, atol=2e-2, rtol=2e-2), \
            f"Pallas kernel mismatch vs reference (mask={use_mask})"

    print("KERNEL_OK")
</pallas_src>

<mosaic_0001>
module attributes {stable_mosaic.version = 11 : i64} {
  func.func @_self_attention_kernel(%arg0: i32, %arg1: i32, %arg2: memref<1x8x32xbf16, #tpu.memory_space<vmem>>, %arg3: memref<32x32xbf16, #tpu.memory_space<vmem>>, %arg4: memref<32x32xbf16, #tpu.memory_space<vmem>>, %arg5: memref<32x32xbf16, #tpu.memory_space<vmem>>, %arg6: memref<32x32xbf16, #tpu.memory_space<vmem>>, %arg7: memref<1x32xf32, #tpu.memory_space<vmem>>, %arg8: memref<1x8x32xf32, #tpu.memory_space<vmem>>, %arg9: memref<8x32xbf16, #tpu.memory_space<vmem>>, %arg10: memref<8x32xbf16, #tpu.memory_space<vmem>>, %arg11: memref<8x32xbf16, #tpu.memory_space<vmem>>) attributes {dimension_semantics = [#tpu.dimension_semantics<parallel>, #tpu.dimension_semantics<arbitrary>], iteration_bounds = array<i64: 2, 1>, scalar_prefetch = 0 : i64, scratch_operands = 3 : i64, tpu.core_type = #tpu.core_type<tc>, window_params = [{transform_indices = @transform_0, window_bounds = array<i64: 1, 8, 32>}, {pipeline_mode = #tpu.pipeline_mode<synchronous>, transform_indices = @transform_1, window_bounds = array<i64: 32, 32>}, {pipeline_mode = #tpu.pipeline_mode<synchronous>, transform_indices = @transform_2, window_bounds = array<i64: 32, 32>}, {pipeline_mode = #tpu.pipeline_mode<synchronous>, transform_indices = @transform_3, window_bounds = array<i64: 32, 32>}, {pipeline_mode = #tpu.pipeline_mode<synchronous>, transform_indices = @transform_4, window_bounds = array<i64: 32, 32>}, {pipeline_mode = #tpu.pipeline_mode<synchronous>, transform_indices = @transform_5, window_bounds = array<i64: 1, 32>}, {transform_indices = @transform_6, window_bounds = array<i64: 1, 8, 32>}]} {
    %c0_i32 = arith.constant 0 : i32
    %0 = arith.cmpi eq, %arg1, %c0_i32 : i32
    %1 = arith.extui %0 : i1 to i32
    %c0_i32_0 = arith.constant 0 : i32
    %2 = arith.cmpi ne, %1, %c0_i32_0 : i32
    scf.if %2 {
      %c0_88 = arith.constant 0 : index
      %c0_89 = arith.constant 0 : index
      %c0_90 = arith.constant 0 : index
      %166 = vector.load %arg2[%c0_88, %c0_89, %c0_90] : memref<1x8x32xbf16, #tpu.memory_space<vmem>>, vector<1x8x32xbf16>
      %167 = vector.shape_cast %166 : vector<1x8x32xbf16> to vector<8x32xbf16>
      %c0_91 = arith.constant 0 : index
      %c0_92 = arith.constant 0 : index
      %168 = vector.load %arg3[%c0_91, %c0_92] : memref<32x32xbf16, #tpu.memory_space<vmem>>, vector<32x32xbf16>
      %cst_93 = arith.constant dense<0.000000e+00> : vector<8x32xf32>
      %169 = tpu.matmul %167, %168, %cst_93 {dimension_numbers = #tpu.dot_dimension_numbers<[1], [0], [0], [1], [0, 0, 1, 1], [], []>} : vector<8x32xbf16>, vector<32x32xbf16>, vector<8x32xf32> -> vector<8x32xf32>
      %170 = arith.truncf %169 : vector<8x32xf32> to vector<8x32xbf16>
      %c0_94 = arith.constant 0 : index
      %c0_95 = arith.constant 0 : index
      %171 = vector.load %arg9[%c0_94, %c0_95] : memref<8x32xbf16, #tpu.memory_space<vmem>>, vector<8x32xbf16>
      tpu.vector_store %arg9[%c0_94, %c0_95], %170 {strides = array<i32>} : memref<8x32xbf16, #tpu.memory_space<vmem>>, vector<8x32xbf16>,
      %c0_96 = arith.constant 0 : index
      %c0_97 = arith.constant 0 : index
      %172 = vector.load %arg5[%c0_96, %c0_97] : memref<32x32xbf16, #tpu.memory_space<vmem>>, vector<32x32xbf16>
      %cst_98 = arith.constant dense<0.000000e+00> : vector<8x32xf32>
      %173 = tpu.matmul %167, %172, %cst_98 {dimension_numbers = #tpu.dot_dimension_numbers<[1], [0], [0], [1], [0, 0, 1, 1], [], []>} : vector<8x32xbf16>, vector<32x32xbf16>, vector<8x32xf32> -> vector<8x32xf32>
      %174 = arith.truncf %173 : vector<8x32xf32> to vector<8x32xbf16>
      %c0_99 = arith.constant 0 : index
      %c0_100 = arith.constant 0 : index
      %175 = vector.load %arg10[%c0_99, %c0_100] : memref<8x32xbf16, #tpu.memory_space<vmem>>, vector<8x32xbf16>
      tpu.vector_store %arg10[%c0_99, %c0_100], %174 {strides = array<i32>} : memref<8x32xbf16, #tpu.memory_space<vmem>>, vector<8x32xbf16>,
    } else {
    }
    %c8_i32 = arith.constant 8 : i32
    %3 = arith.muli %arg1, %c8_i32 : i32
    %4 = tpu.assume_multiple %3, 8 : i32
    %c0 = arith.constant 0 : index
    %5 = arith.index_cast %4 : i32 to index
    %c0_1 = arith.constant 0 : index
    %6 = vector.load %arg2[%c0, %5, %c0_1] : memref<1x8x32xbf16, #tpu.memory_space<vmem>>, vector<1x8x32xbf16>
    %7 = vector.shape_cast %6 : vector<1x8x32xbf16> to vector<8x32xbf16>
    %c0_2 = arith.constant 0 : index
    %c0_3 = arith.constant 0 : index
    %8 = vector.load %arg4[%c0_2, %c0_3] : memref<32x32xbf16, #tpu.memory_space<vmem>>, vector<32x32xbf16>
    %cst = arith.constant dense<0.000000e+00> : vector<8x32xf32>
    %9 = tpu.matmul %7, %8, %cst {dimension_numbers = #tpu.dot_dimension_numbers<[1], [0], [0], [1], [0, 0, 1, 1], [], []>} : vector<8x32xbf16>, vector<32x32xbf16>, vector<8x32xf32> -> vector<8x32xf32>
    %cst_4 = arith.constant 0.176776692 : f32
    %10 = vector.broadcast %cst_4 : f32 to vector<8x32xf32>
    %11 = arith.mulf %9, %10 : vector<8x32xf32>
    %12 = arith.truncf %11 : vector<8x32xf32> to vector<8x32xbf16>
    %13 = vector.extract_strided_slice %12 {offsets = [0, 0], sizes = [8, 4], strides = [1, 1]} : vector<8x32xbf16> to vector<8x4xbf16>
    %c0_5 = arith.constant 0 : index
    %c0_6 = arith.constant 0 : index
    %14 = vector.load %arg9[%c0_5, %c0_6] : memref<8x32xbf16, #tpu.memory_space<vmem>>, vector<8x4xbf16>
    %c0_7 = arith.constant 0 : index
    %c0_8 = arith.constant 0 : index
    %15 = vector.load %arg10[%c0_7, %c0_8] : memref<8x32xbf16, #tpu.memory_space<vmem>>, vector<8x4xbf16>
    %cst_9 = arith.constant dense<0.000000e+00> : vector<8x8xf32>
    %16 = tpu.matmul %13, %14, %cst_9 {dimension_numbers = #tpu.dot_dimension_numbers<[1], [1], [0], [0], [0, 0, 1, 0], [], []>} : vector<8x4xbf16>, vector<8x4xbf16>, vector<8x8xf32> -> vector<8x8xf32>
    %cst_10 = arith.constant dense<0xFF800000> : vector<8xf32>
    %17 = vector.multi_reduction <maximumf>, %16, %cst_10 [1] : vector<8x8xf32> to vector<8xf32>
    %18 = vector.shape_cast %17 : vector<8xf32> to vector<8x1xf32>
    %19 = vector.broadcast %18 : vector<8x1xf32> to vector<8x8xf32>
    %20 = arith.subf %16, %19 : vector<8x8xf32>
    %21 = math.exp %20 : vector<8x8xf32>
    %cst_11 = arith.constant dense<0.000000e+00> : vector<8xf32>
    %22 = vector.multi_reduction <add>, %21, %cst_11 [1] : vector<8x8xf32> to vector<8xf32>
    %23 = vector.shape_cast %22 : vector<8xf32> to vector<8x1xf32>
    %24 = tpu.reciprocal %23 {approx = true} : vector<8x1xf32> -> vector<8x1xf32>
    %25 = arith.truncf %21 : vector<8x8xf32> to vector<8x8xbf16>
    %cst_12 = arith.constant dense<0.000000e+00> : vector<8x4xf32>
    %26 = tpu.matmul %25, %15, %cst_12 {dimension_numbers = #tpu.dot_dimension_numbers<[1], [0], [0], [1], [0, 0, 1, 1], [], []>} : vector<8x8xbf16>, vector<8x4xbf16>, vector<8x4xf32> -> vector<8x4xf32>
    %27 = vector.broadcast %24 : vector<8x1xf32> to vector<8x4xf32>
    %28 = arith.mulf %26, %27 : vector<8x4xf32>
    %29 = arith.truncf %28 : vector<8x4xf32> to vector<8x4xbf16>
    %c0_13 = arith.constant 0 : index
    %c0_14 = arith.constant 0 : index
    %30 = vector.load %arg11[%c0_13, %c0_14] : memref<8x32xbf16, #tpu.memory_space<vmem>>, vector<8x4xbf16>
    tpu.vector_store %arg11[%c0_13, %c0_14], %29 {strides = array<i32>} : memref<8x32xbf16, #tpu.memory_space<vmem>>, vector<8x4xbf16>,
    %31 = vector.extract_strided_slice %12 {offsets = [0, 4], sizes = [8, 4], strides = [1, 1]} : vector<8x32xbf16> to vector<8x4xbf16>
    %c0_15 = arith.constant 0 : index
    %c4 = arith.constant 4 : index
    %32 = vector.load %arg9[%c0_15, %c4] : memref<8x32xbf16, #tpu.memory_space<vmem>>, vector<8x4xbf16>
    %c0_16 = arith.constant 0 : index
    %c4_17 = arith.constant 4 : index
    %33 = vector.load %arg10[%c0_16, %c4_17] : memref<8x32xbf16, #tpu.memory_space<vmem>>, vector<8x4xbf16>
    %cst_18 = arith.constant dense<0.000000e+00> : vector<8x8xf32>
    %34 = tpu.matmul %31, %32, %cst_18 {dimension_numbers = #tpu.dot_dimension_numbers<[1], [1], [0], [0], [0, 0, 1, 0], [], []>} : vector<8x4xbf16>, vector<8x4xbf16>, vector<8x8xf32> -> vector<8x8xf32>
    %cst_19 = arith.constant dense<0xFF800000> : vector<8xf32>
    %35 = vector.multi_reduction <maximumf>, %34, %cst_19 [1] : vector<8x8xf32> to vector<8xf32>
    %36 = vector.shape_cast %35 : vector<8xf32> to vector<8x1xf32>
    %37 = vector.broadcast %36 : vector<8x1xf32> to vector<8x8xf32>
    %38 = arith.subf %34, %37 : vector<8x8xf32>
    %39 = math.exp %38 : vector<8x8xf32>
    %cst_20 = arith.constant dense<0.000000e+00> : vector<8xf32>
    %40 = vector.multi_reduction <add>, %39, %cst_20 [1] : vector<8x8xf32> to vector<8xf32>
    %41 = vector.shape_cast %40 : vector<8xf32> to vector<8x1xf32>
    %42 = tpu.reciprocal %41 {approx = true} : vector<8x1xf32> -> vector<8x1xf32>
    %43 = arith.truncf %39 : vector<8x8xf32> to vector<8x8xbf16>
    %cst_21 = arith.constant dense<0.000000e+00> : vector<8x4xf32>
    %44 = tpu.matmul %43, %33, %cst_21 {dimension_numbers = #tpu.dot_dimension_numbers<[1], [0], [0], [1], [0, 0, 1, 1], [], []>} : vector<8x8xbf16>, vector<8x4xbf16>, vector<8x4xf32> -> vector<8x4xf32>
    %45 = vector.broadcast %42 : vector<8x1xf32> to vector<8x4xf32>
    %46 = arith.mulf %44, %45 : vector<8x4xf32>
    %47 = arith.truncf %46 : vector<8x4xf32> to vector<8x4xbf16>
    %c0_22 = arith.constant 0 : index
    %c4_23 = arith.constant 4 : index
    %48 = vector.load %arg11[%c0_22, %c4_23] : memref<8x32xbf16, #tpu.memory_space<vmem>>, vector<8x4xbf16>
    tpu.vector_store %arg11[%c0_22, %c4_23], %47 {strides = array<i32>} : memref<8x32xbf16, #tpu.memory_space<vmem>>, vector<8x4xbf16>,
    %49 = vector.extract_strided_slice %12 {offsets = [0, 8], sizes = [8, 4], strides = [1, 1]} : vector<8x32xbf16> to vector<8x4xbf16>
    %c0_24 = arith.constant 0 : index
    %c8 = arith.constant 8 : index
    %50 = vector.load %arg9[%c0_24, %c8] : memref<8x32xbf16, #tpu.memory_space<vmem>>, vector<8x4xbf16>
    %c0_25 = arith.constant 0 : index
    %c8_26 = arith.constant 8 : index
    %51 = vector.load %arg10[%c0_25, %c8_26] : memref<8x32xbf16, #tpu.memory_space<vmem>>, vector<8x4xbf16>
    %cst_27 = arith.constant dense<0.000000e+00> : vector<8x8xf32>
    %52 = tpu.matmul %49, %50, %cst_27 {dimension_numbers = #tpu.dot_dimension_numbers<[1], [1], [0], [0], [0, 0, 1, 0], [], []>} : vector<8x4xbf16>, vector<8x4xbf16>, vector<8x8xf32> -> vector<8x8xf32>
    %cst_28 = arith.constant dense<0xFF800000> : vector<8xf32>
    %53 = vector.multi_reduction <maximumf>, %52, %cst_28 [1] : vector<8x8xf32> to vector<8xf32>
    %54 = vector.shape_cast %53 : vector<8xf32> to vector<8x1xf32>
    %55 = vector.broadcast %54 : vector<8x1xf32> to vector<8x8xf32>
    %56 = arith.subf %52, %55 : vector<8x8xf32>
    %57 = math.exp %56 : vector<8x8xf32>
    %cst_29 = arith.constant dense<0.000000e+00> : vector<8xf32>
    %58 = vector.multi_reduction <add>, %57, %cst_29 [1] : vector<8x8xf32> to vector<8xf32>
    %59 = vector.shape_cast %58 : vector<8xf32> to vector<8x1xf32>
    %60 = tpu.reciprocal %59 {approx = true} : vector<8x1xf32> -> vector<8x1xf32>
    %61 = arith.truncf %57 : vector<8x8xf32> to vector<8x8xbf16>
    %cst_30 = arith.constant dense<0.000000e+00> : vector<8x4xf32>
    %62 = tpu.matmul %61, %51, %cst_30 {dimension_numbers = #tpu.dot_dimension_numbers<[1], [0], [0], [1], [0, 0, 1, 1], [], []>} : vector<8x8xbf16>, vector<8x4xbf16>, vector<8x4xf32> -> vector<8x4xf32>
    %63 = vector.broadcast %60 : vector<8x1xf32> to vector<8x4xf32>
    %64 = arith.mulf %62, %63 : vector<8x4xf32>
    %65 = arith.truncf %64 : vector<8x4xf32> to vector<8x4xbf16>
    %c0_31 = arith.constant 0 : index
    %c8_32 = arith.constant 8 : index
    %66 = vector.load %arg11[%c0_31, %c8_32] : memref<8x32xbf16, #tpu.memory_space<vmem>>, vector<8x4xbf16>
    tpu.vector_store %arg11[%c0_31, %c8_32], %65 {strides = array<i32>} : memref<8x32xbf16, #tpu.memory_space<vmem>>, vector<8x4xbf16>,
    %67 = vector.extract_strided_slice %12 {offsets = [0, 12], sizes = [8, 4], strides = [1, 1]} : vector<8x32xbf16> to vector<8x4xbf16>
    %c0_33 = arith.constant 0 : index
    %c12 = arith.constant 12 : index
    %68 = vector.load %arg9[%c0_33, %c12] : memref<8x32xbf16, #tpu.memory_space<vmem>>, vector<8x4xbf16>
    %c0_34 = arith.constant 0 : index
    %c12_35 = arith.constant 12 : index
    %69 = vector.load %arg10[%c0_34, %c12_35] : memref<8x32xbf16, #tpu.memory_space<vmem>>, vector<8x4xbf16>
    %cst_36 = arith.constant dense<0.000000e+00> : vector<8x8xf32>
    %70 = tpu.matmul %67, %68, %cst_36 {dimension_numbers = #tpu.dot_dimension_numbers<[1], [1], [0], [0], [0, 0, 1, 0], [], []>} : vector<8x4xbf16>, vector<8x4xbf16>, vector<8x8xf32> -> vector<8x8xf32>
    %cst_37 = arith.constant dense<0xFF800000> : vector<8xf32>
    %71 = vector.multi_reduction <maximumf>, %70, %cst_37 [1] : vector<8x8xf32> to vector<8xf32>
    %72 = vector.shape_cast %71 : vector<8xf32> to vector<8x1xf32>
    %73 = vector.broadcast %72 : vector<8x1xf32> to vector<8x8xf32>
    %74 = arith.subf %70, %73 : vector<8x8xf32>
    %75 = math.exp %74 : vector<8x8xf32>
    %cst_38 = arith.constant dense<0.000000e+00> : vector<8xf32>
    %76 = vector.multi_reduction <add>, %75, %cst_38 [1] : vector<8x8xf32> to vector<8xf32>
    %77 = vector.shape_cast %76 : vector<8xf32> to vector<8x1xf32>
    %78 = tpu.reciprocal %77 {approx = true} : vector<8x1xf32> -> vector<8x1xf32>
    %79 = arith.truncf %75 : vector<8x8xf32> to vector<8x8xbf16>
    %cst_39 = arith.constant dense<0.000000e+00> : vector<8x4xf32>
    %80 = tpu.matmul %79, %69, %cst_39 {dimension_numbers = #tpu.dot_dimension_numbers<[1], [0], [0], [1], [0, 0, 1, 1], [], []>} : vector<8x8xbf16>, vector<8x4xbf16>, vector<8x4xf32> -> vector<8x4xf32>
    %81 = vector.broadcast %78 : vector<8x1xf32> to vector<8x4xf32>
    %82 = arith.mulf %80, %81 : vector<8x4xf32>
    %83 = arith.truncf %82 : vector<8x4xf32> to vector<8x4xbf16>
    %c0_40 = arith.constant 0 : index
    %c12_41 = arith.constant 12 : index
    %84 = vector.load %arg11[%c0_40, %c12_41] : memref<8x32xbf16, #tpu.memory_space<vmem>>, vector<8x4xbf16>
    tpu.vector_store %arg11[%c0_40, %c12_41], %83 {strides = array<i32>} : memref<8x32xbf16, #tpu.memory_space<vmem>>, vector<8x4xbf16>,
    %85 = vector.extract_strided_slice %12 {offsets = [0, 16], sizes = [8, 4], strides = [1, 1]} : vector<8x32xbf16> to vector<8x4xbf16>
    %c0_42 = arith.constant 0 : index
    %c16 = arith.constant 16 : index
    %86 = vector.load %arg9[%c0_42, %c16] : memref<8x32xbf16, #tpu.memory_space<vmem>>, vector<8x4xbf16>
    %c0_43 = arith.constant 0 : index
    %c16_44 = arith.constant 16 : index
    %87 = vector.load %arg10[%c0_43, %c16_44] : memref<8x32xbf16, #tpu.memory_space<vmem>>, vector<8x4xbf16>
    %cst_45 = arith.constant dense<0.000000e+00> : vector<8x8xf32>
    %88 = tpu.matmul %85, %86, %cst_45 {dimension_numbers = #tpu.dot_dimension_numbers<[1], [1], [0], [0], [0, 0, 1, 0], [], []>} : vector<8x4xbf16>, vector<8x4xbf16>, vector<8x8xf32> -> vector<8x8xf32>
    %cst_46 = arith.constant dense<0xFF800000> : vector<8xf32>
    %89 = vector.multi_reduction <maximumf>, %88, %cst_46 [1] : vector<8x8xf32> to vector<8xf32>
    %90 = vector.shape_cast %89 : vector<8xf32> to vector<8x1xf32>
    %91 = vector.broadcast %90 : vector<8x1xf32> to vector<8x8xf32>
    %92 = arith.subf %88, %91 : vector<8x8xf32>
    %93 = math.exp %92 : vector<8x8xf32>
    %cst_47 = arith.constant dense<0.000000e+00> : vector<8xf32>
    %94 = vector.multi_reduction <add>, %93, %cst_47 [1] : vector<8x8xf32> to vector<8xf32>
    %95 = vector.shape_cast %94 : vector<8xf32> to vector<8x1xf32>
    %96 = tpu.reciprocal %95 {approx = true} : vector<8x1xf32> -> vector<8x1xf32>
    %97 = arith.truncf %93 : vector<8x8xf32> to vector<8x8xbf16>
    %cst_48 = arith.constant dense<0.000000e+00> : vector<8x4xf32>
    %98 = tpu.matmul %97, %87, %cst_48 {dimension_numbers = #tpu.dot_dimension_numbers<[1], [0], [0], [1], [0, 0, 1, 1], [], []>} : vector<8x8xbf16>, vector<8x4xbf16>, vector<8x4xf32> -> vector<8x4xf32>
    %99 = vector.broadcast %96 : vector<8x1xf32> to vector<8x4xf32>
    %100 = arith.mulf %98, %99 : vector<8x4xf32>
    %101 = arith.truncf %100 : vector<8x4xf32> to vector<8x4xbf16>
    %c0_49 = arith.constant 0 : index
    %c16_50 = arith.constant 16 : index
    %102 = vector.load %arg11[%c0_49, %c16_50] : memref<8x32xbf16, #tpu.memory_space<vmem>>, vector<8x4xbf16>
    tpu.vector_store %arg11[%c0_49, %c16_50], %101 {strides = array<i32>} : memref<8x32xbf16, #tpu.memory_space<vmem>>, vector<8x4xbf16>,
    %103 = vector.extract_strided_slice %12 {offsets = [0, 20], sizes = [8, 4], strides = [1, 1]} : vector<8x32xbf16> to vector<8x4xbf16>
    %c0_51 = arith.constant 0 : index
    %c20 = arith.constant 20 : index
    %104 = vector.load %arg9[%c0_51, %c20] : memref<8x32xbf16, #tpu.memory_space<vmem>>, vector<8x4xbf16>
    %c0_52 = arith.constant 0 : index
    %c20_53 = arith.constant 20 : index
    %105 = vector.load %arg10[%c0_52, %c20_53] : memref<8x32xbf16, #tpu.memory_space<vmem>>, vector<8x4xbf16>
    %cst_54 = arith.constant dense<0.000000e+00> : vector<8x8xf32>
    %106 = tpu.matmul %103, %104, %cst_54 {dimension_numbers = #tpu.dot_dimension_numbers<[1], [1], [0], [0], [0, 0, 1, 0], [], []>} : vector<8x4xbf16>, vector<8x4xbf16>, vector<8x8xf32> -> vector<8x8xf32>
    %cst_55 = arith.constant dense<0xFF800000> : vector<8xf32>
    %107 = vector.multi_reduction <maximumf>, %106, %cst_55 [1] : vector<8x8xf32> to vector<8xf32>
    %108 = vector.shape_cast %107 : vector<8xf32> to vector<8x1xf32>
    %109 = vector.broadcast %108 : vector<8x1xf32> to vector<8x8xf32>
    %110 = arith.subf %106, %109 : vector<8x8xf32>
    %111 = math.exp %110 : vector<8x8xf32>
    %cst_56 = arith.constant dense<0.000000e+00> : vector<8xf32>
    %112 = vector.multi_reduction <add>, %111, %cst_56 [1] : vector<8x8xf32> to vector<8xf32>
    %113 = vector.shape_cast %112 : vector<8xf32> to vector<8x1xf32>
    %114 = tpu.reciprocal %113 {approx = true} : vector<8x1xf32> -> vector<8x1xf32>
    %115 = arith.truncf %111 : vector<8x8xf32> to vector<8x8xbf16>
    %cst_57 = arith.constant dense<0.000000e+00> : vector<8x4xf32>
    %116 = tpu.matmul %115, %105, %cst_57 {dimension_numbers = #tpu.dot_dimension_numbers<[1], [0], [0], [1], [0, 0, 1, 1], [], []>} : vector<8x8xbf16>, vector<8x4xbf16>, vector<8x4xf32> -> vector<8x4xf32>
    %117 = vector.broadcast %114 : vector<8x1xf32> to vector<8x4xf32>
    %118 = arith.mulf %116, %117 : vector<8x4xf32>
    %119 = arith.truncf %118 : vector<8x4xf32> to vector<8x4xbf16>
    %c0_58 = arith.constant 0 : index
    %c20_59 = arith.constant 20 : index
    %120 = vector.load %arg11[%c0_58, %c20_59] : memref<8x32xbf16, #tpu.memory_space<vmem>>, vector<8x4xbf16>
    tpu.vector_store %arg11[%c0_58, %c20_59], %119 {strides = array<i32>} : memref<8x32xbf16, #tpu.memory_space<vmem>>, vector<8x4xbf16>,
    %121 = vector.extract_strided_slice %12 {offsets = [0, 24], sizes = [8, 4], strides = [1, 1]} : vector<8x32xbf16> to vector<8x4xbf16>
    %c0_60 = arith.constant 0 : index
    %c24 = arith.constant 24 : index
    %122 = vector.load %arg9[%c0_60, %c24] : memref<8x32xbf16, #tpu.memory_space<vmem>>, vector<8x4xbf16>
    %c0_61 = arith.constant 0 : index
    %c24_62 = arith.constant 24 : index
    %123 = vector.load %arg10[%c0_61, %c24_62] : memref<8x32xbf16, #tpu.memory_space<vmem>>, vector<8x4xbf16>
    %cst_63 = arith.constant dense<0.000000e+00> : vector<8x8xf32>
    %124 = tpu.matmul %121, %122, %cst_63 {dimension_numbers = #tpu.dot_dimension_numbers<[1], [1], [0], [0], [0, 0, 1, 0], [], []>} : vector<8x4xbf16>, vector<8x4xbf16>, vector<8x8xf32> -> vector<8x8xf32>
    %cst_64 = arith.constant dense<0xFF800000> : vector<8xf32>
    %125 = vector.multi_reduction <maximumf>, %124, %cst_64 [1] : vector<8x8xf32> to vector<8xf32>
    %126 = vector.shape_cast %125 : vector<8xf32> to vector<8x1xf32>
    %127 = vector.broadcast %126 : vector<8x1xf32> to vector<8x8xf32>
    %128 = arith.subf %124, %127 : vector<8x8xf32>
    %129 = math.exp %128 : vector<8x8xf32>
    %cst_65 = arith.constant dense<0.000000e+00> : vector<8xf32>
    %130 = vector.multi_reduction <add>, %129, %cst_65 [1] : vector<8x8xf32> to vector<8xf32>
    %131 = vector.shape_cast %130 : vector<8xf32> to vector<8x1xf32>
    %132 = tpu.reciprocal %131 {approx = true} : vector<8x1xf32> -> vector<8x1xf32>
    %133 = arith.truncf %129 : vector<8x8xf32> to vector<8x8xbf16>
    %cst_66 = arith.constant dense<0.000000e+00> : vector<8x4xf32>
    %134 = tpu.matmul %133, %123, %cst_66 {dimension_numbers = #tpu.dot_dimension_numbers<[1], [0], [0], [1], [0, 0, 1, 1], [], []>} : vector<8x8xbf16>, vector<8x4xbf16>, vector<8x4xf32> -> vector<8x4xf32>
    %135 = vector.broadcast %132 : vector<8x1xf32> to vector<8x4xf32>
    %136 = arith.mulf %134, %135 : vector<8x4xf32>
    %137 = arith.truncf %136 : vector<8x4xf32> to vector<8x4xbf16>
    %c0_67 = arith.constant 0 : index
    %c24_68 = arith.constant 24 : index
    %138 = vector.load %arg11[%c0_67, %c24_68] : memref<8x32xbf16, #tpu.memory_space<vmem>>, vector<8x4xbf16>
    tpu.vector_store %arg11[%c0_67, %c24_68], %137 {strides = array<i32>} : memref<8x32xbf16, #tpu.memory_space<vmem>>, vector<8x4xbf16>,
    %139 = vector.extract_strided_slice %12 {offsets = [0, 28], sizes = [8, 4], strides = [1, 1]} : vector<8x32xbf16> to vector<8x4xbf16>
    %c0_69 = arith.constant 0 : index
    %c28 = arith.constant 28 : index
    %140 = vector.load %arg9[%c0_69, %c28] : memref<8x32xbf16, #tpu.memory_space<vmem>>, vector<8x4xbf16>
    %c0_70 = arith.constant 0 : index
    %c28_71 = arith.constant 28 : index
    %141 = vector.load %arg10[%c0_70, %c28_71] : memref<8x32xbf16, #tpu.memory_space<vmem>>, vector<8x4xbf16>
    %cst_72 = arith.constant dense<0.000000e+00> : vector<8x8xf32>
    %142 = tpu.matmul %139, %140, %cst_72 {dimension_numbers = #tpu.dot_dimension_numbers<[1], [1], [0], [0], [0, 0, 1, 0], [], []>} : vector<8x4xbf16>, vector<8x4xbf16>, vector<8x8xf32> -> vector<8x8xf32>
    %cst_73 = arith.constant dense<0xFF800000> : vector<8xf32>
    %143 = vector.multi_reduction <maximumf>, %142, %cst_73 [1] : vector<8x8xf32> to vector<8xf32>
    %144 = vector.shape_cast %143 : vector<8xf32> to vector<8x1xf32>
    %145 = vector.broadcast %144 : vector<8x1xf32> to vector<8x8xf32>
    %146 = arith.subf %142, %145 : vector<8x8xf32>
    %147 = math.exp %146 : vector<8x8xf32>
    %cst_74 = arith.constant dense<0.000000e+00> : vector<8xf32>
    %148 = vector.multi_reduction <add>, %147, %cst_74 [1] : vector<8x8xf32> to vector<8xf32>
    %149 = vector.shape_cast %148 : vector<8xf32> to vector<8x1xf32>
    %150 = tpu.reciprocal %149 {approx = true} : vector<8x1xf32> -> vector<8x1xf32>
    %151 = arith.truncf %147 : vector<8x8xf32> to vector<8x8xbf16>
    %cst_75 = arith.constant dense<0.000000e+00> : vector<8x4xf32>
    %152 = tpu.matmul %151, %141, %cst_75 {dimension_numbers = #tpu.dot_dimension_numbers<[1], [0], [0], [1], [0, 0, 1, 1], [], []>} : vector<8x8xbf16>, vector<8x4xbf16>, vector<8x4xf32> -> vector<8x4xf32>
    %153 = vector.broadcast %150 : vector<8x1xf32> to vector<8x4xf32>
    %154 = arith.mulf %152, %153 : vector<8x4xf32>
    %155 = arith.truncf %154 : vector<8x4xf32> to vector<8x4xbf16>
    %c0_76 = arith.constant 0 : index
    %c28_77 = arith.constant 28 : index
    %156 = vector.load %arg11[%c0_76, %c28_77] : memref<8x32xbf16, #tpu.memory_space<vmem>>, vector<8x4xbf16>
    tpu.vector_store %arg11[%c0_76, %c28_77], %155 {strides = array<i32>} : memref<8x32xbf16, #tpu.memory_space<vmem>>, vector<8x4xbf16>,
    %c0_78 = arith.constant 0 : index
    %c0_79 = arith.constant 0 : index
    %157 = vector.load %arg11[%c0_78, %c0_79] : memref<8x32xbf16, #tpu.memory_space<vmem>>, vector<8x32xbf16>
    %c0_80 = arith.constant 0 : index
    %c0_81 = arith.constant 0 : index
    %158 = vector.load %arg6[%c0_80, %c0_81] : memref<32x32xbf16, #tpu.memory_space<vmem>>, vector<32x32xbf16>
    %cst_82 = arith.constant dense<0.000000e+00> : vector<8x32xf32>
    %159 = tpu.matmul %157, %158, %cst_82 {dimension_numbers = #tpu.dot_dimension_numbers<[1], [0], [0], [1], [0, 0, 1, 1], [], []>} : vector<8x32xbf16>, vector<32x32xbf16>, vector<8x32xf32> -> vector<8x32xf32>
    %c0_83 = arith.constant 0 : index
    %c0_84 = arith.constant 0 : index
    %160 = vector.load %arg7[%c0_83, %c0_84] : memref<1x32xf32, #tpu.memory_space<vmem>>, vector<1x32xf32>
    %161 = vector.broadcast %160 : vector<1x32xf32> to vector<8x32xf32>
    %162 = arith.addf %159, %161 : vector<8x32xf32>
    %c0_85 = arith.constant 0 : index
    %c0_86 = arith.constant 0 : index
    %c0_87 = arith.constant 0 : index
    %163 = vector.load %arg8[%c0_85, %c0_86, %c0_87] : memref<1x8x32xf32, #tpu.memory_space<vmem>>, vector<1x8x32xf32>
    %164 = vector.shape_cast %163 : vector<1x8x32xf32> to vector<8x32xf32>
    %165 = vector.shape_cast %162 : vector<8x32xf32> to vector<1x8x32xf32>
    tpu.vector_store %arg8[%c0_85, %c0_86, %c0_87], %165 {strides = array<i32>} : memref<1x8x32xf32, #tpu.memory_space<vmem>>, vector<1x8x32xf32>,
    return
  }
  func.func @transform_0(%arg0: i32, %arg1: i32) -> (i32, i32, i32) {
    %c0_i32 = arith.constant 0 : i32
    %c0_i32_0 = arith.constant 0 : i32
    %c0_i32_1 = arith.constant 0 : i32
    return %arg0, %c0_i32, %c0_i32_0 : i32, i32, i32
  }
  func.func @transform_1(%arg0: i32, %arg1: i32) -> (i32, i32) {
    %c0_i32 = arith.constant 0 : i32
    %c0_i32_0 = arith.constant 0 : i32
    %c0_i32_1 = arith.constant 0 : i32
    return %c0_i32, %c0_i32_0 : i32, i32
  }
  func.func @transform_2(%arg0: i32, %arg1: i32) -> (i32, i32) {
    %c0_i32 = arith.constant 0 : i32
    %c0_i32_0 = arith.constant 0 : i32
    %c0_i32_1 = arith.constant 0 : i32
    return %c0_i32, %c0_i32_0 : i32, i32
  }
  func.func @transform_3(%arg0: i32, %arg1: i32) -> (i32, i32) {
    %c0_i32 = arith.constant 0 : i32
    %c0_i32_0 = arith.constant 0 : i32
    %c0_i32_1 = arith.constant 0 : i32
    return %c0_i32, %c0_i32_0 : i32, i32
  }
  func.func @transform_4(%arg0: i32, %arg1: i32) -> (i32, i32) {
    %c0_i32 = arith.constant 0 : i32
    %c0_i32_0 = arith.constant 0 : i32
    %c0_i32_1 = arith.constant 0 : i32
    return %c0_i32, %c0_i32_0 : i32, i32
  }
  func.func @transform_5(%arg0: i32, %arg1: i32) -> (i32, i32) {
    %c0_i32 = arith.constant 0 : i32
    %c0_i32_0 = arith.constant 0 : i32
    %c0_i32_1 = arith.constant 0 : i32
    return %c0_i32, %c0_i32_0 : i32, i32
  }
  func.func @transform_6(%arg0: i32, %arg1: i32) -> (i32, i32, i32) {
    %c0_i32 = arith.constant 0 : i32
    %c0_i32_0 = arith.constant 0 : i32
    return %arg0, %arg1, %c0_i32 : i32, i32, i32
  }
}

module attributes {stable_mosaic.version = 11 : i64} {
  func.func @_self_attention_kernel(%arg0: i32, %arg1: i32, %arg2: memref<1x8x32xbf16, #tpu.memory_space<vmem>>, %arg3: memref<32x32xbf16, #tpu.memory_space<vmem>>, %arg4: memref<32x32xbf16, #tpu.memory_space<vmem>>, %arg5: memref<32x32xbf16, #tpu.memory_space<vmem>>, %arg6: memref<32x32xbf16, #tpu.memory_space<vmem>>, %arg7: memref<1x32xf32, #tpu.memory_space<vmem>>, %arg8: memref<1x8x32xf32, #tpu.memory_space<vmem>>, %arg9: memref<8x32xbf16, #tpu.memory_space<vmem>>, %arg10: memref<8x32xbf16, #tpu.memory_space<vmem>>, %arg11: memref<8x32xbf16, #tpu.memory_space<vmem>>) attributes {dimension_semantics = [#tpu.dimension_semantics<parallel>, #tpu.dimension_semantics<arbitrary>], iteration_bounds = array<i64: 2, 1>, scalar_prefetch = 0 : i64, scratch_operands = 3 : i64, tpu.core_type = #tpu.core_type<tc>, window_params = [{transform_indices = @transform_0, window_bounds = array<i64: 1, 8, 32>}, {pipeline_mode = #tpu.pipeline_mode<synchronous>, transform_indices = @transform_1, window_bounds = array<i64: 32, 32>}, {pipeline_mode = #tpu.pipeline_mode<synchronous>, transform_indices = @transform_2, window_bounds = array<i64: 32, 32>}, {pipeline_mode = #tpu.pipeline_mode<synchronous>, transform_indices = @transform_3, window_bounds = array<i64: 32, 32>}, {pipeline_mode = #tpu.pipeline_mode<synchronous>, transform_indices = @transform_4, window_bounds = array<i64: 32, 32>}, {pipeline_mode = #tpu.pipeline_mode<synchronous>, transform_indices = @transform_5, window_bounds = array<i64: 1, 32>}, {transform_indices = @transform_6, window_bounds = array<i64: 1, 8, 32>}]} {
    %c0_i32 = arith.constant 0 : i32
    %0 = arith.cmpi eq, %arg1, %c0_i32 : i32
    %1 = arith.extui %0 : i1 to i32
    %c0_i32_0 = arith.constant 0 : i32
    %2 = arith.cmpi ne, %1, %c0_i32_0 : i32
    scf.if %2 {
      %c0_88 = arith.constant 0 : index
      %c0_89 = arith.constant 0 : index
      %c0_90 = arith.constant 0 : index
      %166 = vector.load %arg2[%c0_88, %c0_89, %c0_90] : memref<1x8x32xbf16, #tpu.memory_space<vmem>>, vector<1x8x32xbf16>
      %167 = vector.shape_cast %166 : vector<1x8x32xbf16> to vector<8x32xbf16>
      %c0_91 = arith.constant 0 : index
      %c0_92 = arith.constant 0 : index
      %168 = vector.load %arg3[%c0_91, %c0_92] : memref<32x32xbf16, #tpu.memory_space<vmem>>, vector<32x32xbf16>
      %cst_93 = arith.constant dense<0.000000e+00> : vector<8x32xf32>
      %169 = tpu.matmul %167, %168, %cst_93 {dimension_numbers = #tpu.dot_dimension_numbers<[1], [0], [0], [1], [0, 0, 1, 1], [], []>} : vector<8x32xbf16>, vector<32x32xbf16>, vector<8x32xf32> -> vector<8x32xf32>
      %170 = arith.truncf %169 : vector<8x32xf32> to vector<8x32xbf16>
      %c0_94 = arith.constant 0 : index
      %c0_95 = arith.constant 0 : index
      %171 = vector.load %arg9[%c0_94, %c0_95] : memref<8x32xbf16, #tpu.memory_space<vmem>>, vector<8x32xbf16>
      tpu.vector_store %arg9[%c0_94, %c0_95], %170 {strides = array<i32>} : memref<8x32xbf16, #tpu.memory_space<vmem>>, vector<8x32xbf16>,
      %c0_96 = arith.constant 0 : index
      %c0_97 = arith.constant 0 : index
      %172 = vector.load %arg5[%c0_96, %c0_97] : memref<32x32xbf16, #tpu.memory_space<vmem>>, vector<32x32xbf16>
      %cst_98 = arith.constant dense<0.000000e+00> : vector<8x32xf32>
      %173 = tpu.matmul %167, %172, %cst_98 {dimension_numbers = #tpu.dot_dimension_numbers<[1], [0], [0], [1], [0, 0, 1, 1], [], []>} : vector<8x32xbf16>, vector<32x32xbf16>, vector<8x32xf32> -> vector<8x32xf32>
      %174 = arith.truncf %173 : vector<8x32xf32> to vector<8x32xbf16>
      %c0_99 = arith.constant 0 : index
      %c0_100 = arith.constant 0 : index
      %175 = vector.load %arg10[%c0_99, %c0_100] : memref<8x32xbf16, #tpu.memory_space<vmem>>, vector<8x32xbf16>
      tpu.vector_store %arg10[%c0_99, %c0_100], %174 {strides = array<i32>} : memref<8x32xbf16, #tpu.memory_space<vmem>>, vector<8x32xbf16>,
    } else {
    }
    %c8_i32 = arith.constant 8 : i32
    %3 = arith.muli %arg1, %c8_i32 : i32
    %4 = tpu.assume_multiple %3, 8 : i32
    %c0 = arith.constant 0 : index
    %5 = arith.index_cast %4 : i32 to index
    %c0_1 = arith.constant 0 : index
    %6 = vector.load %arg2[%c0, %5, %c0_1] : memref<1x8x32xbf16, #tpu.memory_space<vmem>>, vector<1x8x32xbf16>
    %7 = vector.shape_cast %6 : vector<1x8x32xbf16> to vector<8x32xbf16>
    %c0_2 = arith.constant 0 : index
    %c0_3 = arith.constant 0 : index
    %8 = vector.load %arg4[%c0_2, %c0_3] : memref<32x32xbf16, #tpu.memory_space<vmem>>, vector<32x32xbf16>
    %cst = arith.constant dense<0.000000e+00> : vector<8x32xf32>
    %9 = tpu.matmul %7, %8, %cst {dimension_numbers = #tpu.dot_dimension_numbers<[1], [0], [0], [1], [0, 0, 1, 1], [], []>} : vector<8x32xbf16>, vector<32x32xbf16>, vector<8x32xf32> -> vector<8x32xf32>
    %cst_4 = arith.constant 0.176776692 : f32
    %10 = vector.broadcast %cst_4 : f32 to vector<8x32xf32>
    %11 = arith.mulf %9, %10 : vector<8x32xf32>
    %12 = arith.truncf %11 : vector<8x32xf32> to vector<8x32xbf16>
    %13 = vector.extract_strided_slice %12 {offsets = [0, 0], sizes = [8, 4], strides = [1, 1]} : vector<8x32xbf16> to vector<8x4xbf16>
    %c0_5 = arith.constant 0 : index
    %c0_6 = arith.constant 0 : index
    %14 = vector.load %arg9[%c0_5, %c0_6] : memref<8x32xbf16, #tpu.memory_space<vmem>>, vector<8x4xbf16>
    %c0_7 = arith.constant 0 : index
    %c0_8 = arith.constant 0 : index
    %15 = vector.load %arg10[%c0_7, %c0_8] : memref<8x32xbf16, #tpu.memory_space<vmem>>, vector<8x4xbf16>
    %cst_9 = arith.constant dense<0.000000e+00> : vector<8x8xf32>
    %16 = tpu.matmul %13, %14, %cst_9 {dimension_numbers = #tpu.dot_dimension_numbers<[1], [1], [0], [0], [0, 0, 1, 0], [], []>} : vector<8x4xbf16>, vector<8x4xbf16>, vector<8x8xf32> -> vector<8x8xf32>
    %cst_10 = arith.constant dense<0xFF800000> : vector<8xf32>
    %17 = vector.multi_reduction <maximumf>, %16, %cst_10 [1] : vector<8x8xf32> to vector<8xf32>
    %18 = vector.shape_cast %17 : vector<8xf32> to vector<8x1xf32>
    %19 = vector.broadcast %18 : vector<8x1xf32> to vector<8x8xf32>
    %20 = arith.subf %16, %19 : vector<8x8xf32>
    %21 = math.exp %20 : vector<8x8xf32>
    %cst_11 = arith.constant dense<0.000000e+00> : vector<8xf32>
    %22 = vector.multi_reduction <add>, %21, %cst_11 [1] : vector<8x8xf32> to vector<8xf32>
    %23 = vector.shape_cast %22 : vector<8xf32> to vector<8x1xf32>
    %24 = tpu.reciprocal %23 {approx = true} : vector<8x1xf32> -> vector<8x1xf32>
    %25 = arith.truncf %21 : vector<8x8xf32> to vector<8x8xbf16>
    %cst_12 = arith.constant dense<0.000000e+00> : vector<8x4xf32>
    %26 = tpu.matmul %25, %15, %cst_12 {dimension_numbers = #tpu.dot_dimension_numbers<[1], [0], [0], [1], [0, 0, 1, 1], [], []>} : vector<8x8xbf16>, vector<8x4xbf16>, vector<8x4xf32> -> vector<8x4xf32>
    %27 = vector.broadcast %24 : vector<8x1xf32> to vector<8x4xf32>
    %28 = arith.mulf %26, %27 : vector<8x4xf32>
    %29 = arith.truncf %28 : vector<8x4xf32> to vector<8x4xbf16>
    %c0_13 = arith.constant 0 : index
    %c0_14 = arith.constant 0 : index
    %30 = vector.load %arg11[%c0_13, %c0_14] : memref<8x32xbf16, #tpu.memory_space<vmem>>, vector<8x4xbf16>
    tpu.vector_store %arg11[%c0_13, %c0_14], %29 {strides = array<i32>} : memref<8x32xbf16, #tpu.memory_space<vmem>>, vector<8x4xbf16>,
    %31 = vector.extract_strided_slice %12 {offsets = [0, 4], sizes = [8, 4], strides = [1, 1]} : vector<8x32xbf16> to vector<8x4xbf16>
    %c0_15 = arith.constant 0 : index
    %c4 = arith.constant 4 : index
    %32 = vector.load %arg9[%c0_15, %c4] : memref<8x32xbf16, #tpu.memory_space<vmem>>, vector<8x4xbf16>
    %c0_16 = arith.constant 0 : index
    %c4_17 = arith.constant 4 : index
    %33 = vector.load %arg10[%c0_16, %c4_17] : memref<8x32xbf16, #tpu.memory_space<vmem>>, vector<8x4xbf16>
    %cst_18 = arith.constant dense<0.000000e+00> : vector<8x8xf32>
    %34 = tpu.matmul %31, %32, %cst_18 {dimension_numbers = #tpu.dot_dimension_numbers<[1], [1], [0], [0], [0, 0, 1, 0], [], []>} : vector<8x4xbf16>, vector<8x4xbf16>, vector<8x8xf32> -> vector<8x8xf32>
    %cst_19 = arith.constant dense<0xFF800000> : vector<8xf32>
    %35 = vector.multi_reduction <maximumf>, %34, %cst_19 [1] : vector<8x8xf32> to vector<8xf32>
    %36 = vector.shape_cast %35 : vector<8xf32> to vector<8x1xf32>
    %37 = vector.broadcast %36 : vector<8x1xf32> to vector<8x8xf32>
    %38 = arith.subf %34, %37 : vector<8x8xf32>
    %39 = math.exp %38 : vector<8x8xf32>
    %cst_20 = arith.constant dense<0.000000e+00> : vector<8xf32>
    %40 = vector.multi_reduction <add>, %39, %cst_20 [1] : vector<8x8xf32> to vector<8xf32>
    %41 = vector.shape_cast %40 : vector<8xf32> to vector<8x1xf32>
    %42 = tpu.reciprocal %41 {approx = true} : vector<8x1xf32> -> vector<8x1xf32>
    %43 = arith.truncf %39 : vector<8x8xf32> to vector<8x8xbf16>
    %cst_21 = arith.constant dense<0.000000e+00> : vector<8x4xf32>
    %44 = tpu.matmul %43, %33, %cst_21 {dimension_numbers = #tpu.dot_dimension_numbers<[1], [0], [0], [1], [0, 0, 1, 1], [], []>} : vector<8x8xbf16>, vector<8x4xbf16>, vector<8x4xf32> -> vector<8x4xf32>
    %45 = vector.broadcast %42 : vector<8x1xf32> to vector<8x4xf32>
    %46 = arith.mulf %44, %45 : vector<8x4xf32>
    %47 = arith.truncf %46 : vector<8x4xf32> to vector<8x4xbf16>
    %c0_22 = arith.constant 0 : index
    %c4_23 = arith.constant 4 : index
    %48 = vector.load %arg11[%c0_22, %c4_23] : memref<8x32xbf16, #tpu.memory_space<vmem>>, vector<8x4xbf16>
    tpu.vector_store %arg11[%c0_22, %c4_23], %47 {strides = array<i32>} : memref<8x32xbf16, #tpu.memory_space<vmem>>, vector<8x4xbf16>,
    %49 = vector.extract_strided_slice %12 {offsets = [0, 8], sizes = [8, 4], strides = [1, 1]} : vector<8x32xbf16> to vector<8x4xbf16>
    %c0_24 = arith.constant 0 : index
    %c8 = arith.constant 8 : index
    %50 = vector.load %arg9[%c0_24, %c8] : memref<8x32xbf16, #tpu.memory_space<vmem>>, vector<8x4xbf16>
    %c0_25 = arith.constant 0 : index
    %c8_26 = arith.constant 8 : index
    %51 = vector.load %arg10[%c0_25, %c8_26] : memref<8x32xbf16, #tpu.memory_space<vmem>>, vector<8x4xbf16>
    %cst_27 = arith.constant dense<0.000000e+00> : vector<8x8xf32>
    %52 = tpu.matmul %49, %50, %cst_27 {dimension_numbers = #tpu.dot_dimension_numbers<[1], [1], [0], [0], [0, 0, 1, 0], [], []>} : vector<8x4xbf16>, vector<8x4xbf16>, vector<8x8xf32> -> vector<8x8xf32>
    %cst_28 = arith.constant dense<0xFF800000> : vector<8xf32>
    %53 = vector.multi_reduction <maximumf>, %52, %cst_28 [1] : vector<8x8xf32> to vector<8xf32>
    %54 = vector.shape_cast %53 : vector<8xf32> to vector<8x1xf32>
    %55 = vector.broadcast %54 : vector<8x1xf32> to vector<8x8xf32>
    %56 = arith.subf %52, %55 : vector<8x8xf32>
    %57 = math.exp %56 : vector<8x8xf32>
    %cst_29 = arith.constant dense<0.000000e+00> : vector<8xf32>
    %58 = vector.multi_reduction <add>, %57, %cst_29 [1] : vector<8x8xf32> to vector<8xf32>
    %59 = vector.shape_cast %58 : vector<8xf32> to vector<8x1xf32>
    %60 = tpu.reciprocal %59 {approx = true} : vector<8x1xf32> -> vector<8x1xf32>
    %61 = arith.truncf %57 : vector<8x8xf32> to vector<8x8xbf16>
    %cst_30 = arith.constant dense<0.000000e+00> : vector<8x4xf32>
    %62 = tpu.matmul %61, %51, %cst_30 {dimension_numbers = #tpu.dot_dimension_numbers<[1], [0], [0], [1], [0, 0, 1, 1], [], []>} : vector<8x8xbf16>, vector<8x4xbf16>, vector<8x4xf32> -> vector<8x4xf32>
    %63 = vector.broadcast %60 : vector<8x1xf32> to vector<8x4xf32>
    %64 = arith.mulf %62, %63 : vector<8x4xf32>
    %65 = arith.truncf %64 : vector<8x4xf32> to vector<8x4xbf16>
    %c0_31 = arith.constant 0 : index
    %c8_32 = arith.constant 8 : index
    %66 = vector.load %arg11[%c0_31, %c8_32] : memref<8x32xbf16, #tpu.memory_space<vmem>>, vector<8x4xbf16>
    tpu.vector_store %arg11[%c0_31, %c8_32], %65 {strides = array<i32>} : memref<8x32xbf16, #tpu.memory_space<vmem>>, vector<8x4xbf16>,
    %67 = vector.extract_strided_slice %12 {offsets = [0, 12], sizes = [8, 4], strides = [1, 1]} : vector<8x32xbf16> to vector<8x4xbf16>
    %c0_33 = arith.constant 0 : index
    %c12 = arith.constant 12 : index
    %68 = vector.load %arg9[%c0_33, %c12] : memref<8x32xbf16, #tpu.memory_space<vmem>>, vector<8x4xbf16>
    %c0_34 = arith.constant 0 : index
    %c12_35 = arith.constant 12 : index
    %69 = vector.load %arg10[%c0_34, %c12_35] : memref<8x32xbf16, #tpu.memory_space<vmem>>, vector<8x4xbf16>
    %cst_36 = arith.constant dense<0.000000e+00> : vector<8x8xf32>
    %70 = tpu.matmul %67, %68, %cst_36 {dimension_numbers = #tpu.dot_dimension_numbers<[1], [1], [0], [0], [0, 0, 1, 0], [], []>} : vector<8x4xbf16>, vector<8x4xbf16>, vector<8x8xf32> -> vector<8x8xf32>
    %cst_37 = arith.constant dense<0xFF800000> : vector<8xf32>
    %71 = vector.multi_reduction <maximumf>, %70, %cst_37 [1] : vector<8x8xf32> to vector<8xf32>
    %72 = vector.shape_cast %71 : vector<8xf32> to vector<8x1xf32>
    %73 = vector.broadcast %72 : vector<8x1xf32> to vector<8x8xf32>
    %74 = arith.subf %70, %73 : vector<8x8xf32>
    %75 = math.exp %74 : vector<8x8xf32>
    %cst_38 = arith.constant dense<0.000000e+00> : vector<8xf32>
    %76 = vector.multi_reduction <add>, %75, %cst_38 [1] : vector<8x8xf32> to vector<8xf32>
    %77 = vector.shape_cast %76 : vector<8xf32> to vector<8x1xf32>
    %78 = tpu.reciprocal %77 {approx = true} : vector<8x1xf32> -> vector<8x1xf32>
    %79 = arith.truncf %75 : vector<8x8xf32> to vector<8x8xbf16>
    %cst_39 = arith.constant dense<0.000000e+00> : vector<8x4xf32>
    %80 = tpu.matmul %79, %69, %cst_39 {dimension_numbers = #tpu.dot_dimension_numbers<[1], [0], [0], [1], [0, 0, 1, 1], [], []>} : vector<8x8xbf16>, vector<8x4xbf16>, vector<8x4xf32> -> vector<8x4xf32>
    %81 = vector.broadcast %78 : vector<8x1xf32> to vector<8x4xf32>
    %82 = arith.mulf %80, %81 : vector<8x4xf32>
    %83 = arith.truncf %82 : vector<8x4xf32> to vector<8x4xbf16>
    %c0_40 = arith.constant 0 : index
    %c12_41 = arith.constant 12 : index
    %84 = vector.load %arg11[%c0_40, %c12_41] : memref<8x32xbf16, #tpu.memory_space<vmem>>, vector<8x4xbf16>
    tpu.vector_store %arg11[%c0_40, %c12_41], %83 {strides = array<i32>} : memref<8x32xbf16, #tpu.memory_space<vmem>>, vector<8x4xbf16>,
    %85 = vector.extract_strided_slice %12 {offsets = [0, 16], sizes = [8, 4], strides = [1, 1]} : vector<8x32xbf16> to vector<8x4xbf16>
    %c0_42 = arith.constant 0 : index
    %c16 = arith.constant 16 : index
    %86 = vector.load %arg9[%c0_42, %c16] : memref<8x32xbf16, #tpu.memory_space<vmem>>, vector<8x4xbf16>
    %c0_43 = arith.constant 0 : index
    %c16_44 = arith.constant 16 : index
    %87 = vector.load %arg10[%c0_43, %c16_44] : memref<8x32xbf16, #tpu.memory_space<vmem>>, vector<8x4xbf16>
    %cst_45 = arith.constant dense<0.000000e+00> : vector<8x8xf32>
    %88 = tpu.matmul %85, %86, %cst_45 {dimension_numbers = #tpu.dot_dimension_numbers<[1], [1], [0], [0], [0, 0, 1, 0], [], []>} : vector<8x4xbf16>, vector<8x4xbf16>, vector<8x8xf32> -> vector<8x8xf32>
    %cst_46 = arith.constant dense<0xFF800000> : vector<8xf32>
    %89 = vector.multi_reduction <maximumf>, %88, %cst_46 [1] : vector<8x8xf32> to vector<8xf32>
    %90 = vector.shape_cast %89 : vector<8xf32> to vector<8x1xf32>
    %91 = vector.broadcast %90 : vector<8x1xf32> to vector<8x8xf32>
    %92 = arith.subf %88, %91 : vector<8x8xf32>
    %93 = math.exp %92 : vector<8x8xf32>
    %cst_47 = arith.constant dense<0.000000e+00> : vector<8xf32>
    %94 = vector.multi_reduction <add>, %93, %cst_47 [1] : vector<8x8xf32> to vector<8xf32>
    %95 = vector.shape_cast %94 : vector<8xf32> to vector<8x1xf32>
    %96 = tpu.reciprocal %95 {approx = true} : vector<8x1xf32> -> vector<8x1xf32>
    %97 = arith.truncf %93 : vector<8x8xf32> to vector<8x8xbf16>
    %cst_48 = arith.constant dense<0.000000e+00> : vector<8x4xf32>
    %98 = tpu.matmul %97, %87, %cst_48 {dimension_numbers = #tpu.dot_dimension_numbers<[1], [0], [0], [1], [0, 0, 1, 1], [], []>} : vector<8x8xbf16>, vector<8x4xbf16>, vector<8x4xf32> -> vector<8x4xf32>
    %99 = vector.broadcast %96 : vector<8x1xf32> to vector<8x4xf32>
    %100 = arith.mulf %98, %99 : vector<8x4xf32>
    %101 = arith.truncf %100 : vector<8x4xf32> to vector<8x4xbf16>
    %c0_49 = arith.constant 0 : index
    %c16_50 = arith.constant 16 : index
    %102 = vector.load %arg11[%c0_49, %c16_50] : memref<8x32xbf16, #tpu.memory_space<vmem>>, vector<8x4xbf16>
    tpu.vector_store %arg11[%c0_49, %c16_50], %101 {strides = array<i32>} : memref<8x32xbf16, #tpu.memory_space<vmem>>, vector<8x4xbf16>,
    %103 = vector.extract_strided_slice %12 {offsets = [0, 20], sizes = [8, 4], strides = [1, 1]} : vector<8x32xbf16> to vector<8x4xbf16>
    %c0_51 = arith.constant 0 : index
    %c20 = arith.constant 20 : index
    %104 = vector.load %arg9[%c0_51, %c20] : memref<8x32xbf16, #tpu.memory_space<vmem>>, vector<8x4xbf16>
    %c0_52 = arith.constant 0 : index
    %c20_53 = arith.constant 20 : index
    %105 = vector.load %arg10[%c0_52, %c20_53] : memref<8x32xbf16, #tpu.memory_space<vmem>>, vector<8x4xbf16>
    %cst_54 = arith.constant dense<0.000000e+00> : vector<8x8xf32>
    %106 = tpu.matmul %103, %104, %cst_54 {dimension_numbers = #tpu.dot_dimension_numbers<[1], [1], [0], [0], [0, 0, 1, 0], [], []>} : vector<8x4xbf16>, vector<8x4xbf16>, vector<8x8xf32> -> vector<8x8xf32>
    %cst_55 = arith.constant dense<0xFF800000> : vector<8xf32>
    %107 = vector.multi_reduction <maximumf>, %106, %cst_55 [1] : vector<8x8xf32> to vector<8xf32>
    %108 = vector.shape_cast %107 : vector<8xf32> to vector<8x1xf32>
    %109 = vector.broadcast %108 : vector<8x1xf32> to vector<8x8xf32>
    %110 = arith.subf %106, %109 : vector<8x8xf32>
    %111 = math.exp %110 : vector<8x8xf32>
    %cst_56 = arith.constant dense<0.000000e+00> : vector<8xf32>
    %112 = vector.multi_reduction <add>, %111, %cst_56 [1] : vector<8x8xf32> to vector<8xf32>
    %113 = vector.shape_cast %112 : vector<8xf32> to vector<8x1xf32>
    %114 = tpu.reciprocal %113 {approx = true} : vector<8x1xf32> -> vector<8x1xf32>
    %115 = arith.truncf %111 : vector<8x8xf32> to vector<8x8xbf16>
    %cst_57 = arith.constant dense<0.000000e+00> : vector<8x4xf32>
    %116 = tpu.matmul %115, %105, %cst_57 {dimension_numbers = #tpu.dot_dimension_numbers<[1], [0], [0], [1], [0, 0, 1, 1], [], []>} : vector<8x8xbf16>, vector<8x4xbf16>, vector<8x4xf32> -> vector<8x4xf32>
    %117 = vector.broadcast %114 : vector<8x1xf32> to vector<8x4xf32>
    %118 = arith.mulf %116, %117 : vector<8x4xf32>
    %119 = arith.truncf %118 : vector<8x4xf32> to vector<8x4xbf16>
    %c0_58 = arith.constant 0 : index
    %c20_59 = arith.constant 20 : index
    %120 = vector.load %arg11[%c0_58, %c20_59] : memref<8x32xbf16, #tpu.memory_space<vmem>>, vector<8x4xbf16>
    tpu.vector_store %arg11[%c0_58, %c20_59], %119 {strides = array<i32>} : memref<8x32xbf16, #tpu.memory_space<vmem>>, vector<8x4xbf16>,
    %121 = vector.extract_strided_slice %12 {offsets = [0, 24], sizes = [8, 4], strides = [1, 1]} : vector<8x32xbf16> to vector<8x4xbf16>
    %c0_60 = arith.constant 0 : index
    %c24 = arith.constant 24 : index
    %122 = vector.load %arg9[%c0_60, %c24] : memref<8x32xbf16, #tpu.memory_space<vmem>>, vector<8x4xbf16>
    %c0_61 = arith.constant 0 : index
    %c24_62 = arith.constant 24 : index
    %123 = vector.load %arg10[%c0_61, %c24_62] : memref<8x32xbf16, #tpu.memory_space<vmem>>, vector<8x4xbf16>
    %cst_63 = arith.constant dense<0.000000e+00> : vector<8x8xf32>
    %124 = tpu.matmul %121, %122, %cst_63 {dimension_numbers = #tpu.dot_dimension_numbers<[1], [1], [0], [0], [0, 0, 1, 0], [], []>} : vector<8x4xbf16>, vector<8x4xbf16>, vector<8x8xf32> -> vector<8x8xf32>
    %cst_64 = arith.constant dense<0xFF800000> : vector<8xf32>
    %125 = vector.multi_reduction <maximumf>, %124, %cst_64 [1] : vector<8x8xf32> to vector<8xf32>
    %126 = vector.shape_cast %125 : vector<8xf32> to vector<8x1xf32>
    %127 = vector.broadcast %126 : vector<8x1xf32> to vector<8x8xf32>
    %128 = arith.subf %124, %127 : vector<8x8xf32>
    %129 = math.exp %128 : vector<8x8xf32>
    %cst_65 = arith.constant dense<0.000000e+00> : vector<8xf32>
    %130 = vector.multi_reduction <add>, %129, %cst_65 [1] : vector<8x8xf32> to vector<8xf32>
    %131 = vector.shape_cast %130 : vector<8xf32> to vector<8x1xf32>
    %132 = tpu.reciprocal %131 {approx = true} : vector<8x1xf32> -> vector<8x1xf32>
    %133 = arith.truncf %129 : vector<8x8xf32> to vector<8x8xbf16>
    %cst_66 = arith.constant dense<0.000000e+00> : vector<8x4xf32>
    %134 = tpu.matmul %133, %123, %cst_66 {dimension_numbers = #tpu.dot_dimension_numbers<[1], [0], [0], [1], [0, 0, 1, 1], [], []>} : vector<8x8xbf16>, vector<8x4xbf16>, vector<8x4xf32> -> vector<8x4xf32>
    %135 = vector.broadcast %132 : vector<8x1xf32> to vector<8x4xf32>
    %136 = arith.mulf %134, %135 : vector<8x4xf32>
    %137 = arith.truncf %136 : vector<8x4xf32> to vector<8x4xbf16>
    %c0_67 = arith.constant 0 : index
    %c24_68 = arith.constant 24 : index
    %138 = vector.load %arg11[%c0_67, %c24_68] : memref<8x32xbf16, #tpu.memory_space<vmem>>, vector<8x4xbf16>
    tpu.vector_store %arg11[%c0_67, %c24_68], %137 {strides = array<i32>} : memref<8x32xbf16, #tpu.memory_space<vmem>>, vector<8x4xbf16>,
    %139 = vector.extract_strided_slice %12 {offsets = [0, 28], sizes = [8, 4], strides = [1, 1]} : vector<8x32xbf16> to vector<8x4xbf16>
    %c0_69 = arith.constant 0 : index
    %c28 = arith.constant 28 : index
    %140 = vector.load %arg9[%c0_69, %c28] : memref<8x32xbf16, #tpu.memory_space<vmem>>, vector<8x4xbf16>
    %c0_70 = arith.constant 0 : index
    %c28_71 = arith.constant 28 : index
    %141 = vector.load %arg10[%c0_70, %c28_71] : memref<8x32xbf16, #tpu.memory_space<vmem>>, vector<8x4xbf16>
    %cst_72 = arith.constant dense<0.000000e+00> : vector<8x8xf32>
    %142 = tpu.matmul %139, %140, %cst_72 {dimension_numbers = #tpu.dot_dimension_numbers<[1], [1], [0], [0], [0, 0, 1, 0], [], []>} : vector<8x4xbf16>, vector<8x4xbf16>, vector<8x8xf32> -> vector<8x8xf32>
    %cst_73 = arith.constant dense<0xFF800000> : vector<8xf32>
    %143 = vector.multi_reduction <maximumf>, %142, %cst_73 [1] : vector<8x8xf32> to vector<8xf32>
    %144 = vector.shape_cast %143 : vector<8xf32> to vector<8x1xf32>
    %145 = vector.broadcast %144 : vector<8x1xf32> to vector<8x8xf32>
    %146 = arith.subf %142, %145 : vector<8x8xf32>
    %147 = math.exp %146 : vector<8x8xf32>
    %cst_74 = arith.constant dense<0.000000e+00> : vector<8xf32>
    %148 = vector.multi_reduction <add>, %147, %cst_74 [1] : vector<8x8xf32> to vector<8xf32>
    %149 = vector.shape_cast %148 : vector<8xf32> to vector<8x1xf32>
    %150 = tpu.reciprocal %149 {approx = true} : vector<8x1xf32> -> vector<8x1xf32>
    %151 = arith.truncf %147 : vector<8x8xf32> to vector<8x8xbf16>
    %cst_75 = arith.constant dense<0.000000e+00> : vector<8x4xf32>
    %152 = tpu.matmul %151, %141, %cst_75 {dimension_numbers = #tpu.dot_dimension_numbers<[1], [0], [0], [1], [0, 0, 1, 1], [], []>} : vector<8x8xbf16>, vector<8x4xbf16>, vector<8x4xf32> -> vector<8x4xf32>
    %153 = vector.broadcast %150 : vector<8x1xf32> to vector<8x4xf32>
    %154 = arith.mulf %152, %153 : vector<8x4xf32>
    %155 = arith.truncf %154 : vector<8x4xf32> to vector<8x4xbf16>
    %c0_76 = arith.constant 0 : index
    %c28_77 = arith.constant 28 : index
    %156 = vector.load %arg11[%c0_76, %c28_77] : memref<8x32xbf16, #tpu.memory_space<vmem>>, vector<8x4xbf16>
    tpu.vector_store %arg11[%c0_76, %c28_77], %155 {strides = array<i32>} : memref<8x32xbf16, #tpu.memory_space<vmem>>, vector<8x4xbf16>,
    %c0_78 = arith.constant 0 : index
    %c0_79 = arith.constant 0 : index
    %157 = vector.load %arg11[%c0_78, %c0_79] : memref<8x32xbf16, #tpu.memory_space<vmem>>, vector<8x32xbf16>
    %c0_80 = arith.constant 0 : index
    %c0_81 = arith.constant 0 : index
    %158 = vector.load %arg6[%c0_80, %c0_81] : memref<32x32xbf16, #tpu.memory_space<vmem>>, vector<32x32xbf16>
    %cst_82 = arith.constant dense<0.000000e+00> : vector<8x32xf32>
    %159 = tpu.matmul %157, %158, %cst_82 {dimension_numbers = #tpu.dot_dimension_numbers<[1], [0], [0], [1], [0, 0, 1, 1], [], []>} : vector<8x32xbf16>, vector<32x32xbf16>, vector<8x32xf32> -> vector<8x32xf32>
    %c0_83 = arith.constant 0 : index
    %c0_84 = arith.constant 0 : index
    %160 = vector.load %arg7[%c0_83, %c0_84] : memref<1x32xf32, #tpu.memory_space<vmem>>, vector<1x32xf32>
    %161 = vector.broadcast %160 : vector<1x32xf32> to vector<8x32xf32>
    %162 = arith.addf %159, %161 : vector<8x32xf32>
    %c0_85 = arith.constant 0 : index
    %c0_86 = arith.constant 0 : index
    %c0_87 = arith.constant 0 : index
    %163 = vector.load %arg8[%c0_85, %c0_86, %c0_87] : memref<1x8x32xf32, #tpu.memory_space<vmem>>, vector<1x8x32xf32>
    %164 = vector.shape_cast %163 : vector<1x8x32xf32> to vector<8x32xf32>
    %165 = vector.shape_cast %162 : vector<8x32xf32> to vector<1x8x32xf32>
    tpu.vector_store %arg8[%c0_85, %c0_86, %c0_87], %165 {strides = array<i32>} : memref<1x8x32xf32, #tpu.memory_space<vmem>>, vector<1x8x32xf32>,
    return
  }
  func.func @transform_0(%arg0: i32, %arg1: i32) -> (i32, i32, i32) {
    %c0_i32 = arith.constant 0 : i32
    %c0_i32_0 = arith.constant 0 : i32
    %c0_i32_1 = arith.constant 0 : i32
    return %arg0, %c0_i32, %c0_i32_0 : i32, i32, i32
  }
  func.func @transform_1(%arg0: i32, %arg1: i32) -> (i32, i32) {
    %c0_i32 = arith.constant 0 : i32
    %c0_i32_0 = arith.constant 0 : i32
    %c0_i32_1 = arith.constant 0 : i32
    return %c0_i32, %c0_i32_0 : i32, i32
  }
  func.func @transform_2(%arg0: i32, %arg1: i32) -> (i32, i32) {
    %c0_i32 = arith.constant 0 : i32
    %c0_i32_0 = arith.constant 0 : i32
    %c0_i32_1 = arith.constant 0 : i32
    return %c0_i32, %c0_i32_0 : i32, i32
  }
  func.func @transform_3(%arg0: i32, %arg1: i32) -> (i32, i32) {
    %c0_i32 = arith.constant 0 : i32
    %c0_i32_0 = arith.constant 0 : i32
    %c0_i32_1 = arith.constant 0 : i32
    return %c0_i32, %c0_i32_0 : i32, i32
  }
  func.func @transform_4(%arg0: i32, %arg1: i32) -> (i32, i32) {
    %c0_i32 = arith.constant 0 : i32
    %c0_i32_0 = arith.constant 0 : i32
    %c0_i32_1 = arith.constant 0 : i32
    return %c0_i32, %c0_i32_0 : i32, i32
  }
  func.func @transform_5(%arg0: i32, %arg1: i32) -> (i32, i32) {
    %c0_i32 = arith.constant 0 : i32
    %c0_i32_0 = arith.constant 0 : i32
    %c0_i32_1 = arith.constant 0 : i32
    return %c0_i32, %c0_i32_0 : i32, i32
  }
  func.func @transform_6(%arg0: i32, %arg1: i32) -> (i32, i32, i32) {
    %c0_i32 = arith.constant 0 : i32
    %c0_i32_0 = arith.constant 0 : i32
    return %arg0, %arg1, %c0_i32 : i32, i32, i32
  }
}

</mosaic_0001>

<llo_original>
// kernel: tpu_custom_call.1
$region0: #{tpu_custom_call.1}
  #allocation0 [shape = 'u32[]', space=smem, size = 0x4, offset = 0x4, fixed_abs, tag = 'smem constant byte address 0x4 - core index']
  #allocation1 [shape = 'u32[144,128]{1,0:T(1,128)}', space=vmem, size = 0x12000, scoped, tag = 'internal scratch']
  #allocation2 [shape = 'bf16[8,32]{1,0:T(8,128)(2,1)}', space=vmem, size = 0x800, scoped, tag = 'scratch operand']
  #allocation3 [shape = 'bf16[8,32]{1,0:T(8,128)(2,1)}', space=vmem, size = 0x800, scoped, tag = 'scratch operand']
  #allocation4 [shape = 'bf16[8,32]{1,0:T(8,128)(2,1)}', space=vmem, size = 0x800, scoped, tag = 'scratch operand']
  %s0 = inlined_call_operand.hbm [shape: bf16[2,8,32], index: 0, kind: input, shape index: {}]
  %s1 = inlined_call_operand.hbm [shape: bf16[32,32], index: 1, kind: input, shape index: {}]
  %s2 = inlined_call_operand.hbm [shape: bf16[32,32], index: 2, kind: input, shape index: {}]
  %s3 = inlined_call_operand.hbm [shape: bf16[32,32], index: 3, kind: input, shape index: {}]
  %s4 = inlined_call_operand.hbm [shape: bf16[32,32], index: 4, kind: input, shape index: {}]
  %s5 = inlined_call_operand.vmem [shape: f32[1,32], index: 5, kind: input, shape index: {}]
  %s6 = inlined_call_operand.hbm [shape: f32[2,8,32], index: 6, kind: output, shape index: {}]
  %s7 = sld [smem:[#allocation0]]
  $region81: #{tpu_custom_call.1} parent=0
    _
  %s9 = ssub.s32 1, %s7
  %s10 = scalar_select 0, %s9, %s7
  $region1: #{tpu_custom_call.1} parent=0
    #allocation5 [shape = 'u8[4096]{0}', space=vmem, size = 0x1000, scoped, tag = 'input window, operand 0']
    #allocation6 [shape = 's32[2]{0}', space=sflag, size = 0x8, scoped, tag = 'scoped memory for tpu_custom_call.1']
    #allocation7 [shape = 's32[2]{0}', space=sflag, size = 0x8, scoped, tag = 'scoped memory for tpu_custom_call.1']
    #allocation8 [shape = 'u8[8192]{0}', space=vmem, size = 0x2000, scoped, tag = 'input window, operand 1, single buffered']
    #allocation9 [shape = 's32[1]{0}', space=sflag, size = 0x4, scoped, tag = 'scoped memory for tpu_custom_call.1']
    #allocation10 [shape = 'u8[8192]{0}', space=vmem, size = 0x2000, scoped, tag = 'input window, operand 2, single buffered']
    #allocation11 [shape = 'u8[8192]{0}', space=vmem, size = 0x2000, scoped, tag = 'input window, operand 3, single buffered']
    #allocation12 [shape = 's32[1]{0}', space=sflag, size = 0x4, scoped, tag = 'scoped memory for tpu_custom_call.1']
    #allocation13 [shape = 'u8[8192]{0}', space=vmem, size = 0x2000, scoped, tag = 'input window, operand 4, single buffered']
    #allocation14 [shape = 'u8[8192]{0}', space=vmem, size = 0x2000, scoped, tag = 'output window, operand 0']
    %11 = vsyncpa [#allocation6], 0
    %s12 = scalar_lea.sflag [#allocation6], 1
    %13 = vsyncpa %s12, 0
    %14 = vsyncpa [#allocation9], 0
    %15 = vsyncpa [#allocation12], 0
    %16 = vsyncpa [#allocation7], 0
    %s17 = scalar_lea.sflag [#allocation7], 1
    %18 = vsyncpa %s17, 0
    loop: start=0, step=1, limit=4
    $region2: #{tpu_custom_call.1} parent=1 // loop_pre_header
      _
    $region3: #{tpu_custom_call.1} parent=1 // loop_header
      %s20 = sphi 0, %s24
      %p21 = scmp.ge.s32.totalorder %s20, 4
      %s27 = sphi 0, %s39
      %s28 = sphi 0, %s35
      %s29 = sphi 0, %s27
      %s30 = sphi 0, %s28
      %s31 = sphi 0, %s29
      %s32 = sphi 0, %s30
      %s42 = sphi 0, %s44
      %s45 = sphi 0, %s42
      %s46 = sphi 0, %s45
      %s62 = sphi 0, %s46
      %s66 = sphi 0, %s66
      %s68 = sphi 0, %s66
      %s69 = sphi 0, %s68
      %s83 = sphi 0, %s69
      %s87 = sphi 0, %s87
      %s89 = sphi 0, %s87
      %s90 = sphi 0, %s89
      %s104 = sphi 0, %s90
      %s108 = sphi 0, %s108
      %s110 = sphi 0, %s108
      %s111 = sphi 0, %s110
      %s125 = sphi 0, %s111
      %s129 = sphi 0, %s129
      %s131 = sphi 0, %s129
      %s132 = sphi 0, %s131
      %s146 = sphi 0, %s132
      %s150 = sphi 0, %s150
      %s152 = sphi 0, %s150
      %s153 = sphi 0, %s152
      %s167 = sphi 0, %s153
      %s175 = sphi 0, %s177
      %s178 = sphi 0, %s175
      %s179 = sphi 0, %s178
      %s195 = sphi 0, %s179
    $region4: #{tpu_custom_call.1} parent=1 // loop_header_branch
      %23 = sbr.rel (%p21) target = $region8
    $region5: #{tpu_custom_call.1} parent=1 // loop_body
      %s25 = ssub.s32 %s20, 1
      %s26 = ssub.s32 %s20, 2
      %s33 = sadd.s32 1, %s28
      %p34 = scmp.ge.s32.totalorder %s33, 1
      %s35 = scalar_select %p34, 0, %s33
      %s36 = sadd.s32 1, %s27
      %s37 = scalar_select %p34, %s36, %s27
      %p38 = scmp.ge.s32.totalorder %s37, 2
      %s39 = scalar_select %p38, 0, %s37
      %s40 = ssub.s32 %s27, %s39
      %p41 = scmp.eq.s32.totalorder %s40, 0
      %s43 = sadd.s32 %s42, 1
      %s44 = scalar_select %p41, %s42, %s43
      %p47 = pneg %p41
      %p48 = scmp.eq.s32.totalorder %s20, 1
      %p49 = por %p47, %p48
      %p50 = scmp.ne.s32.totalorder %s42, %s45
      %p51 = scmp.eq.s32.totalorder %s20, 0
      %p52 = por %p50, %p51
      %p53 = scmp.ne.s32.totalorder %s42, %s45
      %p54 = scmp.eq.s32.totalorder %s25, 1
      %p55 = por %p53, %p54
      %p56 = scmp.ne.s32.totalorder %s45, %s46
      %p57 = scmp.eq.s32.totalorder %s25, 0
      %p58 = por %p56, %p57
      %p59 = scmp.ne.s32.totalorder %s45, %s46
      %p60 = scmp.eq.s32.totalorder %s26, 1
      %p61 = por %p59, %p60
      %p63 = scmp.ne.s32.totalorder %s46, %s62
      %p64 = scmp.eq.s32.totalorder %s26, 0
      %p65 = por %p63, %p64
      %s67 = sadd.s32 %s66, 1
      %p70 = scmp.eq.s32.totalorder %s20, 1
      %p71 = scmp.ne.s32.totalorder %s66, %s68
      %p72 = scmp.eq.s32.totalorder %s20, 0
      %p73 = por %p71, %p72
      %p74 = scmp.ne.s32.totalorder %s66, %s68
      %p75 = scmp.eq.s32.totalorder %s25, 1
      %p76 = por %p74, %p75
      %p77 = scmp.ne.s32.totalorder %s68, %s69
      %p78 = scmp.eq.s32.totalorder %s25, 0
      %p79 = por %p77, %p78
      %p80 = scmp.ne.s32.totalorder %s68, %s69
      %p81 = scmp.eq.s32.totalorder %s26, 1
      %p82 = por %p80, %p81
      %p84 = scmp.ne.s32.totalorder %s69, %s83
      %p85 = scmp.eq.s32.totalorder %s26, 0
      %p86 = por %p84, %p85
      %s88 = sadd.s32 %s87, 1
      %p91 = scmp.eq.s32.totalorder %s20, 1
      %p92 = scmp.ne.s32.totalorder %s87, %s89
      %p93 = scmp.eq.s32.totalorder %s20, 0
      %p94 = por %p92, %p93
      %p95 = scmp.ne.s32.totalorder %s87, %s89
      %p96 = scmp.eq.s32.totalorder %s25, 1
      %p97 = por %p95, %p96
      %p98 = scmp.ne.s32.totalorder %s89, %s90
      %p99 = scmp.eq.s32.totalorder %s25, 0
      %p100 = por %p98, %p99
      %p101 = scmp.ne.s32.totalorder %s89, %s90
      %p102 = scmp.eq.s32.totalorder %s26, 1
      %p103 = por %p101, %p102
      %p105 = scmp.ne.s32.totalorder %s90, %s104
      %p106 = scmp.eq.s32.totalorder %s26, 0
      %p107 = por %p105, %p106
      %s109 = sadd.s32 %s108, 1
      %p112 = scmp.eq.s32.totalorder %s20, 1
      %p113 = scmp.ne.s32.totalorder %s108, %s110
      %p114 = scmp.eq.s32.totalorder %s20, 0
      %p115 = por %p113, %p114
      %p116 = scmp.ne.s32.totalorder %s108, %s110
      %p117 = scmp.eq.s32.totalorder %s25, 1
      %p118 = por %p116, %p117
      %p119 = scmp.ne.s32.totalorder %s110, %s111
      %p120 = scmp.eq.s32.totalorder %s25, 0
      %p121 = por %p119, %p120
      %p122 = scmp.ne.s32.totalorder %s110, %s111
      %p123 = scmp.eq.s32.totalorder %s26, 1
      %p124 = por %p122, %p123
      %p126 = scmp.ne.s32.totalorder %s111, %s125
      %p127 = scmp.eq.s32.totalorder %s26, 0
      %p128 = por %p126, %p127
      %s130 = sadd.s32 %s129, 1
      %p133 = scmp.eq.s32.totalorder %s20, 1
      %p134 = scmp.ne.s32.totalorder %s129, %s131
      %p135 = scmp.eq.s32.totalorder %s20, 0
      %p136 = por %p134, %p135
      %p137 = scmp.ne.s32.totalorder %s129, %s131
      %p138 = scmp.eq.s32.totalorder %s25, 1
      %p139 = por %p137, %p138
      %p140 = scmp.ne.s32.totalorder %s131, %s132
      %p141 = scmp.eq.s32.totalorder %s25, 0
      %p142 = por %p140, %p141
      %p143 = scmp.ne.s32.totalorder %s131, %s132
      %p144 = scmp.eq.s32.totalorder %s26, 1
      %p145 = por %p143, %p144
      %p147 = scmp.ne.s32.totalorder %s132, %s146
      %p148 = scmp.eq.s32.totalorder %s26, 0
      %p149 = por %p147, %p148
      %s151 = sadd.s32 %s150, 1
      %p154 = scmp.eq.s32.totalorder %s20, 1
      %p155 = scmp.ne.s32.totalorder %s150, %s152
      %p156 = scmp.eq.s32.totalorder %s20, 0
      %p157 = por %p155, %p156
      %p158 = scmp.ne.s32.totalorder %s150, %s152
      %p159 = scmp.eq.s32.totalorder %s25, 1
      %p160 = por %p158, %p159
      %p161 = scmp.ne.s32.totalorder %s152, %s153
      %p162 = scmp.eq.s32.totalorder %s25, 0
      %p163 = por %p161, %p162
      %p164 = scmp.ne.s32.totalorder %s152, %s153
      %p165 = scmp.eq.s32.totalorder %s26, 1
      %p166 = por %p164, %p165
      %p168 = scmp.ne.s32.totalorder %s153, %s167
      %p169 = scmp.eq.s32.totalorder %s26, 0
      %p170 = por %p168, %p169
      %s171 = ssub.s32 %s27, %s39
      %s172 = ssub.s32 %s28, %s35
      %s173 = sor.u32 %s171, %s172
      %p174 = scmp.eq.s32.totalorder %s173, 0
      %s176 = sadd.s32 %s175, 1
      %s177 = scalar_select %p174, %s175, %s176
      %p180 = pneg %p174
      %p181 = scmp.eq.s32.totalorder %s20, 1
      %p182 = por %p180, %p181
      %p183 = scmp.ne.s32.totalorder %s175, %s178
      %p184 = scmp.eq.s32.totalorder %s20, 0
      %p185 = por %p183, %p184
      %p186 = scmp.ne.s32.totalorder %s175, %s178
      %p187 = scmp.eq.s32.totalorder %s25, 1
      %p188 = por %p186, %p187
      %p189 = scmp.ne.s32.totalorder %s178, %s179
      %p190 = scmp.eq.s32.totalorder %s25, 0
      %p191 = por %p189, %p190
      %p192 = scmp.ne.s32.totalorder %s178, %s179
      %p193 = scmp.eq.s32.totalorder %s26, 1
      %p194 = por %p192, %p193
      %p196 = scmp.ne.s32.totalorder %s179, %s195
      %p197 = scmp.eq.s32.totalorder %s26, 0
      %p198 = por %p196, %p197
      %p199 = scmp.le.s32.totalorder 1, %s20
      %p200 = scmp.lt.s32.totalorder %s20, 3
      %p201 = pnand %p199, %p200
      %p202 = pneg %p201
      // Predicated region
      $region9: #{tpu_custom_call.1} parent=5 // pred_check
        _
      $region10: #{tpu_custom_call.1} parent=5 // pred_check_branch
        %204 = sbr.rel (%p201) target = $region12
      $region11: #{tpu_custom_call.1} parent=5 // pred_region
        %s205 = ssub.s32 %s20, 1
        // Predicated region
        $region13: #{tpu_custom_call.1} parent=11 // pred_check
          %p206 = pneg %p79
        $region14: #{tpu_custom_call.1} parent=11 // pred_check_branch
          %208 = sbr.rel (%p206) target = $region16
        $region15: #{tpu_custom_call.1} parent=11 // pred_region
          %s210 = ssub.s32 256, 256
          %211 = vsyncadd [#allocation9], %s210
          %s212 = sshll.u32 [#allocation8], 4
          %s213 = int_to_ptr.vmem [resolvable:$true] %s212
          %218 = dma.hbm_to_vmem [thread:$0]  %s1, 256, %s213, [#allocation9], 64, 64, 4
        $region16: #{tpu_custom_call.1} parent=11 // pred_fallthru
          _
        // Predicated region
        $region17: #{tpu_custom_call.1} parent=11 // pred_check
          %p219 = pneg %p100
        $region18: #{tpu_custom_call.1} parent=11 // pred_check_branch
          %221 = sbr.rel (%p219) target = $region20
        $region19: #{tpu_custom_call.1} parent=11 // pred_region
          %s223 = ssub.s32 256, 256
          %224 = vsyncadd [#allocation9], %s223
          %s225 = sshll.u32 [#allocation10], 4
          %s226 = int_to_ptr.vmem [resolvable:$true] %s225
          %231 = dma.hbm_to_vmem [thread:$0]  %s2, 256, %s226, [#allocation9], 64, 64, 4
        $region20: #{tpu_custom_call.1} parent=11 // pred_fallthru
          _
        // Predicated region
        $region21: #{tpu_custom_call.1} parent=11 // pred_check
          %p232 = pneg %p121
        $region22: #{tpu_custom_call.1} parent=11 // pred_check_branch
          %234 = sbr.rel (%p232) target = $region24
        $region23: #{tpu_custom_call.1} parent=11 // pred_region
          %s236 = ssub.s32 256, 256
          %237 = vsyncadd [#allocation12], %s236
          %s238 = sshll.u32 [#allocation11], 4
          %s239 = int_to_ptr.vmem [resolvable:$true] %s238
          %244 = dma.hbm_to_vmem [thread:$0]  %s3, 256, %s239, [#allocation12], 64, 64, 4
        $region24: #{tpu_custom_call.1} parent=11 // pred_fallthru
          _
        // Predicated region
        $region25: #{tpu_custom_call.1} parent=11 // pred_check
          %p245 = pneg %p142
        $region26: #{tpu_custom_call.1} parent=11 // pred_check_branch
          %247 = sbr.rel (%p245) target = $region28
        $region27: #{tpu_custom_call.1} parent=11 // pred_region
          %s249 = ssub.s32 256, 256
          %250 = vsyncadd [#allocation12], %s249
          %s251 = sshll.u32 [#allocation13], 4
          %s252 = int_to_ptr.vmem [resolvable:$true] %s251
          %257 = dma.hbm_to_vmem [thread:$0]  %s4, 256, %s252, [#allocation12], 64, 64, 4
        $region28: #{tpu_custom_call.1} parent=11 // pred_fallthru
          _
        // Predicated region
        $region29: #{tpu_custom_call.1} parent=11 // pred_check
          %p258 = pneg %p163
        $region30: #{tpu_custom_call.1} parent=11 // pred_check_branch
          %260 = sbr.rel (%p258) target = $region32
        $region31: #{tpu_custom_call.1} parent=11 // pred_region
          _
        $region32: #{tpu_custom_call.1} parent=11 // pred_fallthru
          _
      $region12: #{tpu_custom_call.1} parent=5 // pred_fallthru
        _
      %p261 = scmp.lt.s32.totalorder %s20, 2
      // Predicated region
      $region33: #{tpu_custom_call.1} parent=5 // pred_check
        %p262 = pneg %p261
      $region34: #{tpu_custom_call.1} parent=5 // pred_check_branch
        %264 = sbr.rel (%p262) target = $region36
      $region35: #{tpu_custom_call.1} parent=5 // pred_region
        // Predicated region
        $region37: #{tpu_custom_call.1} parent=35 // pred_check
          %p265 = pneg %p52
        $region38: #{tpu_custom_call.1} parent=35 // pred_check_branch
          %267 = sbr.rel (%p265) target = $region40
        $region39: #{tpu_custom_call.1} parent=35 // pred_region
          %s268 = sand.u32 %s42, 1
          %s269 = scalar_lea.sflag [#allocation6], %s268
          %s270 = sand.u32 %s42, 1
          %s271 = smul.addr %s270, 4
          %s272 = scalar_lea.vmem [#allocation5], %s271
          %s274 = ssub.s32 64, 64
          %275 = vsyncadd %s269, %s274
          %s276 = smul.addr %s27, 64
          %s277 = scalar_lea.hbm %s0, %s276
          %s279 = sshll.u32 %s272, 4
          %s280 = int_to_ptr.vmem [resolvable:$true] %s279
          %282 = dma.hbm_to_vmem [thread:$0]  %s277, 64, %s280, %s269
        $region40: #{tpu_custom_call.1} parent=35 // pred_fallthru
          _
      $region36: #{tpu_custom_call.1} parent=5 // pred_fallthru
        _
      %p283 = scmp.le.s32.totalorder 1, %s20
      %p284 = scmp.lt.s32.totalorder %s20, 3
      %p285 = pnand %p283, %p284
      %p286 = pneg %p285
      // Predicated region
      $region41: #{tpu_custom_call.1} parent=5 // pred_check
        _
      $region42: #{tpu_custom_call.1} parent=5 // pred_check_branch
        %288 = sbr.rel (%p285) target = $region44
      $region43: #{tpu_custom_call.1} parent=5 // pred_region
        %s289 = ssub.s32 %s20, 1
        %s290 = sand.u32 %s45, 1
        %s291 = scalar_lea.sflag [#allocation6], %s290
        %s292 = sand.u32 %s45, 1
        %s293 = smul.addr %s292, 4
        %s294 = scalar_lea.vmem [#allocation5], %s293
        // Predicated region
        $region45: #{tpu_custom_call.1} parent=43 // pred_check
          %p295 = pneg %p58
        $region46: #{tpu_custom_call.1} parent=43 // pred_check_branch
          %297 = sbr.rel (%p295) target = $region48
        $region47: #{tpu_custom_call.1} parent=43 // pred_region
          %298 = dma.done %s291, 64
        $region48: #{tpu_custom_call.1} parent=43 // pred_fallthru
          _
        // Predicated region
        $region49: #{tpu_custom_call.1} parent=43 // pred_check
          %p299 = pneg %p79
        $region50: #{tpu_custom_call.1} parent=43 // pred_check_branch
          %301 = sbr.rel (%p299) target = $region52
        $region51: #{tpu_custom_call.1} parent=43 // pred_region
          %302 = dma.done [#allocation9], 256
        $region52: #{tpu_custom_call.1} parent=43 // pred_fallthru
          _
        // Predicated region
        $region53: #{tpu_custom_call.1} parent=43 // pred_check
          %p303 = pneg %p100
        $region54: #{tpu_custom_call.1} parent=43 // pred_check_branch
          %305 = sbr.rel (%p303) target = $region56
        $region55: #{tpu_custom_call.1} parent=43 // pred_region
          %306 = dma.done [#allocation9], 256
        $region56: #{tpu_custom_call.1} parent=43 // pred_fallthru
          _
        // Predicated region
        $region57: #{tpu_custom_call.1} parent=43 // pred_check
          %p307 = pneg %p121
        $region58: #{tpu_custom_call.1} parent=43 // pred_check_branch
          %309 = sbr.rel (%p307) target = $region60
        $region59: #{tpu_custom_call.1} parent=43 // pred_region
          %310 = dma.done [#allocation12], 256
        $region60: #{tpu_custom_call.1} parent=43 // pred_fallthru
          _
        // Predicated region
        $region61: #{tpu_custom_call.1} parent=43 // pred_check
          %p311 = pneg %p142
        $region62: #{tpu_custom_call.1} parent=43 // pred_check_branch
          %313 = sbr.rel (%p311) target = $region64
        $region63: #{tpu_custom_call.1} parent=43 // pred_region
          %314 = dma.done [#allocation12], 256
        $region64: #{tpu_custom_call.1} parent=43 // pred_fallthru
          _
        %s315 = sand.u32 %s45, 1
        %s316 = scalar_lea.sflag [#allocation6], %s315
        %s317 = sand.u32 %s45, 1
        %s318 = smul.addr %s317, 4
        %s319 = scalar_lea.vmem [#allocation5], %s318
        %p320 = pneg %p58
        %p321 = pneg %p55
        %p322 = pneg %p79
        %p323 = pneg %p76
        %p324 = pneg %p100
        %p325 = pneg %p97
        %p326 = pneg %p121
        %p327 = pneg %p118
        %p328 = pneg %p142
        %p329 = pneg %p139
        %p330 = pneg %p163
        %p331 = pneg %p160
        %p332 = pneg %p191
        %p333 = pneg %p188
        %s334 = sand.u32 %s178, 1
        %s335 = scalar_lea.sflag [#allocation7], %s334
        %s336 = sand.u32 %s178, 1
        %s337 = smul.addr %s336, 8
        %s338 = scalar_lea.vmem [#allocation14], %s337
        %p340 = scmp.eq.s32.totalorder %s30, 0
        // Predicated region
        $region65: #{tpu_custom_call.1} parent=43 // pred_check
          %p341 = pneg %p340
        $region66: #{tpu_custom_call.1} parent=43 // pred_check_branch
          %343 = sbr.rel (%p341) target = $region68
        $region67: #{tpu_custom_call.1} parent=43 // pred_region
          %v344 = vld [vmem:[%s294] sm:$0xf]
          %v345 = vld [vmem:[#allocation8] sm:$0xf]
          %v346 = vld [vmem:[#allocation8 + $0x4] sm:$0xf]
          %v347 = vld [vmem:[#allocation8 + $0x8] sm:$0xf]
          %v348 = vld [vmem:[#allocation8 + $0xc] sm:$0xf]
          %v353 = vunpack.c.l.b16 %v345
          %v354 = vunpack.c.l.b16 %v346
          %v355 = vunpack.c.l.b16 %v347
          %v356 = vunpack.c.l.b16 %v348
          %v357 = vpack.c.b16 %v354, %v353
          %v358 = vpack.c.b16 %v356, %v355
          %vm361 = vcmask 261120
          %v363 = vsel %vm361, %v344, 0
          %365 = vmatprep.subr.bf16.mxu0 0
          %366 = vmatpush1.bf16.msra.mxu0 0
          %367 = vmatprep.subr.bf16.mxu0 0
          %368 = vmatpush1.bf16.msra.mxu0 0
          %369 = vmatprep.subr.bf16.mxu0 0
          %370 = vmatpush1.bf16.msra.mxu0 0
          %371 = vmatprep.subr.bf16.mxu0 0
          %372 = vmatpush1.bf16.msra.mxu0 0
          %373 = vmatprep.subr.bf16.mxu0 0
          %374 = vmatpush1.bf16.msra.mxu0 0
          %375 = vmatprep.subr.bf16.mxu0 0
          %376 = vmatpush1.bf16.msra.mxu0 0
          %377 = vmatprep.subr.bf16.mxu0 0
          %378 = vmatpush1.bf16.msra.mxu0 %v358
          %379 = vmatprep.subr.bf16.mxu0 0
          %380 = vmatpush1.bf16.msra.mxu0 %v357
          %381 = vmatprep.subr.bf16.mxu0 0
          %382 = vmatpush2.bf16.msra.mxu0 0
          %383 = vmatprep.subr.bf16.mxu0 0
          %384 = vmatpush2.bf16.msra.mxu0 0
          %385 = vmatprep.subr.bf16.mxu0 0
          %386 = vmatpush2.bf16.msra.mxu0 0
          %387 = vmatprep.subr.bf16.mxu0 0
          %388 = vmatpush2.bf16.msra.mxu0 0
          %389 = vmatprep.subr.bf16.mxu0 0
          %390 = vmatpush2.bf16.msra.mxu0 0
          %391 = vmatprep.subr.bf16.mxu0 0
          %392 = vmatpush2.bf16.msra.mxu0 0
          %393 = vmatprep.subr.bf16.mxu0 0
          %394 = vmatpush2.bf16.msra.mxu0 0
          %395 = vmatprep.subr.bf16.mxu0 0
          %396 = vmatpush2.bf16.msra.mxu0 0
          %397 = vmatprep.mubr.bf16.mxu0 0
          %398 = vmatmul.mubr.bf16.gmra.mxu0 %v363
          %v399 = vpop.f32.mrf.mxu0
          %v400 = vadd.f32 0.0, %v399
          %v401 = vpop.f32.mrf.mxu0
          %v402 = vpop.f32.mrf.mxu0
          %v403 = vpop.f32.mrf.mxu0
          %404 = vdwg.mxu0
          %v405 = vpack.c.bf16 %v400, %v400
          %vm406 = vcmask 257024
          %407 = vst.msk [vmem:[#allocation2] sm:$0xf] %vm406, %v405
          %v408 = vld [vmem:[#allocation11] sm:$0xf]
          %v409 = vld [vmem:[#allocation11 + $0x4] sm:$0xf]
          %v410 = vld [vmem:[#allocation11 + $0x8] sm:$0xf]
          %v411 = vld [vmem:[#allocation11 + $0xc] sm:$0xf]
          %v416 = vunpack.c.l.b16 %v408
          %v417 = vunpack.c.l.b16 %v409
          %v418 = vunpack.c.l.b16 %v410
          %v419 = vunpack.c.l.b16 %v411
          %v420 = vpack.c.b16 %v417, %v416
          %v421 = vpack.c.b16 %v419, %v418
          %424 = vmatprep.subr.bf16.mxu0 0
          %425 = vmatpush1.bf16.msra.mxu0 0
          %426 = vmatprep.subr.bf16.mxu0 0
          %427 = vmatpush1.bf16.msra.mxu0 0
          %428 = vmatprep.subr.bf16.mxu0 0
          %429 = vmatpush1.bf16.msra.mxu0 0
          %430 = vmatprep.subr.bf16.mxu0 0
          %431 = vmatpush1.bf16.msra.mxu0 0
          %432 = vmatprep.subr.bf16.mxu0 0
          %433 = vmatpush1.bf16.msra.mxu0 0
          %434 = vmatprep.subr.bf16.mxu0 0
          %435 = vmatpush1.bf16.msra.mxu0 0
          %436 = vmatprep.subr.bf16.mxu0 0
          %437 = vmatpush1.bf16.msra.mxu0 %v421
          %438 = vmatprep.subr.bf16.mxu0 0
          %439 = vmatpush1.bf16.msra.mxu0 %v420
          %440 = vmatprep.subr.bf16.mxu0 0
          %441 = vmatpush2.bf16.msra.mxu0 0
          %442 = vmatprep.subr.bf16.mxu0 0
          %443 = vmatpush2.bf16.msra.mxu0 0
          %444 = vmatprep.subr.bf16.mxu0 0
          %445 = vmatpush2.bf16.msra.mxu0 0
          %446 = vmatprep.subr.bf16.mxu0 0
          %447 = vmatpush2.bf16.msra.mxu0 0
          %448 = vmatprep.subr.bf16.mxu0 0
          %449 = vmatpush2.bf16.msra.mxu0 0
          %450 = vmatprep.subr.bf16.mxu0 0
          %451 = vmatpush2.bf16.msra.mxu0 0
          %452 = vmatprep.subr.bf16.mxu0 0
          %453 = vmatpush2.bf16.msra.mxu0 0
          %454 = vmatprep.subr.bf16.mxu0 0
          %455 = vmatpush2.bf16.msra.mxu0 0
          %456 = vmatprep.mubr.bf16.mxu0 0
          %457 = vmatmul.mubr.bf16.gmra.mxu0 %v363
          %v458 = vpop.f32.mrf.mxu0
          %v459 = vadd.f32 0.0, %v458
          %v460 = vpop.f32.mrf.mxu0
          %v461 = vpop.f32.mrf.mxu0
          %v462 = vpop.f32.mrf.mxu0
          %463 = vdwg.mxu0
          %v464 = vpack.c.bf16 %v459, %v459
          %465 = vst.msk [vmem:[#allocation3] sm:$0xf] %vm406, %v464
        $region68: #{tpu_custom_call.1} parent=43 // pred_fallthru
          _
        %s466 = smul.u32 %s30, 8
        %s467 = sshra.s32 %s466, 3
        %s468 = sand.u32 %s466, 7
        %s469 = smul.addr %s467, 4
        %s470 = scalar_lea.vmem %s294, %s469 [#allocation5]
        %v471 = vld [vmem:[%s470] sm:$0xf]
        %v472 = vld [vmem:[#allocation10] sm:$0xf]
        %v473 = vld [vmem:[#allocation10 + $0x4] sm:$0xf]
        %v474 = vld [vmem:[#allocation10 + $0x8] sm:$0xf]
        %v475 = vld [vmem:[#allocation10 + $0xc] sm:$0xf]
        %v480 = vunpack.c.l.b16 %v472
        %v481 = vunpack.c.l.b16 %v473
        %v482 = vunpack.c.l.b16 %v474
        %v483 = vunpack.c.l.b16 %v475
        %v484 = vpack.c.b16 %v481, %v480
        %v485 = vpack.c.b16 %v483, %v482
        %vm488 = vcmask 261120
        %v490 = vsel %vm488, %v471, 0
        %492 = vmatprep.subr.bf16.mxu0 0
        %493 = vmatpush1.bf16.msra.mxu0 0
        %494 = vmatprep.subr.bf16.mxu0 0
        %495 = vmatpush1.bf16.msra.mxu0 0
        %496 = vmatprep.subr.bf16.mxu0 0
        %497 = vmatpush1.bf16.msra.mxu0 0
        %498 = vmatprep.subr.bf16.mxu0 0
        %499 = vmatpush1.bf16.msra.mxu0 0
        %500 = vmatprep.subr.bf16.mxu0 0
        %501 = vmatpush1.bf16.msra.mxu0 0
        %502 = vmatprep.subr.bf16.mxu0 0
        %503 = vmatpush1.bf16.msra.mxu0 0
        %504 = vmatprep.subr.bf16.mxu0 0
        %505 = vmatpush1.bf16.msra.mxu0 %v485
        %506 = vmatprep.subr.bf16.mxu0 0
        %507 = vmatpush1.bf16.msra.mxu0 %v484
        %508 = vmatprep.subr.bf16.mxu0 0
        %509 = vmatpush2.bf16.msra.mxu0 0
        %510 = vmatprep.subr.bf16.mxu0 0
        %511 = vmatpush2.bf16.msra.mxu0 0
        %512 = vmatprep.subr.bf16.mxu0 0
        %513 = vmatpush2.bf16.msra.mxu0 0
        %514 = vmatprep.subr.bf16.mxu0 0
        %515 = vmatpush2.bf16.msra.mxu0 0
        %516 = vmatprep.subr.bf16.mxu0 0
        %517 = vmatpush2.bf16.msra.mxu0 0
        %518 = vmatprep.subr.bf16.mxu0 0
        %519 = vmatpush2.bf16.msra.mxu0 0
        %520 = vmatprep.subr.bf16.mxu0 0
        %521 = vmatpush2.bf16.msra.mxu0 0
        %522 = vmatprep.subr.bf16.mxu0 0
        %523 = vmatpush2.bf16.msra.mxu0 0
        %524 = vmatprep.mubr.bf16.mxu0 0
        %525 = vmatmul.mubr.bf16.gmra.mxu0 %v490
        %v526 = vpop.f32.mrf.mxu0
        %v527 = vadd.f32 0.0, %v526
        %v528 = vpop.f32.mrf.mxu0
        %v529 = vpop.f32.mrf.mxu0
        %v530 = vpop.f32.mrf.mxu0
        %531 = vdwg.mxu0
        %v532 = vmul.f32 %v527, 0.17677669
        %v533 = vpack.c.bf16 %v532, %v532
        %v534 = vld [vmem:[#allocation2] sm:$0xf]
        %v535 = vld [vmem:[#allocation3] sm:$0xf]
        %vm536 = vcmask 31744
        %v538 = vsel %vm536, %v533, 0
        %v541 = vsel %vm536, %v534, 0
        %543 = vmatprep.subr.bf16.mxu0 0
        %544 = vmatpush1.bf16.xpose.msra.mxu0 0
        %545 = vmatprep.subr.bf16.mxu0 0
        %546 = vmatpush1.bf16.xpose.msra.mxu0 0
        %547 = vmatprep.subr.bf16.mxu0 0
        %548 = vmatpush1.bf16.xpose.msra.mxu0 0
        %549 = vmatprep.subr.bf16.mxu0 0
        %550 = vmatpush1.bf16.xpose.msra.mxu0 0
        %551 = vmatprep.subr.bf16.mxu0 0
        %552 = vmatpush1.bf16.xpose.msra.mxu0 0
        %553 = vmatprep.subr.bf16.mxu0 0
        %554 = vmatpush1.bf16.xpose.msra.mxu0 0
        %555 = vmatprep.subr.bf16.mxu0 0
        %556 = vmatpush1.bf16.xpose.msra.mxu0 0
        %557 = vmatprep.subr.bf16.mxu0 0
        %558 = vmatpush1.bf16.xpose.msra.mxu0 %v541
        %559 = vmatprep.subr.bf16.mxu0 0
        %560 = vmatpush2.bf16.xpose.msra.mxu0 0
        %561 = vmatprep.subr.bf16.mxu0 0
        %562 = vmatpush2.bf16.xpose.msra.mxu0 0
        %563 = vmatprep.subr.bf16.mxu0 0
        %564 = vmatpush2.bf16.xpose.msra.mxu0 0
        %565 = vmatprep.subr.bf16.mxu0 0
        %566 = vmatpush2.bf16.xpose.msra.mxu0 0
        %567 = vmatprep.subr.bf16.mxu0 0
        %568 = vmatpush2.bf16.xpose.msra.mxu0 0
        %569 = vmatprep.subr.bf16.mxu0 0
        %570 = vmatpush2.bf16.xpose.msra.mxu0 0
        %571 = vmatprep.subr.bf16.mxu0 0
        %572 = vmatpush2.bf16.xpose.msra.mxu0 0
        %573 = vmatprep.subr.bf16.mxu0 0
        %574 = vmatpush2.bf16.xpose.msra.mxu0 0
        %575 = vmatprep.mubr.bf16.mxu0 0
        %576 = vmatmul.mubr.bf16.gmra.mxu0 %v538
        %v577 = vpop.f32.mrf.mxu0
        %v578 = vadd.f32 0.0, %v577
        %v579 = vpop.f32.mrf.mxu0
        %v580 = vpop.f32.mrf.mxu0
        %v581 = vpop.f32.mrf.mxu0
        %582 = vdwg.mxu0
        %vm583 = vcmask 64512
        %v584 = vsel %vm583, %v578, -inf
        %585 = vmax.xlane.f32.xlu0 %v584
        %v586 = vpop.xlane.xlu0 %585
        %v587 = vsub.f32 %v578, %v586
        %v588 = vmul.f32 %v587, 1.442695
        %v589 = vpow.pop %v588
        %v590 = vsel %vm583, %v589, 0.0
        %591 = vadd.xlane.f32.xlu0 %v590
        %v592 = vpop.xlane.xlu0 %591
        %v593 = vrcp.pop %v592
        %v594 = vpack.c.bf16 %v589, %v589
        %v596 = vsel %vm583, %v594, 0
        %vm598 = vcmask 1043456
        %v600 = vsel %vm598, %v535, 0
        %602 = vmatprep.subr.bf16.mxu0 0
        %603 = vmatpush1.bf16.msra.mxu0 0
        %604 = vmatprep.subr.bf16.mxu0 0
        %605 = vmatpush1.bf16.msra.mxu0 0
        %606 = vmatprep.subr.bf16.mxu0 0
        %607 = vmatpush1.bf16.msra.mxu0 0
        %608 = vmatprep.subr.bf16.mxu0 0
        %609 = vmatpush1.bf16.msra.mxu0 0
        %610 = vmatprep.subr.bf16.mxu0 0
        %611 = vmatpush1.bf16.msra.mxu0 0
        %612 = vmatprep.subr.bf16.mxu0 0
        %613 = vmatpush1.bf16.msra.mxu0 0
        %614 = vmatprep.subr.bf16.mxu0 0
        %615 = vmatpush1.bf16.msra.mxu0 0
        %616 = vmatprep.subr.bf16.mxu0 0
        %617 = vmatpush1.bf16.msra.mxu0 %v600
        %618 = vmatprep.subr.bf16.mxu0 0
        %619 = vmatpush2.bf16.msra.mxu0 0
        %620 = vmatprep.subr.bf16.mxu0 0
        %621 = vmatpush2.bf16.msra.mxu0 0
        %622 = vmatprep.subr.bf16.mxu0 0
        %623 = vmatpush2.bf16.msra.mxu0 0
        %624 = vmatprep.subr.bf16.mxu0 0
        %625 = vmatpush2.bf16.msra.mxu0 0
        %626 = vmatprep.subr.bf16.mxu0 0
        %627 = vmatpush2.bf16.msra.mxu0 0
        %628 = vmatprep.subr.bf16.mxu0 0
        %629 = vmatpush2.bf16.msra.mxu0 0
        %630 = vmatprep.subr.bf16.mxu0 0
        %631 = vmatpush2.bf16.msra.mxu0 0
        %632 = vmatprep.subr.bf16.mxu0 0
        %633 = vmatpush2.bf16.msra.mxu0 0
        %634 = vmatprep.mubr.bf16.mxu0 0
        %635 = vmatmul.mubr.bf16.gmra.mxu0 %v596
        %v636 = vpop.f32.mrf.mxu0
        %v637 = vadd.f32 0.0, %v636
        %v638 = vpop.f32.mrf.mxu0
        %v639 = vpop.f32.mrf.mxu0
        %v640 = vpop.f32.mrf.mxu0
        %641 = vdwg.mxu0
        %v642 = vmul.f32 %v637, %v593
        %v643 = vpack.c.bf16 %v642, %v642
        %vm644 = vcmask 27648
        %645 = vst.msk [vmem:[#allocation4] sm:$0xf] %vm644, %v643
        %v646 = vld [vmem:[#allocation2] sm:$0xf]
        %v647 = vld [vmem:[#allocation3] sm:$0xf]
        %649 = vrot.lane.b32.xlu0 %v533, 124
        %v650 = vpop.permute.xlu0 %649
        %v652 = vunpack.c.l.b16 %v646
        %v653 = vpack.c.b16 %v652, %v652
        %654 = vrot.lane.b32.xlu0 %v653, 124
        %v655 = vpop.permute.xlu0 %654
        %v657 = vsel %vm536, %v650, 0
        %v660 = vsel %vm536, %v655, 0
        %662 = vmatprep.subr.bf16.mxu0 0
        %663 = vmatpush1.bf16.xpose.msra.mxu0 0
        %664 = vmatprep.subr.bf16.mxu0 0
        %665 = vmatpush1.bf16.xpose.msra.mxu0 0
        %666 = vmatprep.subr.bf16.mxu0 0
        %667 = vmatpush1.bf16.xpose.msra.mxu0 0
        %668 = vmatprep.subr.bf16.mxu0 0
        %669 = vmatpush1.bf16.xpose.msra.mxu0 0
        %670 = vmatprep.subr.bf16.mxu0 0
        %671 = vmatpush1.bf16.xpose.msra.mxu0 0
        %672 = vmatprep.subr.bf16.mxu0 0
        %673 = vmatpush1.bf16.xpose.msra.mxu0 0
        %674 = vmatprep.subr.bf16.mxu0 0
        %675 = vmatpush1.bf16.xpose.msra.mxu0 0
        %676 = vmatprep.subr.bf16.mxu0 0
        %677 = vmatpush1.bf16.xpose.msra.mxu0 %v660
        %678 = vmatprep.subr.bf16.mxu0 0
        %679 = vmatpush2.bf16.xpose.msra.mxu0 0
        %680 = vmatprep.subr.bf16.mxu0 0
        %681 = vmatpush2.bf16.xpose.msra.mxu0 0
        %682 = vmatprep.subr.bf16.mxu0 0
        %683 = vmatpush2.bf16.xpose.msra.mxu0 0
        %684 = vmatprep.subr.bf16.mxu0 0
        %685 = vmatpush2.bf16.xpose.msra.mxu0 0
        %686 = vmatprep.subr.bf16.mxu0 0
        %687 = vmatpush2.bf16.xpose.msra.mxu0 0
        %688 = vmatprep.subr.bf16.mxu0 0
        %689 = vmatpush2.bf16.xpose.msra.mxu0 0
        %690 = vmatprep.subr.bf16.mxu0 0
        %691 = vmatpush2.bf16.xpose.msra.mxu0 0
        %692 = vmatprep.subr.bf16.mxu0 0
        %693 = vmatpush2.bf16.xpose.msra.mxu0 0
        %694 = vmatprep.mubr.bf16.mxu0 0
        %695 = vmatmul.mubr.bf16.gmra.mxu0 %v657
        %v696 = vpop.f32.mrf.mxu0
        %v697 = vadd.f32 0.0, %v696
        %v698 = vpop.f32.mrf.mxu0
        %v699 = vpop.f32.mrf.mxu0
        %v700 = vpop.f32.mrf.mxu0
        %701 = vdwg.mxu0
        %v702 = vsel %vm583, %v697, -inf
        %703 = vmax.xlane.f32.xlu0 %v702
        %v704 = vpop.xlane.xlu0 %703
        %v705 = vsub.f32 %v697, %v704
        %v706 = vmul.f32 %v705, 1.442695
        %v707 = vpow.pop %v706
        %v708 = vsel %vm583, %v707, 0.0
        %709 = vadd.xlane.f32.xlu0 %v708
        %v710 = vpop.xlane.xlu0 %709
        %v711 = vrcp.pop %v710
        %v712 = vpack.c.bf16 %v707, %v707
        %v714 = vunpack.c.l.b16 %v647
        %v715 = vpack.c.b16 %v714, %v714
        %716 = vrot.lane.b32.xlu0 %v715, 124
        %v717 = vpop.permute.xlu0 %716
        %v719 = vsel %vm583, %v712, 0
        %v722 = vsel %vm598, %v717, 0
        %724 = vmatprep.subr.bf16.mxu0 0
        %725 = vmatpush1.bf16.msra.mxu0 0
        %726 = vmatprep.subr.bf16.mxu0 0
        %727 = vmatpush1.bf16.msra.mxu0 0
        %728 = vmatprep.subr.bf16.mxu0 0
        %729 = vmatpush1.bf16.msra.mxu0 0
        %730 = vmatprep.subr.bf16.mxu0 0
        %731 = vmatpush1.bf16.msra.mxu0 0
        %732 = vmatprep.subr.bf16.mxu0 0
        %733 = vmatpush1.bf16.msra.mxu0 0
        %734 = vmatprep.subr.bf16.mxu0 0
        %735 = vmatpush1.bf16.msra.mxu0 0
        %736 = vmatprep.subr.bf16.mxu0 0
        %737 = vmatpush1.bf16.msra.mxu0 0
        %738 = vmatprep.subr.bf16.mxu0 0
        %739 = vmatpush1.bf16.msra.mxu0 %v722
        %740 = vmatprep.subr.bf16.mxu0 0
        %741 = vmatpush2.bf16.msra.mxu0 0
        %742 = vmatprep.subr.bf16.mxu0 0
        %743 = vmatpush2.bf16.msra.mxu0 0
        %744 = vmatprep.subr.bf16.mxu0 0
        %745 = vmatpush2.bf16.msra.mxu0 0
        %746 = vmatprep.subr.bf16.mxu0 0
        %747 = vmatpush2.bf16.msra.mxu0 0
        %748 = vmatprep.subr.bf16.mxu0 0
        %749 = vmatpush2.bf16.msra.mxu0 0
        %750 = vmatprep.subr.bf16.mxu0 0
        %751 = vmatpush2.bf16.msra.mxu0 0
        %752 = vmatprep.subr.bf16.mxu0 0
        %753 = vmatpush2.bf16.msra.mxu0 0
        %754 = vmatprep.subr.bf16.mxu0 0
        %755 = vmatpush2.bf16.msra.mxu0 0
        %756 = vmatprep.mubr.bf16.mxu0 0
        %757 = vmatmul.mubr.bf16.gmra.mxu0 %v719
        %v758 = vpop.f32.mrf.mxu0
        %v759 = vadd.f32 0.0, %v758
        %v760 = vpop.f32.mrf.mxu0
        %v761 = vpop.f32.mrf.mxu0
        %v762 = vpop.f32.mrf.mxu0
        %763 = vdwg.mxu0
        %v764 = vmul.f32 %v759, %v711
        %v765 = vpack.c.bf16 %v764, %v764
        %v767 = vunpack.c.l.b16 %v765
        %v768 = vpack.c.b16 %v767, %v767
        %769 = vrot.lane.b32.xlu0 %v768, 4
        %v770 = vpop.permute.xlu0 %769
        %vm772 = vcmask 60448
        %773 = vst.msk [vmem:[#allocation4] sm:$0xf] %vm772, %v770
        %v774 = vld [vmem:[#allocation2] sm:$0xf]
        %v775 = vld [vmem:[#allocation3] sm:$0xf]
        %776 = vrot.lane.b32.xlu0 %v533, 120
        %v777 = vpop.permute.xlu0 %776
        %v779 = vunpack.c.l.b16 %v774
        %v780 = vpack.c.b16 %v779, %v779
        %781 = vrot.lane.b32.xlu0 %v780, 120
        %v782 = vpop.permute.xlu0 %781
        %v784 = vsel %vm536, %v777, 0
        %v787 = vsel %vm536, %v782, 0
        %789 = vmatprep.subr.bf16.mxu0 0
        %790 = vmatpush1.bf16.xpose.msra.mxu0 0
        %791 = vmatprep.subr.bf16.mxu0 0
        %792 = vmatpush1.bf16.xpose.msra.mxu0 0
        %793 = vmatprep.subr.bf16.mxu0 0
        %794 = vmatpush1.bf16.xpose.msra.mxu0 0
        %795 = vmatprep.subr.bf16.mxu0 0
        %796 = vmatpush1.bf16.xpose.msra.mxu0 0
        %797 = vmatprep.subr.bf16.mxu0 0
        %798 = vmatpush1.bf16.xpose.msra.mxu0 0
        %799 = vmatprep.subr.bf16.mxu0 0
        %800 = vmatpush1.bf16.xpose.msra.mxu0 0
        %801 = vmatprep.subr.bf16.mxu0 0
        %802 = vmatpush1.bf16.xpose.msra.mxu0 0
        %803 = vmatprep.subr.bf16.mxu0 0
        %804 = vmatpush1.bf16.xpose.msra.mxu0 %v787
        %805 = vmatprep.subr.bf16.mxu0 0
        %806 = vmatpush2.bf16.xpose.msra.mxu0 0
        %807 = vmatprep.subr.bf16.mxu0 0
        %808 = vmatpush2.bf16.xpose.msra.mxu0 0
        %809 = vmatprep.subr.bf16.mxu0 0
        %810 = vmatpush2.bf16.xpose.msra.mxu0 0
        %811 = vmatprep.subr.bf16.mxu0 0
        %812 = vmatpush2.bf16.xpose.msra.mxu0 0
        %813 = vmatprep.subr.bf16.mxu0 0
        %814 = vmatpush2.bf16.xpose.msra.mxu0 0
        %815 = vmatprep.subr.bf16.mxu0 0
        %816 = vmatpush2.bf16.xpose.msra.mxu0 0
        %817 = vmatprep.subr.bf16.mxu0 0
        %818 = vmatpush2.bf16.xpose.msra.mxu0 0
        %819 = vmatprep.subr.bf16.mxu0 0
        %820 = vmatpush2.bf16.xpose.msra.mxu0 0
        %821 = vmatprep.mubr.bf16.mxu0 0
        %822 = vmatmul.mubr.bf16.gmra.mxu0 %v784
        %v823 = vpop.f32.mrf.mxu0
        %v824 = vadd.f32 0.0, %v823
        %v825 = vpop.f32.mrf.mxu0
        %v826 = vpop.f32.mrf.mxu0
        %v827 = vpop.f32.mrf.mxu0
        %828 = vdwg.mxu0
        %v829 = vsel %vm583, %v824, -inf
        %830 = vmax.xlane.f32.xlu0 %v829
        %v831 = vpop.xlane.xlu0 %830
        %v832 = vsub.f32 %v824, %v831
        %v833 = vmul.f32 %v832, 1.442695
        %v834 = vpow.pop %v833
        %v835 = vsel %vm583, %v834, 0.0
        %836 = vadd.xlane.f32.xlu0 %v835
        %v837 = vpop.xlane.xlu0 %836
        %v838 = vrcp.pop %v837
        %v839 = vpack.c.bf16 %v834, %v834
        %v841 = vunpack.c.l.b16 %v775
        %v842 = vpack.c.b16 %v841, %v841
        %843 = vrot.lane.b32.xlu0 %v842, 120
        %v844 = vpop.permute.xlu0 %843
        %v846 = vsel %vm583, %v839, 0
        %v849 = vsel %vm598, %v844, 0
        %851 = vmatprep.subr.bf16.mxu0 0
        %852 = vmatpush1.bf16.msra.mxu0 0
        %853 = vmatprep.subr.bf16.mxu0 0
        %854 = vmatpush1.bf16.msra.mxu0 0
        %855 = vmatprep.subr.bf16.mxu0 0
        %856 = vmatpush1.bf16.msra.mxu0 0
        %857 = vmatprep.subr.bf16.mxu0 0
        %858 = vmatpush1.bf16.msra.mxu0 0
        %859 = vmatprep.subr.bf16.mxu0 0
        %860 = vmatpush1.bf16.msra.mxu0 0
        %861 = vmatprep.subr.bf16.mxu0 0
        %862 = vmatpush1.bf16.msra.mxu0 0
        %863 = vmatprep.subr.bf16.mxu0 0
        %864 = vmatpush1.bf16.msra.mxu0 0
        %865 = vmatprep.subr.bf16.mxu0 0
        %866 = vmatpush1.bf16.msra.mxu0 %v849
        %867 = vmatprep.subr.bf16.mxu0 0
        %868 = vmatpush2.bf16.msra.mxu0 0
        %869 = vmatprep.subr.bf16.mxu0 0
        %870 = vmatpush2.bf16.msra.mxu0 0
        %871 = vmatprep.subr.bf16.mxu0 0
        %872 = vmatpush2.bf16.msra.mxu0 0
        %873 = vmatprep.subr.bf16.mxu0 0
        %874 = vmatpush2.bf16.msra.mxu0 0
        %875 = vmatprep.subr.bf16.mxu0 0
        %876 = vmatpush2.bf16.msra.mxu0 0
        %877 = vmatprep.subr.bf16.mxu0 0
        %878 = vmatpush2.bf16.msra.mxu0 0
        %879 = vmatprep.subr.bf16.mxu0 0
        %880 = vmatpush2.bf16.msra.mxu0 0
        %881 = vmatprep.subr.bf16.mxu0 0
        %882 = vmatpush2.bf16.msra.mxu0 0
        %883 = vmatprep.mubr.bf16.mxu0 0
        %884 = vmatmul.mubr.bf16.gmra.mxu0 %v846
        %v885 = vpop.f32.mrf.mxu0
        %v886 = vadd.f32 0.0, %v885
        %v887 = vpop.f32.mrf.mxu0
        %v888 = vpop.f32.mrf.mxu0
        %v889 = vpop.f32.mrf.mxu0
        %890 = vdwg.mxu0
        %v891 = vmul.f32 %v886, %v838
        %v892 = vpack.c.bf16 %v891, %v891
        %v894 = vunpack.c.l.b16 %v892
        %v895 = vpack.c.b16 %v894, %v894
        %896 = vrot.lane.b32.xlu0 %v895, 8
        %v897 = vpop.permute.xlu0 %896
        %vm899 = vcmask 93248
        %900 = vst.msk [vmem:[#allocation4] sm:$0xf] %vm899, %v897
        %v901 = vld [vmem:[#allocation2] sm:$0xf]
        %v902 = vld [vmem:[#allocation3] sm:$0xf]
        %903 = vrot.lane.b32.xlu0 %v533, 116
        %v904 = vpop.permute.xlu0 %903
        %v906 = vunpack.c.l.b16 %v901
        %v907 = vpack.c.b16 %v906, %v906
        %908 = vrot.lane.b32.xlu0 %v907, 116
        %v909 = vpop.permute.xlu0 %908
        %v911 = vsel %vm536, %v904, 0
        %v914 = vsel %vm536, %v909, 0
        %916 = vmatprep.subr.bf16.mxu0 0
        %917 = vmatpush1.bf16.xpose.msra.mxu0 0
        %918 = vmatprep.subr.bf16.mxu0 0
        %919 = vmatpush1.bf16.xpose.msra.mxu0 0
        %920 = vmatprep.subr.bf16.mxu0 0
        %921 = vmatpush1.bf16.xpose.msra.mxu0 0
        %922 = vmatprep.subr.bf16.mxu0 0
        %923 = vmatpush1.bf16.xpose.msra.mxu0 0
        %924 = vmatprep.subr.bf16.mxu0 0
        %925 = vmatpush1.bf16.xpose.msra.mxu0 0
        %926 = vmatprep.subr.bf16.mxu0 0
        %927 = vmatpush1.bf16.xpose.msra.mxu0 0
        %928 = vmatprep.subr.bf16.mxu0 0
        %929 = vmatpush1.bf16.xpose.msra.mxu0 0
        %930 = vmatprep.subr.bf16.mxu0 0
        %931 = vmatpush1.bf16.xpose.msra.mxu0 %v914
        %932 = vmatprep.subr.bf16.mxu0 0
        %933 = vmatpush2.bf16.xpose.msra.mxu0 0
        %934 = vmatprep.subr.bf16.mxu0 0
        %935 = vmatpush2.bf16.xpose.msra.mxu0 0
        %936 = vmatprep.subr.bf16.mxu0 0
        %937 = vmatpush2.bf16.xpose.msra.mxu0 0
        %938 = vmatprep.subr.bf16.mxu0 0
        %939 = vmatpush2.bf16.xpose.msra.mxu0 0
        %940 = vmatprep.subr.bf16.mxu0 0
        %941 = vmatpush2.bf16.xpose.msra.mxu0 0
        %942 = vmatprep.subr.bf16.mxu0 0
        %943 = vmatpush2.bf16.xpose.msra.mxu0 0
        %944 = vmatprep.subr.bf16.mxu0 0
        %945 = vmatpush2.bf16.xpose.msra.mxu0 0
        %946 = vmatprep.subr.bf16.mxu0 0
        %947 = vmatpush2.bf16.xpose.msra.mxu0 0
        %948 = vmatprep.mubr.bf16.mxu0 0
        %949 = vmatmul.mubr.bf16.gmra.mxu0 %v911
        %v950 = vpop.f32.mrf.mxu0
        %v951 = vadd.f32 0.0, %v950
        %v952 = vpop.f32.mrf.mxu0
        %v953 = vpop.f32.mrf.mxu0
        %v954 = vpop.f32.mrf.mxu0
        %955 = vdwg.mxu0
        %v956 = vsel %vm583, %v951, -inf
        %957 = vmax.xlane.f32.xlu0 %v956
        %v958 = vpop.xlane.xlu0 %957
        %v959 = vsub.f32 %v951, %v958
        %v960 = vmul.f32 %v959, 1.442695
        %v961 = vpow.pop %v960
        %v962 = vsel %vm583, %v961, 0.0
        %963 = vadd.xlane.f32.xlu0 %v962
        %v964 = vpop.xlane.xlu0 %963
        %v965 = vrcp.pop %v964
        %v966 = vpack.c.bf16 %v961, %v961
        %v968 = vunpack.c.l.b16 %v902
        %v969 = vpack.c.b16 %v968, %v968
        %970 = vrot.lane.b32.xlu0 %v969, 116
        %v971 = vpop.permute.xlu0 %970
        %v973 = vsel %vm583, %v966, 0
        %v976 = vsel %vm598, %v971, 0
        %978 = vmatprep.subr.bf16.mxu0 0
        %979 = vmatpush1.bf16.msra.mxu0 0
        %980 = vmatprep.subr.bf16.mxu0 0
        %981 = vmatpush1.bf16.msra.mxu0 0
        %982 = vmatprep.subr.bf16.mxu0 0
        %983 = vmatpush1.bf16.msra.mxu0 0
        %984 = vmatprep.subr.bf16.mxu0 0
        %985 = vmatpush1.bf16.msra.mxu0 0
        %986 = vmatprep.subr.bf16.mxu0 0
        %987 = vmatpush1.bf16.msra.mxu0 0
        %988 = vmatprep.subr.bf16.mxu0 0
        %989 = vmatpush1.bf16.msra.mxu0 0
        %990 = vmatprep.subr.bf16.mxu0 0
        %991 = vmatpush1.bf16.msra.mxu0 0
        %992 = vmatprep.subr.bf16.mxu0 0
        %993 = vmatpush1.bf16.msra.mxu0 %v976
        %994 = vmatprep.subr.bf16.mxu0 0
        %995 = vmatpush2.bf16.msra.mxu0 0
        %996 = vmatprep.subr.bf16.mxu0 0
        %997 = vmatpush2.bf16.msra.mxu0 0
        %998 = vmatprep.subr.bf16.mxu0 0
        %999 = vmatpush2.bf16.msra.mxu0 0
        %1000 = vmatprep.subr.bf16.mxu0 0
        %1001 = vmatpush2.bf16.msra.mxu0 0
        %1002 = vmatprep.subr.bf16.mxu0 0
        %1003 = vmatpush2.bf16.msra.mxu0 0
        %1004 = vmatprep.subr.bf16.mxu0 0
        %1005 = vmatpush2.bf16.msra.mxu0 0
        %1006 = vmatprep.subr.bf16.mxu0 0
        %1007 = vmatpush2.bf16.msra.mxu0 0
        %1008 = vmatprep.subr.bf16.mxu0 0
        %1009 = vmatpush2.bf16.msra.mxu0 0
        %1010 = vmatprep.mubr.bf16.mxu0 0
        %1011 = vmatmul.mubr.bf16.gmra.mxu0 %v973
        %v1012 = vpop.f32.mrf.mxu0
        %v1013 = vadd.f32 0.0, %v1012
        %v1014 = vpop.f32.mrf.mxu0
        %v1015 = vpop.f32.mrf.mxu0
        %v1016 = vpop.f32.mrf.mxu0
        %1017 = vdwg.mxu0
        %v1018 = vmul.f32 %v1013, %v965
        %v1019 = vpack.c.bf16 %v1018, %v1018
        %v1021 = vunpack.c.l.b16 %v1019
        %v1022 = vpack.c.b16 %v1021, %v1021
        %1023 = vrot.lane.b32.xlu0 %v1022, 12
        %v1024 = vpop.permute.xlu0 %1023
        %vm1026 = vcmask 126048
        %1027 = vst.msk [vmem:[#allocation4] sm:$0xf] %vm1026, %v1024
        %v1028 = vld [vmem:[#allocation2] sm:$0xf]
        %v1029 = vld [vmem:[#allocation3] sm:$0xf]
        %1030 = vrot.lane.b32.xlu0 %v533, 112
        %v1031 = vpop.permute.xlu0 %1030
        %v1033 = vunpack.c.l.b16 %v1028
        %v1034 = vpack.c.b16 %v1033, %v1033
        %1035 = vrot.lane.b32.xlu0 %v1034, 112
        %v1036 = vpop.permute.xlu0 %1035
        %v1038 = vsel %vm536, %v1031, 0
        %v1041 = vsel %vm536, %v1036, 0
        %1043 = vmatprep.subr.bf16.mxu0 0
        %1044 = vmatpush1.bf16.xpose.msra.mxu0 0
        %1045 = vmatprep.subr.bf16.mxu0 0
        %1046 = vmatpush1.bf16.xpose.msra.mxu0 0
        %1047 = vmatprep.subr.bf16.mxu0 0
        %1048 = vmatpush1.bf16.xpose.msra.mxu0 0
        %1049 = vmatprep.subr.bf16.mxu0 0
        %1050 = vmatpush1.bf16.xpose.msra.mxu0 0
        %1051 = vmatprep.subr.bf16.mxu0 0
        %1052 = vmatpush1.bf16.xpose.msra.mxu0 0
        %1053 = vmatprep.subr.bf16.mxu0 0
        %1054 = vmatpush1.bf16.xpose.msra.mxu0 0
        %1055 = vmatprep.subr.bf16.mxu0 0
        %1056 = vmatpush1.bf16.xpose.msra.mxu0 0
        %1057 = vmatprep.subr.bf16.mxu0 0
        %1058 = vmatpush1.bf16.xpose.msra.mxu0 %v1041
        %1059 = vmatprep.subr.bf16.mxu0 0
        %1060 = vmatpush2.bf16.xpose.msra.mxu0 0
        %1061 = vmatprep.subr.bf16.mxu0 0
        %1062 = vmatpush2.bf16.xpose.msra.mxu0 0
        %1063 = vmatprep.subr.bf16.mxu0 0
        %1064 = vmatpush2.bf16.xpose.msra.mxu0 0
        %1065 = vmatprep.subr.bf16.mxu0 0
        %1066 = vmatpush2.bf16.xpose.msra.mxu0 0
        %1067 = vmatprep.subr.bf16.mxu0 0
        %1068 = vmatpush2.bf16.xpose.msra.mxu0 0
        %1069 = vmatprep.subr.bf16.mxu0 0
        %1070 = vmatpush2.bf16.xpose.msra.mxu0 0
        %1071 = vmatprep.subr.bf16.mxu0 0
        %1072 = vmatpush2.bf16.xpose.msra.mxu0 0
        %1073 = vmatprep.subr.bf16.mxu0 0
        %1074 = vmatpush2.bf16.xpose.msra.mxu0 0
        %1075 = vmatprep.mubr.bf16.mxu0 0
        %1076 = vmatmul.mubr.bf16.gmra.mxu0 %v1038
        %v1077 = vpop.f32.mrf.mxu0
        %v1078 = vadd.f32 0.0, %v1077
        %v1079 = vpop.f32.mrf.mxu0
        %v1080 = vpop.f32.mrf.mxu0
        %v1081 = vpop.f32.mrf.mxu0
        %1082 = vdwg.mxu0
        %v1083 = vsel %vm583, %v1078, -inf
        %1084 = vmax.xlane.f32.xlu0 %v1083
        %v1085 = vpop.xlane.xlu0 %1084
        %v1086 = vsub.f32 %v1078, %v1085
        %v1087 = vmul.f32 %v1086, 1.442695
        %v1088 = vpow.pop %v1087
        %v1089 = vsel %vm583, %v1088, 0.0
        %1090 = vadd.xlane.f32.xlu0 %v1089
        %v1091 = vpop.xlane.xlu0 %1090
        %v1092 = vrcp.pop %v1091
        %v1093 = vpack.c.bf16 %v1088, %v1088
        %v1095 = vunpack.c.l.b16 %v1029
        %v1096 = vpack.c.b16 %v1095, %v1095
        %1097 = vrot.lane.b32.xlu0 %v1096, 112
        %v1098 = vpop.permute.xlu0 %1097
        %v1100 = vsel %vm583, %v1093, 0
        %v1103 = vsel %vm598, %v1098, 0
        %1105 = vmatprep.subr.bf16.mxu0 0
        %1106 = vmatpush1.bf16.msra.mxu0 0
        %1107 = vmatprep.subr.bf16.mxu0 0
        %1108 = vmatpush1.bf16.msra.mxu0 0
        %1109 = vmatprep.subr.bf16.mxu0 0
        %1110 = vmatpush1.bf16.msra.mxu0 0
        %1111 = vmatprep.subr.bf16.mxu0 0
        %1112 = vmatpush1.bf16.msra.mxu0 0
        %1113 = vmatprep.subr.bf16.mxu0 0
        %1114 = vmatpush1.bf16.msra.mxu0 0
        %1115 = vmatprep.subr.bf16.mxu0 0
        %1116 = vmatpush1.bf16.msra.mxu0 0
        %1117 = vmatprep.subr.bf16.mxu0 0
        %1118 = vmatpush1.bf16.msra.mxu0 0
        %1119 = vmatprep.subr.bf16.mxu0 0
        %1120 = vmatpush1.bf16.msra.mxu0 %v1103
        %1121 = vmatprep.subr.bf16.mxu0 0
        %1122 = vmatpush2.bf16.msra.mxu0 0
        %1123 = vmatprep.subr.bf16.mxu0 0
        %1124 = vmatpush2.bf16.msra.mxu0 0
        %1125 = vmatprep.subr.bf16.mxu0 0
        %1126 = vmatpush2.bf16.msra.mxu0 0
        %1127 = vmatprep.subr.bf16.mxu0 0
        %1128 = vmatpush2.bf16.msra.mxu0 0
        %1129 = vmatprep.subr.bf16.mxu0 0
        %1130 = vmatpush2.bf16.msra.mxu0 0
        %1131 = vmatprep.subr.bf16.mxu0 0
        %1132 = vmatpush2.bf16.msra.mxu0 0
        %1133 = vmatprep.subr.bf16.mxu0 0
        %1134 = vmatpush2.bf16.msra.mxu0 0
        %1135 = vmatprep.subr.bf16.mxu0 0
        %1136 = vmatpush2.bf16.msra.mxu0 0
        %1137 = vmatprep.mubr.bf16.mxu0 0
        %1138 = vmatmul.mubr.bf16.gmra.mxu0 %v1100
        %v1139 = vpop.f32.mrf.mxu0
        %v1140 = vadd.f32 0.0, %v1139
        %v1141 = vpop.f32.mrf.mxu0
        %v1142 = vpop.f32.mrf.mxu0
        %v1143 = vpop.f32.mrf.mxu0
        %1144 = vdwg.mxu0
        %v1145 = vmul.f32 %v1140, %v1092
        %v1146 = vpack.c.bf16 %v1145, %v1145
        %v1148 = vunpack.c.l.b16 %v1146
        %v1149 = vpack.c.b16 %v1148, %v1148
        %1150 = vrot.lane.b32.xlu0 %v1149, 16
        %v1151 = vpop.permute.xlu0 %1150
        %vm1153 = vcmask 158848
        %1154 = vst.msk [vmem:[#allocation4] sm:$0xf] %vm1153, %v1151
        %v1155 = vld [vmem:[#allocation2] sm:$0xf]
        %v1156 = vld [vmem:[#allocation3] sm:$0xf]
        %1157 = vrot.lane.b32.xlu0 %v533, 108
        %v1158 = vpop.permute.xlu0 %1157
        %v1160 = vunpack.c.l.b16 %v1155
        %v1161 = vpack.c.b16 %v1160, %v1160
        %1162 = vrot.lane.b32.xlu0 %v1161, 108
        %v1163 = vpop.permute.xlu0 %1162
        %v1165 = vsel %vm536, %v1158, 0
        %v1168 = vsel %vm536, %v1163, 0
        %1170 = vmatprep.subr.bf16.mxu0 0
        %1171 = vmatpush1.bf16.xpose.msra.mxu0 0
        %1172 = vmatprep.subr.bf16.mxu0 0
        %1173 = vmatpush1.bf16.xpose.msra.mxu0 0
        %1174 = vmatprep.subr.bf16.mxu0 0
        %1175 = vmatpush1.bf16.xpose.msra.mxu0 0
        %1176 = vmatprep.subr.bf16.mxu0 0
        %1177 = vmatpush1.bf16.xpose.msra.mxu0 0
        %1178 = vmatprep.subr.bf16.mxu0 0
        %1179 = vmatpush1.bf16.xpose.msra.mxu0 0
        %1180 = vmatprep.subr.bf16.mxu0 0
        %1181 = vmatpush1.bf16.xpose.msra.mxu0 0
        %1182 = vmatprep.subr.bf16.mxu0 0
        %1183 = vmatpush1.bf16.xpose.msra.mxu0 0
        %1184 = vmatprep.subr.bf16.mxu0 0
        %1185 = vmatpush1.bf16.xpose.msra.mxu0 %v1168
        %1186 = vmatprep.subr.bf16.mxu0 0
        %1187 = vmatpush2.bf16.xpose.msra.mxu0 0
        %1188 = vmatprep.subr.bf16.mxu0 0
        %1189 = vmatpush2.bf16.xpose.msra.mxu0 0
        %1190 = vmatprep.subr.bf16.mxu0 0
        %1191 = vmatpush2.bf16.xpose.msra.mxu0 0
        %1192 = vmatprep.subr.bf16.mxu0 0
        %1193 = vmatpush2.bf16.xpose.msra.mxu0 0
        %1194 = vmatprep.subr.bf16.mxu0 0
        %1195 = vmatpush2.bf16.xpose.msra.mxu0 0
        %1196 = vmatprep.subr.bf16.mxu0 0
        %1197 = vmatpush2.bf16.xpose.msra.mxu0 0
        %1198 = vmatprep.subr.bf16.mxu0 0
        %1199 = vmatpush2.bf16.xpose.msra.mxu0 0
        %1200 = vmatprep.subr.bf16.mxu0 0
        %1201 = vmatpush2.bf16.xpose.msra.mxu0 0
        %1202 = vmatprep.mubr.bf16.mxu0 0
        %1203 = vmatmul.mubr.bf16.gmra.mxu0 %v1165
        %v1204 = vpop.f32.mrf.mxu0
        %v1205 = vadd.f32 0.0, %v1204
        %v1206 = vpop.f32.mrf.mxu0
        %v1207 = vpop.f32.mrf.mxu0
        %v1208 = vpop.f32.mrf.mxu0
        %1209 = vdwg.mxu0
        %v1210 = vsel %vm583, %v1205, -inf
        %1211 = vmax.xlane.f32.xlu0 %v1210
        %v1212 = vpop.xlane.xlu0 %1211
        %v1213 = vsub.f32 %v1205, %v1212
        %v1214 = vmul.f32 %v1213, 1.442695
        %v1215 = vpow.pop %v1214
        %v1216 = vsel %vm583, %v1215, 0.0
        %1217 = vadd.xlane.f32.xlu0 %v1216
        %v1218 = vpop.xlane.xlu0 %1217
        %v1219 = vrcp.pop %v1218
        %v1220 = vpack.c.bf16 %v1215, %v1215
        %v1222 = vunpack.c.l.b16 %v1156
        %v1223 = vpack.c.b16 %v1222, %v1222
        %1224 = vrot.lane.b32.xlu0 %v1223, 108
        %v1225 = vpop.permute.xlu0 %1224
        %v1227 = vsel %vm583, %v1220, 0
        %v1230 = vsel %vm598, %v1225, 0
        %1232 = vmatprep.subr.bf16.mxu0 0
        %1233 = vmatpush1.bf16.msra.mxu0 0
        %1234 = vmatprep.subr.bf16.mxu0 0
        %1235 = vmatpush1.bf16.msra.mxu0 0
        %1236 = vmatprep.subr.bf16.mxu0 0
        %1237 = vmatpush1.bf16.msra.mxu0 0
        %1238 = vmatprep.subr.bf16.mxu0 0
        %1239 = vmatpush1.bf16.msra.mxu0 0
        %1240 = vmatprep.subr.bf16.mxu0 0
        %1241 = vmatpush1.bf16.msra.mxu0 0
        %1242 = vmatprep.subr.bf16.mxu0 0
        %1243 = vmatpush1.bf16.msra.mxu0 0
        %1244 = vmatprep.subr.bf16.mxu0 0
        %1245 = vmatpush1.bf16.msra.mxu0 0
        %1246 = vmatprep.subr.bf16.mxu0 0
        %1247 = vmatpush1.bf16.msra.mxu0 %v1230
        %1248 = vmatprep.subr.bf16.mxu0 0
        %1249 = vmatpush2.bf16.msra.mxu0 0
        %1250 = vmatprep.subr.bf16.mxu0 0
        %1251 = vmatpush2.bf16.msra.mxu0 0
        %1252 = vmatprep.subr.bf16.mxu0 0
        %1253 = vmatpush2.bf16.msra.mxu0 0
        %1254 = vmatprep.subr.bf16.mxu0 0
        %1255 = vmatpush2.bf16.msra.mxu0 0
        %1256 = vmatprep.subr.bf16.mxu0 0
        %1257 = vmatpush2.bf16.msra.mxu0 0
        %1258 = vmatprep.subr.bf16.mxu0 0
        %1259 = vmatpush2.bf16.msra.mxu0 0
        %1260 = vmatprep.subr.bf16.mxu0 0
        %1261 = vmatpush2.bf16.msra.mxu0 0
        %1262 = vmatprep.subr.bf16.mxu0 0
        %1263 = vmatpush2.bf16.msra.mxu0 0
        %1264 = vmatprep.mubr.bf16.mxu0 0
        %1265 = vmatmul.mubr.bf16.gmra.mxu0 %v1227
        %v1266 = vpop.f32.mrf.mxu0
        %v1267 = vadd.f32 0.0, %v1266
        %v1268 = vpop.f32.mrf.mxu0
        %v1269 = vpop.f32.mrf.mxu0
        %v1270 = vpop.f32.mrf.mxu0
        %1271 = vdwg.mxu0
        %v1272 = vmul.f32 %v1267, %v1219
        %v1273 = vpack.c.bf16 %v1272, %v1272
        %v1275 = vunpack.c.l.b16 %v1273
        %v1276 = vpack.c.b16 %v1275, %v1275
        %1277 = vrot.lane.b32.xlu0 %v1276, 20
        %v1278 = vpop.permute.xlu0 %1277
        %vm1280 = vcmask 191648
        %1281 = vst.msk [vmem:[#allocation4] sm:$0xf] %vm1280, %v1278
        %v1282 = vld [vmem:[#allocation2] sm:$0xf]
        %v1283 = vld [vmem:[#allocation3] sm:$0xf]
        %1284 = vrot.lane.b32.xlu0 %v533, 104
        %v1285 = vpop.permute.xlu0 %1284
        %v1287 = vunpack.c.l.b16 %v1282
        %v1288 = vpack.c.b16 %v1287, %v1287
        %1289 = vrot.lane.b32.xlu0 %v1288, 104
        %v1290 = vpop.permute.xlu0 %1289
        %v1292 = vsel %vm536, %v1285, 0
        %v1295 = vsel %vm536, %v1290, 0
        %1297 = vmatprep.subr.bf16.mxu0 0
        %1298 = vmatpush1.bf16.xpose.msra.mxu0 0
        %1299 = vmatprep.subr.bf16.mxu0 0
        %1300 = vmatpush1.bf16.xpose.msra.mxu0 0
        %1301 = vmatprep.subr.bf16.mxu0 0
        %1302 = vmatpush1.bf16.xpose.msra.mxu0 0
        %1303 = vmatprep.subr.bf16.mxu0 0
        %1304 = vmatpush1.bf16.xpose.msra.mxu0 0
        %1305 = vmatprep.subr.bf16.mxu0 0
        %1306 = vmatpush1.bf16.xpose.msra.mxu0 0
        %1307 = vmatprep.subr.bf16.mxu0 0
        %1308 = vmatpush1.bf16.xpose.msra.mxu0 0
        %1309 = vmatprep.subr.bf16.mxu0 0
        %1310 = vmatpush1.bf16.xpose.msra.mxu0 0
        %1311 = vmatprep.subr.bf16.mxu0 0
        %1312 = vmatpush1.bf16.xpose.msra.mxu0 %v1295
        %1313 = vmatprep.subr.bf16.mxu0 0
        %1314 = vmatpush2.bf16.xpose.msra.mxu0 0
        %1315 = vmatprep.subr.bf16.mxu0 0
        %1316 = vmatpush2.bf16.xpose.msra.mxu0 0
        %1317 = vmatprep.subr.bf16.mxu0 0
        %1318 = vmatpush2.bf16.xpose.msra.mxu0 0
        %1319 = vmatprep.subr.bf16.mxu0 0
        %1320 = vmatpush2.bf16.xpose.msra.mxu0 0
        %1321 = vmatprep.subr.bf16.mxu0 0
        %1322 = vmatpush2.bf16.xpose.msra.mxu0 0
        %1323 = vmatprep.subr.bf16.mxu0 0
        %1324 = vmatpush2.bf16.xpose.msra.mxu0 0
        %1325 = vmatprep.subr.bf16.mxu0 0
        %1326 = vmatpush2.bf16.xpose.msra.mxu0 0
        %1327 = vmatprep.subr.bf16.mxu0 0
        %1328 = vmatpush2.bf16.xpose.msra.mxu0 0
        %1329 = vmatprep.mubr.bf16.mxu0 0
        %1330 = vmatmul.mubr.bf16.gmra.mxu0 %v1292
        %v1331 = vpop.f32.mrf.mxu0
        %v1332 = vadd.f32 0.0, %v1331
        %v1333 = vpop.f32.mrf.mxu0
        %v1334 = vpop.f32.mrf.mxu0
        %v1335 = vpop.f32.mrf.mxu0
        %1336 = vdwg.mxu0
        %v1337 = vsel %vm583, %v1332, -inf
        %1338 = vmax.xlane.f32.xlu0 %v1337
        %v1339 = vpop.xlane.xlu0 %1338
        %v1340 = vsub.f32 %v1332, %v1339
        %v1341 = vmul.f32 %v1340, 1.442695
        %v1342 = vpow.pop %v1341
        %v1343 = vsel %vm583, %v1342, 0.0
        %1344 = vadd.xlane.f32.xlu0 %v1343
        %v1345 = vpop.xlane.xlu0 %1344
        %v1346 = vrcp.pop %v1345
        %v1347 = vpack.c.bf16 %v1342, %v1342
        %v1349 = vunpack.c.l.b16 %v1283
        %v1350 = vpack.c.b16 %v1349, %v1349
        %1351 = vrot.lane.b32.xlu0 %v1350, 104
        %v1352 = vpop.permute.xlu0 %1351
        %v1354 = vsel %vm583, %v1347, 0
        %v1357 = vsel %vm598, %v1352, 0
        %1359 = vmatprep.subr.bf16.mxu0 0
        %1360 = vmatpush1.bf16.msra.mxu0 0
        %1361 = vmatprep.subr.bf16.mxu0 0
        %1362 = vmatpush1.bf16.msra.mxu0 0
        %1363 = vmatprep.subr.bf16.mxu0 0
        %1364 = vmatpush1.bf16.msra.mxu0 0
        %1365 = vmatprep.subr.bf16.mxu0 0
        %1366 = vmatpush1.bf16.msra.mxu0 0
        %1367 = vmatprep.subr.bf16.mxu0 0
        %1368 = vmatpush1.bf16.msra.mxu0 0
        %1369 = vmatprep.subr.bf16.mxu0 0
        %1370 = vmatpush1.bf16.msra.mxu0 0
        %1371 = vmatprep.subr.bf16.mxu0 0
        %1372 = vmatpush1.bf16.msra.mxu0 0
        %1373 = vmatprep.subr.bf16.mxu0 0
        %1374 = vmatpush1.bf16.msra.mxu0 %v1357
        %1375 = vmatprep.subr.bf16.mxu0 0
        %1376 = vmatpush2.bf16.msra.mxu0 0
        %1377 = vmatprep.subr.bf16.mxu0 0
        %1378 = vmatpush2.bf16.msra.mxu0 0
        %1379 = vmatprep.subr.bf16.mxu0 0
        %1380 = vmatpush2.bf16.msra.mxu0 0
        %1381 = vmatprep.subr.bf16.mxu0 0
        %1382 = vmatpush2.bf16.msra.mxu0 0
        %1383 = vmatprep.subr.bf16.mxu0 0
        %1384 = vmatpush2.bf16.msra.mxu0 0
        %1385 = vmatprep.subr.bf16.mxu0 0
        %1386 = vmatpush2.bf16.msra.mxu0 0
        %1387 = vmatprep.subr.bf16.mxu0 0
        %1388 = vmatpush2.bf16.msra.mxu0 0
        %1389 = vmatprep.subr.bf16.mxu0 0
        %1390 = vmatpush2.bf16.msra.mxu0 0
        %1391 = vmatprep.mubr.bf16.mxu0 0
        %1392 = vmatmul.mubr.bf16.gmra.mxu0 %v1354
        %v1393 = vpop.f32.mrf.mxu0
        %v1394 = vadd.f32 0.0, %v1393
        %v1395 = vpop.f32.mrf.mxu0
        %v1396 = vpop.f32.mrf.mxu0
        %v1397 = vpop.f32.mrf.mxu0
        %1398 = vdwg.mxu0
        %v1399 = vmul.f32 %v1394, %v1346
        %v1400 = vpack.c.bf16 %v1399, %v1399
        %v1402 = vunpack.c.l.b16 %v1400
        %v1403 = vpack.c.b16 %v1402, %v1402
        %1404 = vrot.lane.b32.xlu0 %v1403, 24
        %v1405 = vpop.permute.xlu0 %1404
        %vm1407 = vcmask 224448
        %1408 = vst.msk [vmem:[#allocation4] sm:$0xf] %vm1407, %v1405
        %v1409 = vld [vmem:[#allocation2] sm:$0xf]
        %v1410 = vld [vmem:[#allocation3] sm:$0xf]
        %1411 = vrot.lane.b32.xlu0 %v533, 100
        %v1412 = vpop.permute.xlu0 %1411
        %v1414 = vunpack.c.l.b16 %v1409
        %v1415 = vpack.c.b16 %v1414, %v1414
        %1416 = vrot.lane.b32.xlu0 %v1415, 100
        %v1417 = vpop.permute.xlu0 %1416
        %v1419 = vsel %vm536, %v1412, 0
        %v1422 = vsel %vm536, %v1417, 0
        %1424 = vmatprep.subr.bf16.mxu0 0
        %1425 = vmatpush1.bf16.xpose.msra.mxu0 0
        %1426 = vmatprep.subr.bf16.mxu0 0
        %1427 = vmatpush1.bf16.xpose.msra.mxu0 0
        %1428 = vmatprep.subr.bf16.mxu0 0
        %1429 = vmatpush1.bf16.xpose.msra.mxu0 0
        %1430 = vmatprep.subr.bf16.mxu0 0
        %1431 = vmatpush1.bf16.xpose.msra.mxu0 0
        %1432 = vmatprep.subr.bf16.mxu0 0
        %1433 = vmatpush1.bf16.xpose.msra.mxu0 0
        %1434 = vmatprep.subr.bf16.mxu0 0
        %1435 = vmatpush1.bf16.xpose.msra.mxu0 0
        %1436 = vmatprep.subr.bf16.mxu0 0
        %1437 = vmatpush1.bf16.xpose.msra.mxu0 0
        %1438 = vmatprep.subr.bf16.mxu0 0
        %1439 = vmatpush1.bf16.xpose.msra.mxu0 %v1422
        %1440 = vmatprep.subr.bf16.mxu0 0
        %1441 = vmatpush2.bf16.xpose.msra.mxu0 0
        %1442 = vmatprep.subr.bf16.mxu0 0
        %1443 = vmatpush2.bf16.xpose.msra.mxu0 0
        %1444 = vmatprep.subr.bf16.mxu0 0
        %1445 = vmatpush2.bf16.xpose.msra.mxu0 0
        %1446 = vmatprep.subr.bf16.mxu0 0
        %1447 = vmatpush2.bf16.xpose.msra.mxu0 0
        %1448 = vmatprep.subr.bf16.mxu0 0
        %1449 = vmatpush2.bf16.xpose.msra.mxu0 0
        %1450 = vmatprep.subr.bf16.mxu0 0
        %1451 = vmatpush2.bf16.xpose.msra.mxu0 0
        %1452 = vmatprep.subr.bf16.mxu0 0
        %1453 = vmatpush2.bf16.xpose.msra.mxu0 0
        %1454 = vmatprep.subr.bf16.mxu0 0
        %1455 = vmatpush2.bf16.xpose.msra.mxu0 0
        %1456 = vmatprep.mubr.bf16.mxu0 0
        %1457 = vmatmul.mubr.bf16.gmra.mxu0 %v1419
        %v1458 = vpop.f32.mrf.mxu0
        %v1459 = vadd.f32 0.0, %v1458
        %v1460 = vpop.f32.mrf.mxu0
        %v1461 = vpop.f32.mrf.mxu0
        %v1462 = vpop.f32.mrf.mxu0
        %1463 = vdwg.mxu0
        %v1464 = vsel %vm583, %v1459, -inf
        %1465 = vmax.xlane.f32.xlu0 %v1464
        %v1466 = vpop.xlane.xlu0 %1465
        %v1467 = vsub.f32 %v1459, %v1466
        %v1468 = vmul.f32 %v1467, 1.442695
        %v1469 = vpow.pop %v1468
        %v1470 = vsel %vm583, %v1469, 0.0
        %1471 = vadd.xlane.f32.xlu0 %v1470
        %v1472 = vpop.xlane.xlu0 %1471
        %v1473 = vrcp.pop %v1472
        %v1474 = vpack.c.bf16 %v1469, %v1469
        %v1476 = vunpack.c.l.b16 %v1410
        %v1477 = vpack.c.b16 %v1476, %v1476
        %1478 = vrot.lane.b32.xlu0 %v1477, 100
        %v1479 = vpop.permute.xlu0 %1478
        %v1481 = vsel %vm583, %v1474, 0
        %v1484 = vsel %vm598, %v1479, 0
        %1486 = vmatprep.subr.bf16.mxu0 0
        %1487 = vmatpush1.bf16.msra.mxu0 0
        %1488 = vmatprep.subr.bf16.mxu0 0
        %1489 = vmatpush1.bf16.msra.mxu0 0
        %1490 = vmatprep.subr.bf16.mxu0 0
        %1491 = vmatpush1.bf16.msra.mxu0 0
        %1492 = vmatprep.subr.bf16.mxu0 0
        %1493 = vmatpush1.bf16.msra.mxu0 0
        %1494 = vmatprep.subr.bf16.mxu0 0
        %1495 = vmatpush1.bf16.msra.mxu0 0
        %1496 = vmatprep.subr.bf16.mxu0 0
        %1497 = vmatpush1.bf16.msra.mxu0 0
        %1498 = vmatprep.subr.bf16.mxu0 0
        %1499 = vmatpush1.bf16.msra.mxu0 0
        %1500 = vmatprep.subr.bf16.mxu0 0
        %1501 = vmatpush1.bf16.msra.mxu0 %v1484
        %1502 = vmatprep.subr.bf16.mxu0 0
        %1503 = vmatpush2.bf16.msra.mxu0 0
        %1504 = vmatprep.subr.bf16.mxu0 0
        %1505 = vmatpush2.bf16.msra.mxu0 0
        %1506 = vmatprep.subr.bf16.mxu0 0
        %1507 = vmatpush2.bf16.msra.mxu0 0
        %1508 = vmatprep.subr.bf16.mxu0 0
        %1509 = vmatpush2.bf16.msra.mxu0 0
        %1510 = vmatprep.subr.bf16.mxu0 0
        %1511 = vmatpush2.bf16.msra.mxu0 0
        %1512 = vmatprep.subr.bf16.mxu0 0
        %1513 = vmatpush2.bf16.msra.mxu0 0
        %1514 = vmatprep.subr.bf16.mxu0 0
        %1515 = vmatpush2.bf16.msra.mxu0 0
        %1516 = vmatprep.subr.bf16.mxu0 0
        %1517 = vmatpush2.bf16.msra.mxu0 0
        %1518 = vmatprep.mubr.bf16.mxu0 0
        %1519 = vmatmul.mubr.bf16.gmra.mxu0 %v1481
        %v1520 = vpop.f32.mrf.mxu0
        %v1521 = vadd.f32 0.0, %v1520
        %v1522 = vpop.f32.mrf.mxu0
        %v1523 = vpop.f32.mrf.mxu0
        %v1524 = vpop.f32.mrf.mxu0
        %1525 = vdwg.mxu0
        %v1526 = vmul.f32 %v1521, %v1473
        %v1527 = vpack.c.bf16 %v1526, %v1526
        %v1529 = vunpack.c.l.b16 %v1527
        %v1530 = vpack.c.b16 %v1529, %v1529
        %1531 = vrot.lane.b32.xlu0 %v1530, 28
        %v1532 = vpop.permute.xlu0 %1531
        %vm1534 = vcmask 257248
        %1535 = vst.msk [vmem:[#allocation4] sm:$0xf] %vm1534, %v1532
        %v1536 = vld [vmem:[#allocation4] sm:$0xf]
        %v1537 = vld [vmem:[#allocation13] sm:$0xf]
        %v1538 = vld [vmem:[#allocation13 + $0x4] sm:$0xf]
        %v1539 = vld [vmem:[#allocation13 + $0x8] sm:$0xf]
        %v1540 = vld [vmem:[#allocation13 + $0xc] sm:$0xf]
        %v1541 = vld [vmem:[%s5] sm:$0x1]
        %v1543 = vlaneseq
        %v1544 = vshrl.u32 %v1543, 7
        %v1545 = vsub.s32 0, %v1544
        %v1546 = vrot.slane %v1541, %v1545
        %v1552 = vunpack.c.l.b16 %v1537
        %v1553 = vunpack.c.l.b16 %v1538
        %v1554 = vunpack.c.l.b16 %v1539
        %v1555 = vunpack.c.l.b16 %v1540
        %v1556 = vpack.c.b16 %v1553, %v1552
        %v1557 = vpack.c.b16 %v1555, %v1554
        %v1561 = vsel %vm488, %v1536, 0
        %1563 = vmatprep.subr.bf16.mxu0 0
        %1564 = vmatpush1.bf16.msra.mxu0 0
        %1565 = vmatprep.subr.bf16.mxu0 0
        %1566 = vmatpush1.bf16.msra.mxu0 0
        %1567 = vmatprep.subr.bf16.mxu0 0
        %1568 = vmatpush1.bf16.msra.mxu0 0
        %1569 = vmatprep.subr.bf16.mxu0 0
        %1570 = vmatpush1.bf16.msra.mxu0 0
        %1571 = vmatprep.subr.bf16.mxu0 0
        %1572 = vmatpush1.bf16.msra.mxu0 0
        %1573 = vmatprep.subr.bf16.mxu0 0
        %1574 = vmatpush1.bf16.msra.mxu0 0
        %1575 = vmatprep.subr.bf16.mxu0 0
        %1576 = vmatpush1.bf16.msra.mxu0 %v1557
        %1577 = vmatprep.subr.bf16.mxu0 0
        %1578 = vmatpush1.bf16.msra.mxu0 %v1556
        %1579 = vmatprep.subr.bf16.mxu0 0
        %1580 = vmatpush2.bf16.msra.mxu0 0
        %1581 = vmatprep.subr.bf16.mxu0 0
        %1582 = vmatpush2.bf16.msra.mxu0 0
        %1583 = vmatprep.subr.bf16.mxu0 0
        %1584 = vmatpush2.bf16.msra.mxu0 0
        %1585 = vmatprep.subr.bf16.mxu0 0
        %1586 = vmatpush2.bf16.msra.mxu0 0
        %1587 = vmatprep.subr.bf16.mxu0 0
        %1588 = vmatpush2.bf16.msra.mxu0 0
        %1589 = vmatprep.subr.bf16.mxu0 0
        %1590 = vmatpush2.bf16.msra.mxu0 0
        %1591 = vmatprep.subr.bf16.mxu0 0
        %1592 = vmatpush2.bf16.msra.mxu0 0
        %1593 = vmatprep.subr.bf16.mxu0 0
        %1594 = vmatpush2.bf16.msra.mxu0 0
        %1595 = vmatprep.mubr.bf16.mxu0 0
        %1596 = vmatmul.mubr.bf16.gmra.mxu0 %v1561
        %v1597 = vpop.f32.mrf.mxu0
        %v1598 = vadd.f32 %v1546, %v1597
        %v1599 = vpop.f32.mrf.mxu0
        %v1600 = vpop.f32.mrf.mxu0
        %v1601 = vpop.f32.mrf.mxu0
        %1602 = vdwg.mxu0
        %1603 = vst.msk [vmem:[%s338] sm:$0xff] %vm488, %v1598
        %s1604 = sand.u32 %s178, 1
        %s1605 = scalar_lea.sflag [#allocation7], %s1604
        %s1606 = sand.u32 %s178, 1
        %s1607 = smul.addr %s1606, 8
        %s1608 = scalar_lea.vmem [#allocation14], %s1607
        // Predicated region
        $region69: #{tpu_custom_call.1} parent=43 // pred_check
          %p1609 = pneg %p188
        $region70: #{tpu_custom_call.1} parent=43 // pred_check_branch
          %1611 = sbr.rel (%p1609) target = $region72
        $region71: #{tpu_custom_call.1} parent=43 // pred_region
          %s1613 = ssub.s32 128, 128
          %1614 = vsyncadd %s1605, %s1613
          %s1615 = sadd.s32 %s30, %s29
          %s1616 = smul.addr %s1615, 128
          %s1617 = scalar_lea.hbm %s6, %s1616
          %s1619 = sshll.u32 %s1608, 4
          %s1620 = int_to_ptr.vmem [resolvable:$true] %s1619
          %1622 = dma.vmem_to_hbm [thread:$0]  %s1620, 128, %s1617, %s1605
        $region72: #{tpu_custom_call.1} parent=43 // pred_fallthru
          _
      $region44: #{tpu_custom_call.1} parent=5 // pred_fallthru
        _
      %p1623 = scmp.le.s32.totalorder 2, %s20
      // Predicated region
      $region73: #{tpu_custom_call.1} parent=5 // pred_check
        %p1624 = pneg %p1623
      $region74: #{tpu_custom_call.1} parent=5 // pred_check_branch
        %1626 = sbr.rel (%p1624) target = $region76
      $region75: #{tpu_custom_call.1} parent=5 // pred_region
        %s1627 = ssub.s32 %s20, 2
        // Predicated region
        $region77: #{tpu_custom_call.1} parent=75 // pred_check
          %p1628 = pneg %p194
        $region78: #{tpu_custom_call.1} parent=75 // pred_check_branch
          %1630 = sbr.rel (%p1628) target = $region80
        $region79: #{tpu_custom_call.1} parent=75 // pred_region
          %s1631 = sand.u32 %s179, 1
          %s1632 = scalar_lea.sflag [#allocation7], %s1631
          %s1633 = sand.u32 %s179, 1
          %s1634 = smul.addr %s1633, 8
          %s1635 = scalar_lea.vmem [#allocation14], %s1634
          %1636 = dma.done %s1632, 128
        $region80: #{tpu_custom_call.1} parent=75 // pred_fallthru
          _
      $region76: #{tpu_custom_call.1} parent=5 // pred_fallthru
        _
    $region6: #{tpu_custom_call.1} parent=1 // loop_footer
      %s24 = sadd.s32 1, %s20
    $region7: #{tpu_custom_call.1} parent=1 // loop_footer_branch
      %19 = sbr.rel target = $region3
    $region8: #{tpu_custom_call.1} parent=1 // loop_exit
      _
    %1637 = vsyncpa [#allocation6], 1
    %s1638 = scalar_lea.sflag [#allocation6], 1
    %1639 = vsyncpa %s1638, 1
    %1640 = vsyncpa [#allocation9], 1
    %1641 = vsyncpa [#allocation12], 1
    %1642 = vsyncpa [#allocation7], 1
    %s1643 = scalar_lea.sflag [#allocation7], 1
    %1644 = vsyncpa %s1643, 1

// kernel: tpu_custom_call.1
$region0: #{tpu_custom_call.1}
  #allocation0 [shape = 'u32[]', space=smem, size = 0x4, offset = 0x4, fixed_abs, tag = 'smem constant byte address 0x4 - core index']
  #allocation1 [shape = 'u32[144,128]{1,0:T(1,128)}', space=vmem, size = 0x12000, scoped, tag = 'internal scratch']
  #allocation2 [shape = 'bf16[8,32]{1,0:T(8,128)(2,1)}', space=vmem, size = 0x800, scoped, tag = 'scratch operand']
  #allocation3 [shape = 'bf16[8,32]{1,0:T(8,128)(2,1)}', space=vmem, size = 0x800, scoped, tag = 'scratch operand']
  #allocation4 [shape = 'bf16[8,32]{1,0:T(8,128)(2,1)}', space=vmem, size = 0x800, scoped, tag = 'scratch operand']
  %s0 = inlined_call_operand.hbm [shape: bf16[2,8,32], index: 0, kind: input, shape index: {}]
  %s1 = inlined_call_operand.hbm [shape: bf16[32,32], index: 1, kind: input, shape index: {}]
  %s2 = inlined_call_operand.hbm [shape: bf16[32,32], index: 2, kind: input, shape index: {}]
  %s3 = inlined_call_operand.hbm [shape: bf16[32,32], index: 3, kind: input, shape index: {}]
  %s4 = inlined_call_operand.hbm [shape: bf16[32,32], index: 4, kind: input, shape index: {}]
  %s5 = inlined_call_operand.vmem [shape: f32[1,32], index: 5, kind: input, shape index: {}]
  %s6 = inlined_call_operand.hbm [shape: f32[2,8,32], index: 6, kind: output, shape index: {}]
  %s7 = sld [smem:[#allocation0]]
  $region81: #{tpu_custom_call.1} parent=0
    _
  %s9 = ssub.s32 1, %s7
  %s10 = scalar_select 0, %s9, %s7
  $region1: #{tpu_custom_call.1} parent=0
    #allocation5 [shape = 'u8[4096]{0}', space=vmem, size = 0x1000, scoped, tag = 'input window, operand 0']
    #allocation6 [shape = 's32[2]{0}', space=sflag, size = 0x8, scoped, tag = 'scoped memory for tpu_custom_call.1']
    #allocation7 [shape = 's32[2]{0}', space=sflag, size = 0x8, scoped, tag = 'scoped memory for tpu_custom_call.1']
    #allocation8 [shape = 'u8[8192]{0}', space=vmem, size = 0x2000, scoped, tag = 'input window, operand 1, single buffered']
    #allocation9 [shape = 's32[1]{0}', space=sflag, size = 0x4, scoped, tag = 'scoped memory for tpu_custom_call.1']
    #allocation10 [shape = 'u8[8192]{0}', space=vmem, size = 0x2000, scoped, tag = 'input window, operand 2, single buffered']
    #allocation11 [shape = 'u8[8192]{0}', space=vmem, size = 0x2000, scoped, tag = 'input window, operand 3, single buffered']
    #allocation12 [shape = 's32[1]{0}', space=sflag, size = 0x4, scoped, tag = 'scoped memory for tpu_custom_call.1']
    #allocation13 [shape = 'u8[8192]{0}', space=vmem, size = 0x2000, scoped, tag = 'input window, operand 4, single buffered']
    #allocation14 [shape = 'u8[8192]{0}', space=vmem, size = 0x2000, scoped, tag = 'output window, operand 0']
    %11 = vsyncpa [#allocation6], 0
    %s12 = scalar_lea.sflag [#allocation6], 1
    %13 = vsyncpa %s12, 0
    %14 = vsyncpa [#allocation9], 0
    %15 = vsyncpa [#allocation12], 0
    %16 = vsyncpa [#allocation7], 0
    %s17 = scalar_lea.sflag [#allocation7], 1
    %18 = vsyncpa %s17, 0
    loop: start=0, step=1, limit=4
    $region2: #{tpu_custom_call.1} parent=1 // loop_pre_header
      _
    $region3: #{tpu_custom_call.1} parent=1 // loop_header
      %s20 = sphi 0, %s24
      %p21 = scmp.ge.s32.totalorder %s20, 4
      %s27 = sphi 0, %s39
      %s28 = sphi 0, %s35
      %s29 = sphi 0, %s27
      %s30 = sphi 0, %s28
      %s31 = sphi 0, %s29
      %s32 = sphi 0, %s30
      %s42 = sphi 0, %s44
      %s45 = sphi 0, %s42
      %s46 = sphi 0, %s45
      %s62 = sphi 0, %s46
      %s66 = sphi 0, %s66
      %s68 = sphi 0, %s66
      %s69 = sphi 0, %s68
      %s83 = sphi 0, %s69
      %s87 = sphi 0, %s87
      %s89 = sphi 0, %s87
      %s90 = sphi 0, %s89
      %s104 = sphi 0, %s90
      %s108 = sphi 0, %s108
      %s110 = sphi 0, %s108
      %s111 = sphi 0, %s110
      %s125 = sphi 0, %s111
      %s129 = sphi 0, %s129
      %s131 = sphi 0, %s129
      %s132 = sphi 0, %s131
      %s146 = sphi 0, %s132
      %s150 = sphi 0, %s150
      %s152 = sphi 0, %s150
      %s153 = sphi 0, %s152
      %s167 = sphi 0, %s153
      %s175 = sphi 0, %s177
      %s178 = sphi 0, %s175
      %s179 = sphi 0, %s178
      %s195 = sphi 0, %s179
    $region4: #{tpu_custom_call.1} parent=1 // loop_header_branch
      %23 = sbr.rel (%p21) target = $region8
    $region5: #{tpu_custom_call.1} parent=1 // loop_body
      %s25 = ssub.s32 %s20, 1
      %s26 = ssub.s32 %s20, 2
      %s33 = sadd.s32 1, %s28
      %p34 = scmp.ge.s32.totalorder %s33, 1
      %s35 = scalar_select %p34, 0, %s33
      %s36 = sadd.s32 1, %s27
      %s37 = scalar_select %p34, %s36, %s27
      %p38 = scmp.ge.s32.totalorder %s37, 2
      %s39 = scalar_select %p38, 0, %s37
      %s40 = ssub.s32 %s27, %s39
      %p41 = scmp.eq.s32.totalorder %s40, 0
      %s43 = sadd.s32 %s42, 1
      %s44 = scalar_select %p41, %s42, %s43
      %p47 = pneg %p41
      %p48 = scmp.eq.s32.totalorder %s20, 1
      %p49 = por %p47, %p48
      %p50 = scmp.ne.s32.totalorder %s42, %s45
      %p51 = scmp.eq.s32.totalorder %s20, 0
      %p52 = por %p50, %p51
      %p53 = scmp.ne.s32.totalorder %s42, %s45
      %p54 = scmp.eq.s32.totalorder %s25, 1
      %p55 = por %p53, %p54
      %p56 = scmp.ne.s32.totalorder %s45, %s46
      %p57 = scmp.eq.s32.totalorder %s25, 0
      %p58 = por %p56, %p57
      %p59 = scmp.ne.s32.totalorder %s45, %s46
      %p60 = scmp.eq.s32.totalorder %s26, 1
      %p61 = por %p59, %p60
      %p63 = scmp.ne.s32.totalorder %s46, %s62
      %p64 = scmp.eq.s32.totalorder %s26, 0
      %p65 = por %p63, %p64
      %s67 = sadd.s32 %s66, 1
      %p70 = scmp.eq.s32.totalorder %s20, 1
      %p71 = scmp.ne.s32.totalorder %s66, %s68
      %p72 = scmp.eq.s32.totalorder %s20, 0
      %p73 = por %p71, %p72
      %p74 = scmp.ne.s32.totalorder %s66, %s68
      %p75 = scmp.eq.s32.totalorder %s25, 1
      %p76 = por %p74, %p75
      %p77 = scmp.ne.s32.totalorder %s68, %s69
      %p78 = scmp.eq.s32.totalorder %s25, 0
      %p79 = por %p77, %p78
      %p80 = scmp.ne.s32.totalorder %s68, %s69
      %p81 = scmp.eq.s32.totalorder %s26, 1
      %p82 = por %p80, %p81
      %p84 = scmp.ne.s32.totalorder %s69, %s83
      %p85 = scmp.eq.s32.totalorder %s26, 0
      %p86 = por %p84, %p85
      %s88 = sadd.s32 %s87, 1
      %p91 = scmp.eq.s32.totalorder %s20, 1
      %p92 = scmp.ne.s32.totalorder %s87, %s89
      %p93 = scmp.eq.s32.totalorder %s20, 0
      %p94 = por %p92, %p93
      %p95 = scmp.ne.s32.totalorder %s87, %s89
      %p96 = scmp.eq.s32.totalorder %s25, 1
      %p97 = por %p95, %p96
      %p98 = scmp.ne.s32.totalorder %s89, %s90
      %p99 = scmp.eq.s32.totalorder %s25, 0
      %p100 = por %p98, %p99
      %p101 = scmp.ne.s32.totalorder %s89, %s90
      %p102 = scmp.eq.s32.totalorder %s26, 1
      %p103 = por %p101, %p102
      %p105 = scmp.ne.s32.totalorder %s90, %s104
      %p106 = scmp.eq.s32.totalorder %s26, 0
      %p107 = por %p105, %p106
      %s109 = sadd.s32 %s108, 1
      %p112 = scmp.eq.s32.totalorder %s20, 1
      %p113 = scmp.ne.s32.totalorder %s108, %s110
      %p114 = scmp.eq.s32.totalorder %s20, 0
      %p115 = por %p113, %p114
      %p116 = scmp.ne.s32.totalorder %s108, %s110
      %p117 = scmp.eq.s32.totalorder %s25, 1
      %p118 = por %p116, %p117
      %p119 = scmp.ne.s32.totalorder %s110, %s111
      %p120 = scmp.eq.s32.totalorder %s25, 0
      %p121 = por %p119, %p120
      %p122 = scmp.ne.s32.totalorder %s110, %s111
      %p123 = scmp.eq.s32.totalorder %s26, 1
      %p124 = por %p122, %p123
      %p126 = scmp.ne.s32.totalorder %s111, %s125
      %p127 = scmp.eq.s32.totalorder %s26, 0
      %p128 = por %p126, %p127
      %s130 = sadd.s32 %s129, 1
      %p133 = scmp.eq.s32.totalorder %s20, 1
      %p134 = scmp.ne.s32.totalorder %s129, %s131
      %p135 = scmp.eq.s32.totalorder %s20, 0
      %p136 = por %p134, %p135
      %p137 = scmp.ne.s32.totalorder %s129, %s131
      %p138 = scmp.eq.s32.totalorder %s25, 1
      %p139 = por %p137, %p138
      %p140 = scmp.ne.s32.totalorder %s131, %s132
      %p141 = scmp.eq.s32.totalorder %s25, 0
      %p142 = por %p140, %p141
      %p143 = scmp.ne.s32.totalorder %s131, %s132
      %p144 = scmp.eq.s32.totalorder %s26, 1
      %p145 = por %p143, %p144
      %p147 = scmp.ne.s32.totalorder %s132, %s146
      %p148 = scmp.eq.s32.totalorder %s26, 0
      %p149 = por %p147, %p148
      %s151 = sadd.s32 %s150, 1
      %p154 = scmp.eq.s32.totalorder %s20, 1
      %p155 = scmp.ne.s32.totalorder %s150, %s152
      %p156 = scmp.eq.s32.totalorder %s20, 0
      %p157 = por %p155, %p156
      %p158 = scmp.ne.s32.totalorder %s150, %s152
      %p159 = scmp.eq.s32.totalorder %s25, 1
      %p160 = por %p158, %p159
      %p161 = scmp.ne.s32.totalorder %s152, %s153
      %p162 = scmp.eq.s32.totalorder %s25, 0
      %p163 = por %p161, %p162
      %p164 = scmp.ne.s32.totalorder %s152, %s153
      %p165 = scmp.eq.s32.totalorder %s26, 1
      %p166 = por %p164, %p165
      %p168 = scmp.ne.s32.totalorder %s153, %s167
      %p169 = scmp.eq.s32.totalorder %s26, 0
      %p170 = por %p168, %p169
      %s171 = ssub.s32 %s27, %s39
      %s172 = ssub.s32 %s28, %s35
      %s173 = sor.u32 %s171, %s172
      %p174 = scmp.eq.s32.totalorder %s173, 0
      %s176 = sadd.s32 %s175, 1
      %s177 = scalar_select %p174, %s175, %s176
      %p180 = pneg %p174
      %p181 = scmp.eq.s32.totalorder %s20, 1
      %p182 = por %p180, %p181
      %p183 = scmp.ne.s32.totalorder %s175, %s178
      %p184 = scmp.eq.s32.totalorder %s20, 0
      %p185 = por %p183, %p184
      %p186 = scmp.ne.s32.totalorder %s175, %s178
      %p187 = scmp.eq.s32.totalorder %s25, 1
      %p188 = por %p186, %p187
      %p189 = scmp.ne.s32.totalorder %s178, %s179
      %p190 = scmp.eq.s32.totalorder %s25, 0
      %p191 = por %p189, %p190
      %p192 = scmp.ne.s32.totalorder %s178, %s179
      %p193 = scmp.eq.s32.totalorder %s26, 1
      %p194 = por %p192, %p193
      %p196 = scmp.ne.s32.totalorder %s179, %s195
      %p197 = scmp.eq.s32.totalorder %s26, 0
      %p198 = por %p196, %p197
      %p199 = scmp.le.s32.totalorder 1, %s20
      %p200 = scmp.lt.s32.totalorder %s20, 3
      %p201 = pnand %p199, %p200
      %p202 = pneg %p201
      // Predicated region
      $region9: #{tpu_custom_call.1} parent=5 // pred_check
        _
      $region10: #{tpu_custom_call.1} parent=5 // pred_check_branch
        %204 = sbr.rel (%p201) target = $region12
      $region11: #{tpu_custom_call.1} parent=5 // pred_region
        %s205 = ssub.s32 %s20, 1
        // Predicated region
        $region13: #{tpu_custom_call.1} parent=11 // pred_check
          %p206 = pneg %p79
        $region14: #{tpu_custom_call.1} parent=11 // pred_check_branch
          %208 = sbr.rel (%p206) target = $region16
        $region15: #{tpu_custom_call.1} parent=11 // pred_region
          %s210 = ssub.s32 256, 256
          %211 = vsyncadd [#allocation9], %s210
          %s212 = sshll.u32 [#allocation8], 4
          %s213 = int_to_ptr.vmem [resolvable:$true] %s212
          %218 = dma.hbm_to_vmem [thread:$0]  %s1, 256, %s213, [#allocation9], 64, 64, 4
        $region16: #{tpu_custom_call.1} parent=11 // pred_fallthru
          _
        // Predicated region
        $region17: #{tpu_custom_call.1} parent=11 // pred_check
          %p219 = pneg %p100
        $region18: #{tpu_custom_call.1} parent=11 // pred_check_branch
          %221 = sbr.rel (%p219) target = $region20
        $region19: #{tpu_custom_call.1} parent=11 // pred_region
          %s223 = ssub.s32 256, 256
          %224 = vsyncadd [#allocation9], %s223
          %s225 = sshll.u32 [#allocation10], 4
          %s226 = int_to_ptr.vmem [resolvable:$true] %s225
          %231 = dma.hbm_to_vmem [thread:$0]  %s2, 256, %s226, [#allocation9], 64, 64, 4
        $region20: #{tpu_custom_call.1} parent=11 // pred_fallthru
          _
        // Predicated region
        $region21: #{tpu_custom_call.1} parent=11 // pred_check
          %p232 = pneg %p121
        $region22: #{tpu_custom_call.1} parent=11 // pred_check_branch
          %234 = sbr.rel (%p232) target = $region24
        $region23: #{tpu_custom_call.1} parent=11 // pred_region
          %s236 = ssub.s32 256, 256
          %237 = vsyncadd [#allocation12], %s236
          %s238 = sshll.u32 [#allocation11], 4
          %s239 = int_to_ptr.vmem [resolvable:$true] %s238
          %244 = dma.hbm_to_vmem [thread:$0]  %s3, 256, %s239, [#allocation12], 64, 64, 4
        $region24: #{tpu_custom_call.1} parent=11 // pred_fallthru
          _
        // Predicated region
        $region25: #{tpu_custom_call.1} parent=11 // pred_check
          %p245 = pneg %p142
        $region26: #{tpu_custom_call.1} parent=11 // pred_check_branch
          %247 = sbr.rel (%p245) target = $region28
        $region27: #{tpu_custom_call.1} parent=11 // pred_region
          %s249 = ssub.s32 256, 256
          %250 = vsyncadd [#allocation12], %s249
          %s251 = sshll.u32 [#allocation13], 4
          %s252 = int_to_ptr.vmem [resolvable:$true] %s251
          %257 = dma.hbm_to_vmem [thread:$0]  %s4, 256, %s252, [#allocation12], 64, 64, 4
        $region28: #{tpu_custom_call.1} parent=11 // pred_fallthru
          _
        // Predicated region
        $region29: #{tpu_custom_call.1} parent=11 // pred_check
          %p258 = pneg %p163
        $region30: #{tpu_custom_call.1} parent=11 // pred_check_branch
          %260 = sbr.rel (%p258) target = $region32
        $region31: #{tpu_custom_call.1} parent=11 // pred_region
          _
        $region32: #{tpu_custom_call.1} parent=11 // pred_fallthru
          _
      $region12: #{tpu_custom_call.1} parent=5 // pred_fallthru
        _
      %p261 = scmp.lt.s32.totalorder %s20, 2
      // Predicated region
      $region33: #{tpu_custom_call.1} parent=5 // pred_check
        %p262 = pneg %p261
      $region34: #{tpu_custom_call.1} parent=5 // pred_check_branch
        %264 = sbr.rel (%p262) target = $region36
      $region35: #{tpu_custom_call.1} parent=5 // pred_region
        // Predicated region
        $region37: #{tpu_custom_call.1} parent=35 // pred_check
          %p265 = pneg %p52
        $region38: #{tpu_custom_call.1} parent=35 // pred_check_branch
          %267 = sbr.rel (%p265) target = $region40
        $region39: #{tpu_custom_call.1} parent=35 // pred_region
          %s268 = sand.u32 %s42, 1
          %s269 = scalar_lea.sflag [#allocation6], %s268
          %s270 = sand.u32 %s42, 1
          %s271 = smul.addr %s270, 4
          %s272 = scalar_lea.vmem [#allocation5], %s271
          %s274 = ssub.s32 64, 64
          %275 = vsyncadd %s269, %s274
          %s276 = smul.addr %s27, 64
          %s277 = scalar_lea.hbm %s0, %s276
          %s279 = sshll.u32 %s272, 4
          %s280 = int_to_ptr.vmem [resolvable:$true] %s279
          %282 = dma.hbm_to_vmem [thread:$0]  %s277, 64, %s280, %s269
        $region40: #{tpu_custom_call.1} parent=35 // pred_fallthru
          _
      $region36: #{tpu_custom_call.1} parent=5 // pred_fallthru
        _
      %p283 = scmp.le.s32.totalorder 1, %s20
      %p284 = scmp.lt.s32.totalorder %s20, 3
      %p285 = pnand %p283, %p284
      %p286 = pneg %p285
      // Predicated region
      $region41: #{tpu_custom_call.1} parent=5 // pred_check
        _
      $region42: #{tpu_custom_call.1} parent=5 // pred_check_branch
        %288 = sbr.rel (%p285) target = $region44
      $region43: #{tpu_custom_call.1} parent=5 // pred_region
        %s289 = ssub.s32 %s20, 1
        %s290 = sand.u32 %s45, 1
        %s291 = scalar_lea.sflag [#allocation6], %s290
        %s292 = sand.u32 %s45, 1
        %s293 = smul.addr %s292, 4
        %s294 = scalar_lea.vmem [#allocation5], %s293
        // Predicated region
        $region45: #{tpu_custom_call.1} parent=43 // pred_check
          %p295 = pneg %p58
        $region46: #{tpu_custom_call.1} parent=43 // pred_check_branch
          %297 = sbr.rel (%p295) target = $region48
        $region47: #{tpu_custom_call.1} parent=43 // pred_region
          %298 = dma.done %s291, 64
        $region48: #{tpu_custom_call.1} parent=43 // pred_fallthru
          _
        // Predicated region
        $region49: #{tpu_custom_call.1} parent=43 // pred_check
          %p299 = pneg %p79
        $region50: #{tpu_custom_call.1} parent=43 // pred_check_branch
          %301 = sbr.rel (%p299) target = $region52
        $region51: #{tpu_custom_call.1} parent=43 // pred_region
          %302 = dma.done [#allocation9], 256
        $region52: #{tpu_custom_call.1} parent=43 // pred_fallthru
          _
        // Predicated region
        $region53: #{tpu_custom_call.1} parent=43 // pred_check
          %p303 = pneg %p100
        $region54: #{tpu_custom_call.1} parent=43 // pred_check_branch
          %305 = sbr.rel (%p303) target = $region56
        $region55: #{tpu_custom_call.1} parent=43 // pred_region
          %306 = dma.done [#allocation9], 256
        $region56: #{tpu_custom_call.1} parent=43 // pred_fallthru
          _
        // Predicated region
        $region57: #{tpu_custom_call.1} parent=43 // pred_check
          %p307 = pneg %p121
        $region58: #{tpu_custom_call.1} parent=43 // pred_check_branch
          %309 = sbr.rel (%p307) target = $region60
        $region59: #{tpu_custom_call.1} parent=43 // pred_region
          %310 = dma.done [#allocation12], 256
        $region60: #{tpu_custom_call.1} parent=43 // pred_fallthru
          _
        // Predicated region
        $region61: #{tpu_custom_call.1} parent=43 // pred_check
          %p311 = pneg %p142
        $region62: #{tpu_custom_call.1} parent=43 // pred_check_branch
          %313 = sbr.rel (%p311) target = $region64
        $region63: #{tpu_custom_call.1} parent=43 // pred_region
          %314 = dma.done [#allocation12], 256
        $region64: #{tpu_custom_call.1} parent=43 // pred_fallthru
          _
        %s315 = sand.u32 %s45, 1
        %s316 = scalar_lea.sflag [#allocation6], %s315
        %s317 = sand.u32 %s45, 1
        %s318 = smul.addr %s317, 4
        %s319 = scalar_lea.vmem [#allocation5], %s318
        %p320 = pneg %p58
        %p321 = pneg %p55
        %p322 = pneg %p79
        %p323 = pneg %p76
        %p324 = pneg %p100
        %p325 = pneg %p97
        %p326 = pneg %p121
        %p327 = pneg %p118
        %p328 = pneg %p142
        %p329 = pneg %p139
        %p330 = pneg %p163
        %p331 = pneg %p160
        %p332 = pneg %p191
        %p333 = pneg %p188
        %s334 = sand.u32 %s178, 1
        %s335 = scalar_lea.sflag [#allocation7], %s334
        %s336 = sand.u32 %s178, 1
        %s337 = smul.addr %s336, 8
        %s338 = scalar_lea.vmem [#allocation14], %s337
        %p340 = scmp.eq.s32.totalorder %s30, 0
        // Predicated region
        $region65: #{tpu_custom_call.1} parent=43 // pred_check
          %p341 = pneg %p340
        $region66: #{tpu_custom_call.1} parent=43 // pred_check_branch
          %343 = sbr.rel (%p341) target = $region68
        $region67: #{tpu_custom_call.1} parent=43 // pred_region
          %v344 = vld [vmem:[%s294] sm:$0xf]
          %v345 = vld [vmem:[#allocation8] sm:$0xf]
          %v346 = vld [vmem:[#allocation8 + $0x4] sm:$0xf]
          %v347 = vld [vmem:[#allocation8 + $0x8] sm:$0xf]
          %v348 = vld [vmem:[#allocation8 + $0xc] sm:$0xf]
          %v353 = vunpack.c.l.b16 %v345
          %v354 = vunpack.c.l.b16 %v346
          %v355 = vunpack.c.l.b16 %v347
          %v356 = vunpack.c.l.b16 %v348
          %v357 = vpack.c.b16 %v354, %v353
          %v358 = vpack.c.b16 %v356, %v355
          %vm361 = vcmask 261120
          %v363 = vsel %vm361, %v344, 0
          %365 = vmatprep.subr.bf16.mxu0 0
          %366 = vmatpush1.bf16.msra.mxu0 0
          %367 = vmatprep.subr.bf16.mxu0 0
          %368 = vmatpush1.bf16.msra.mxu0 0
          %369 = vmatprep.subr.bf16.mxu0 0
          %370 = vmatpush1.bf16.msra.mxu0 0
          %371 = vmatprep.subr.bf16.mxu0 0
          %372 = vmatpush1.bf16.msra.mxu0 0
          %373 = vmatprep.subr.bf16.mxu0 0
          %374 = vmatpush1.bf16.msra.mxu0 0
          %375 = vmatprep.subr.bf16.mxu0 0
          %376 = vmatpush1.bf16.msra.mxu0 0
          %377 = vmatprep.subr.bf16.mxu0 0
          %378 = vmatpush1.bf16.msra.mxu0 %v358
          %379 = vmatprep.subr.bf16.mxu0 0
          %380 = vmatpush1.bf16.msra.mxu0 %v357
          %381 = vmatprep.subr.bf16.mxu0 0
          %382 = vmatpush2.bf16.msra.mxu0 0
          %383 = vmatprep.subr.bf16.mxu0 0
          %384 = vmatpush2.bf16.msra.mxu0 0
          %385 = vmatprep.subr.bf16.mxu0 0
          %386 = vmatpush2.bf16.msra.mxu0 0
          %387 = vmatprep.subr.bf16.mxu0 0
          %388 = vmatpush2.bf16.msra.mxu0 0
          %389 = vmatprep.subr.bf16.mxu0 0
          %390 = vmatpush2.bf16.msra.mxu0 0
          %391 = vmatprep.subr.bf16.mxu0 0
          %392 = vmatpush2.bf16.msra.mxu0 0
          %393 = vmatprep.subr.bf16.mxu0 0
          %394 = vmatpush2.bf16.msra.mxu0 0
          %395 = vmatprep.subr.bf16.mxu0 0
          %396 = vmatpush2.bf16.msra.mxu0 0
          %397 = vmatprep.mubr.bf16.mxu0 0
          %398 = vmatmul.mubr.bf16.gmra.mxu0 %v363
          %v399 = vpop.f32.mrf.mxu0
          %v400 = vadd.f32 0.0, %v399
          %v401 = vpop.f32.mrf.mxu0
          %v402 = vpop.f32.mrf.mxu0
          %v403 = vpop.f32.mrf.mxu0
          %404 = vdwg.mxu0
          %v405 = vpack.c.bf16 %v400, %v400
          %vm406 = vcmask 257024
          %407 = vst.msk [vmem:[#allocation2] sm:$0xf] %vm406, %v405
          %v408 = vld [vmem:[#allocation11] sm:$0xf]
          %v409 = vld [vmem:[#allocation11 + $0x4] sm:$0xf]
          %v410 = vld [vmem:[#allocation11 + $0x8] sm:$0xf]
          %v411 = vld [vmem:[#allocation11 + $0xc] sm:$0xf]
          %v416 = vunpack.c.l.b16 %v408
          %v417 = vunpack.c.l.b16 %v409
          %v418 = vunpack.c.l.b16 %v410
          %v419 = vunpack.c.l.b16 %v411
          %v420 = vpack.c.b16 %v417, %v416
          %v421 = vpack.c.b16 %v419, %v418
          %424 = vmatprep.subr.bf16.mxu0 0
          %425 = vmatpush1.bf16.msra.mxu0 0
          %426 = vmatprep.subr.bf16.mxu0 0
          %427 = vmatpush1.bf16.msra.mxu0 0
          %428 = vmatprep.subr.bf16.mxu0 0
          %429 = vmatpush1.bf16.msra.mxu0 0
          %430 = vmatprep.subr.bf16.mxu0 0
          %431 = vmatpush1.bf16.msra.mxu0 0
          %432 = vmatprep.subr.bf16.mxu0 0
          %433 = vmatpush1.bf16.msra.mxu0 0
          %434 = vmatprep.subr.bf16.mxu0 0
          %435 = vmatpush1.bf16.msra.mxu0 0
          %436 = vmatprep.subr.bf16.mxu0 0
          %437 = vmatpush1.bf16.msra.mxu0 %v421
          %438 = vmatprep.subr.bf16.mxu0 0
          %439 = vmatpush1.bf16.msra.mxu0 %v420
          %440 = vmatprep.subr.bf16.mxu0 0
          %441 = vmatpush2.bf16.msra.mxu0 0
          %442 = vmatprep.subr.bf16.mxu0 0
          %443 = vmatpush2.bf16.msra.mxu0 0
          %444 = vmatprep.subr.bf16.mxu0 0
          %445 = vmatpush2.bf16.msra.mxu0 0
          %446 = vmatprep.subr.bf16.mxu0 0
          %447 = vmatpush2.bf16.msra.mxu0 0
          %448 = vmatprep.subr.bf16.mxu0 0
          %449 = vmatpush2.bf16.msra.mxu0 0
          %450 = vmatprep.subr.bf16.mxu0 0
          %451 = vmatpush2.bf16.msra.mxu0 0
          %452 = vmatprep.subr.bf16.mxu0 0
          %453 = vmatpush2.bf16.msra.mxu0 0
          %454 = vmatprep.subr.bf16.mxu0 0
          %455 = vmatpush2.bf16.msra.mxu0 0
          %456 = vmatprep.mubr.bf16.mxu0 0
          %457 = vmatmul.mubr.bf16.gmra.mxu0 %v363
          %v458 = vpop.f32.mrf.mxu0
          %v459 = vadd.f32 0.0, %v458
          %v460 = vpop.f32.mrf.mxu0
          %v461 = vpop.f32.mrf.mxu0
          %v462 = vpop.f32.mrf.mxu0
          %463 = vdwg.mxu0
          %v464 = vpack.c.bf16 %v459, %v459
          %465 = vst.msk [vmem:[#allocation3] sm:$0xf] %vm406, %v464
        $region68: #{tpu_custom_call.1} parent=43 // pred_fallthru
          _
        %s466 = smul.u32 %s30, 8
        %s467 = sshra.s32 %s466, 3
        %s468 = sand.u32 %s466, 7
        %s469 = smul.addr %s467, 4
        %s470 = scalar_lea.vmem %s294, %s469 [#allocation5]
        %v471 = vld [vmem:[%s470] sm:$0xf]
        %v472 = vld [vmem:[#allocation10] sm:$0xf]
        %v473 = vld [vmem:[#allocation10 + $0x4] sm:$0xf]
        %v474 = vld [vmem:[#allocation10 + $0x8] sm:$0xf]
        %v475 = vld [vmem:[#allocation10 + $0xc] sm:$0xf]
        %v480 = vunpack.c.l.b16 %v472
        %v481 = vunpack.c.l.b16 %v473
        %v482 = vunpack.c.l.b16 %v474
        %v483 = vunpack.c.l.b16 %v475
        %v484 = vpack.c.b16 %v481, %v480
        %v485 = vpack.c.b16 %v483, %v482
        %vm488 = vcmask 261120
        %v490 = vsel %vm488, %v471, 0
        %492 = vmatprep.subr.bf16.mxu0 0
        %493 = vmatpush1.bf16.msra.mxu0 0
        %494 = vmatprep.subr.bf16.mxu0 0
        %495 = vmatpush1.bf16.msra.mxu0 0
        %496 = vmatprep.subr.bf16.mxu0 0
        %497 = vmatpush1.bf16.msra.mxu0 0
        %498 = vmatprep.subr.bf16.mxu0 0
        %499 = vmatpush1.bf16.msra.mxu0 0
        %500 = vmatprep.subr.bf16.mxu0 0
        %501 = vmatpush1.bf16.msra.mxu0 0
        %502 = vmatprep.subr.bf16.mxu0 0
        %503 = vmatpush1.bf16.msra.mxu0 0
        %504 = vmatprep.subr.bf16.mxu0 0
        %505 = vmatpush1.bf16.msra.mxu0 %v485
        %506 = vmatprep.subr.bf16.mxu0 0
        %507 = vmatpush1.bf16.msra.mxu0 %v484
        %508 = vmatprep.subr.bf16.mxu0 0
        %509 = vmatpush2.bf16.msra.mxu0 0
        %510 = vmatprep.subr.bf16.mxu0 0
        %511 = vmatpush2.bf16.msra.mxu0 0
        %512 = vmatprep.subr.bf16.mxu0 0
        %513 = vmatpush2.bf16.msra.mxu0 0
        %514 = vmatprep.subr.bf16.mxu0 0
        %515 = vmatpush2.bf16.msra.mxu0 0
        %516 = vmatprep.subr.bf16.mxu0 0
        %517 = vmatpush2.bf16.msra.mxu0 0
        %518 = vmatprep.subr.bf16.mxu0 0
        %519 = vmatpush2.bf16.msra.mxu0 0
        %520 = vmatprep.subr.bf16.mxu0 0
        %521 = vmatpush2.bf16.msra.mxu0 0
        %522 = vmatprep.subr.bf16.mxu0 0
        %523 = vmatpush2.bf16.msra.mxu0 0
        %524 = vmatprep.mubr.bf16.mxu0 0
        %525 = vmatmul.mubr.bf16.gmra.mxu0 %v490
        %v526 = vpop.f32.mrf.mxu0
        %v527 = vadd.f32 0.0, %v526
        %v528 = vpop.f32.mrf.mxu0
        %v529 = vpop.f32.mrf.mxu0
        %v530 = vpop.f32.mrf.mxu0
        %531 = vdwg.mxu0
        %v532 = vmul.f32 %v527, 0.17677669
        %v533 = vpack.c.bf16 %v532, %v532
        %v534 = vld [vmem:[#allocation2] sm:$0xf]
        %v535 = vld [vmem:[#allocation3] sm:$0xf]
        %vm536 = vcmask 31744
        %v538 = vsel %vm536, %v533, 0
        %v541 = vsel %vm536, %v534, 0
        %543 = vmatprep.subr.bf16.mxu0 0
        %544 = vmatpush1.bf16.xpose.msra.mxu0 0
        %545 = vmatprep.subr.bf16.mxu0 0
        %546 = vmatpush1.bf16.xpose.msra.mxu0 0
        %547 = vmatprep.subr.bf16.mxu0 0
        %548 = vmatpush1.bf16.xpose.msra.mxu0 0
        %549 = vmatprep.subr.bf16.mxu0 0
        %550 = vmatpush1.bf16.xpose.msra.mxu0 0
        %551 = vmatprep.subr.bf16.mxu0 0
        %552 = vmatpush1.bf16.xpose.msra.mxu0 0
        %553 = vmatprep.subr.bf16.mxu0 0
        %554 = vmatpush1.bf16.xpose.msra.mxu0 0
        %555 = vmatprep.subr.bf16.mxu0 0
        %556 = vmatpush1.bf16.xpose.msra.mxu0 0
        %557 = vmatprep.subr.bf16.mxu0 0
        %558 = vmatpush1.bf16.xpose.msra.mxu0 %v541
        %559 = vmatprep.subr.bf16.mxu0 0
        %560 = vmatpush2.bf16.xpose.msra.mxu0 0
        %561 = vmatprep.subr.bf16.mxu0 0
        %562 = vmatpush2.bf16.xpose.msra.mxu0 0
        %563 = vmatprep.subr.bf16.mxu0 0
        %564 = vmatpush2.bf16.xpose.msra.mxu0 0
        %565 = vmatprep.subr.bf16.mxu0 0
        %566 = vmatpush2.bf16.xpose.msra.mxu0 0
        %567 = vmatprep.subr.bf16.mxu0 0
        %568 = vmatpush2.bf16.xpose.msra.mxu0 0
        %569 = vmatprep.subr.bf16.mxu0 0
        %570 = vmatpush2.bf16.xpose.msra.mxu0 0
        %571 = vmatprep.subr.bf16.mxu0 0
        %572 = vmatpush2.bf16.xpose.msra.mxu0 0
        %573 = vmatprep.subr.bf16.mxu0 0
        %574 = vmatpush2.bf16.xpose.msra.mxu0 0
        %575 = vmatprep.mubr.bf16.mxu0 0
        %576 = vmatmul.mubr.bf16.gmra.mxu0 %v538
        %v577 = vpop.f32.mrf.mxu0
        %v578 = vadd.f32 0.0, %v577
        %v579 = vpop.f32.mrf.mxu0
        %v580 = vpop.f32.mrf.mxu0
        %v581 = vpop.f32.mrf.mxu0
        %582 = vdwg.mxu0
        %vm583 = vcmask 64512
        %v584 = vsel %vm583, %v578, -inf
        %585 = vmax.xlane.f32.xlu0 %v584
        %v586 = vpop.xlane.xlu0 %585
        %v587 = vsub.f32 %v578, %v586
        %v588 = vmul.f32 %v587, 1.442695
        %v589 = vpow.pop %v588
        %v590 = vsel %vm583, %v589, 0.0
        %591 = vadd.xlane.f32.xlu0 %v590
        %v592 = vpop.xlane.xlu0 %591
        %v593 = vrcp.pop %v592
        %v594 = vpack.c.bf16 %v589, %v589
        %v596 = vsel %vm583, %v594, 0
        %vm598 = vcmask 1043456
        %v600 = vsel %vm598, %v535, 0
        %602 = vmatprep.subr.bf16.mxu0 0
        %603 = vmatpush1.bf16.msra.mxu0 0
        %604 = vmatprep.subr.bf16.mxu0 0
        %605 = vmatpush1.bf16.msra.mxu0 0
        %606 = vmatprep.subr.bf16.mxu0 0
        %607 = vmatpush1.bf16.msra.mxu0 0
        %608 = vmatprep.subr.bf16.mxu0 0
        %609 = vmatpush1.bf16.msra.mxu0 0
        %610 = vmatprep.subr.bf16.mxu0 0
        %611 = vmatpush1.bf16.msra.mxu0 0
        %612 = vmatprep.subr.bf16.mxu0 0
        %613 = vmatpush1.bf16.msra.mxu0 0
        %614 = vmatprep.subr.bf16.mxu0 0
        %615 = vmatpush1.bf16.msra.mxu0 0
        %616 = vmatprep.subr.bf16.mxu0 0
        %617 = vmatpush1.bf16.msra.mxu0 %v600
        %618 = vmatprep.subr.bf16.mxu0 0
        %619 = vmatpush2.bf16.msra.mxu0 0
        %620 = vmatprep.subr.bf16.mxu0 0
        %621 = vmatpush2.bf16.msra.mxu0 0
        %622 = vmatprep.subr.bf16.mxu0 0
        %623 = vmatpush2.bf16.msra.mxu0 0
        %624 = vmatprep.subr.bf16.mxu0 0
        %625 = vmatpush2.bf16.msra.mxu0 0
        %626 = vmatprep.subr.bf16.mxu0 0
        %627 = vmatpush2.bf16.msra.mxu0 0
        %628 = vmatprep.subr.bf16.mxu0 0
        %629 = vmatpush2.bf16.msra.mxu0 0
        %630 = vmatprep.subr.bf16.mxu0 0
        %631 = vmatpush2.bf16.msra.mxu0 0
        %632 = vmatprep.subr.bf16.mxu0 0
        %633 = vmatpush2.bf16.msra.mxu0 0
        %634 = vmatprep.mubr.bf16.mxu0 0
        %635 = vmatmul.mubr.bf16.gmra.mxu0 %v596
        %v636 = vpop.f32.mrf.mxu0
        %v637 = vadd.f32 0.0, %v636
        %v638 = vpop.f32.mrf.mxu0
        %v639 = vpop.f32.mrf.mxu0
        %v640 = vpop.f32.mrf.mxu0
        %641 = vdwg.mxu0
        %v642 = vmul.f32 %v637, %v593
        %v643 = vpack.c.bf16 %v642, %v642
        %vm644 = vcmask 27648
        %645 = vst.msk [vmem:[#allocation4] sm:$0xf] %vm644, %v643
        %v646 = vld [vmem:[#allocation2] sm:$0xf]
        %v647 = vld [vmem:[#allocation3] sm:$0xf]
        %649 = vrot.lane.b32.xlu0 %v533, 124
        %v650 = vpop.permute.xlu0 %649
        %v652 = vunpack.c.l.b16 %v646
        %v653 = vpack.c.b16 %v652, %v652
        %654 = vrot.lane.b32.xlu0 %v653, 124
        %v655 = vpop.permute.xlu0 %654
        %v657 = vsel %vm536, %v650, 0
        %v660 = vsel %vm536, %v655, 0
        %662 = vmatprep.subr.bf16.mxu0 0
        %663 = vmatpush1.bf16.xpose.msra.mxu0 0
        %664 = vmatprep.subr.bf16.mxu0 0
        %665 = vmatpush1.bf16.xpose.msra.mxu0 0
        %666 = vmatprep.subr.bf16.mxu0 0
        %667 = vmatpush1.bf16.xpose.msra.mxu0 0
        %668 = vmatprep.subr.bf16.mxu0 0
        %669 = vmatpush1.bf16.xpose.msra.mxu0 0
        %670 = vmatprep.subr.bf16.mxu0 0
        %671 = vmatpush1.bf16.xpose.msra.mxu0 0
        %672 = vmatprep.subr.bf16.mxu0 0
        %673 = vmatpush1.bf16.xpose.msra.mxu0 0
        %674 = vmatprep.subr.bf16.mxu0 0
        %675 = vmatpush1.bf16.xpose.msra.mxu0 0
        %676 = vmatprep.subr.bf16.mxu0 0
        %677 = vmatpush1.bf16.xpose.msra.mxu0 %v660
        %678 = vmatprep.subr.bf16.mxu0 0
        %679 = vmatpush2.bf16.xpose.msra.mxu0 0
        %680 = vmatprep.subr.bf16.mxu0 0
        %681 = vmatpush2.bf16.xpose.msra.mxu0 0
        %682 = vmatprep.subr.bf16.mxu0 0
        %683 = vmatpush2.bf16.xpose.msra.mxu0 0
        %684 = vmatprep.subr.bf16.mxu0 0
        %685 = vmatpush2.bf16.xpose.msra.mxu0 0
        %686 = vmatprep.subr.bf16.mxu0 0
        %687 = vmatpush2.bf16.xpose.msra.mxu0 0
        %688 = vmatprep.subr.bf16.mxu0 0
        %689 = vmatpush2.bf16.xpose.msra.mxu0 0
        %690 = vmatprep.subr.bf16.mxu0 0
        %691 = vmatpush2.bf16.xpose.msra.mxu0 0
        %692 = vmatprep.subr.bf16.mxu0 0
        %693 = vmatpush2.bf16.xpose.msra.mxu0 0
        %694 = vmatprep.mubr.bf16.mxu0 0
        %695 = vmatmul.mubr.bf16.gmra.mxu0 %v657
        %v696 = vpop.f32.mrf.mxu0
        %v697 = vadd.f32 0.0, %v696
        %v698 = vpop.f32.mrf.mxu0
        %v699 = vpop.f32.mrf.mxu0
        %v700 = vpop.f32.mrf.mxu0
        %701 = vdwg.mxu0
        %v702 = vsel %vm583, %v697, -inf
        %703 = vmax.xlane.f32.xlu0 %v702
        %v704 = vpop.xlane.xlu0 %703
        %v705 = vsub.f32 %v697, %v704
        %v706 = vmul.f32 %v705, 1.442695
        %v707 = vpow.pop %v706
        %v708 = vsel %vm583, %v707, 0.0
        %709 = vadd.xlane.f32.xlu0 %v708
        %v710 = vpop.xlane.xlu0 %709
        %v711 = vrcp.pop %v710
        %v712 = vpack.c.bf16 %v707, %v707
        %v714 = vunpack.c.l.b16 %v647
        %v715 = vpack.c.b16 %v714, %v714
        %716 = vrot.lane.b32.xlu0 %v715, 124
        %v717 = vpop.permute.xlu0 %716
        %v719 = vsel %vm583, %v712, 0
        %v722 = vsel %vm598, %v717, 0
        %724 = vmatprep.subr.bf16.mxu0 0
        %725 = vmatpush1.bf16.msra.mxu0 0
        %726 = vmatprep.subr.bf16.mxu0 0
        %727 = vmatpush1.bf16.msra.mxu0 0
        %728 = vmatprep.subr.bf16.mxu0 0
        %729 = vmatpush1.bf16.msra.mxu0 0
        %730 = vmatprep.subr.bf16.mxu0 0
        %731 = vmatpush1.bf16.msra.mxu0 0
        %732 = vmatprep.subr.bf16.mxu0 0
        %733 = vmatpush1.bf16.msra.mxu0 0
        %734 = vmatprep.subr.bf16.mxu0 0
        %735 = vmatpush1.bf16.msra.mxu0 0
        %736 = vmatprep.subr.bf16.mxu0 0
        %737 = vmatpush1.bf16.msra.mxu0 0
        %738 = vmatprep.subr.bf16.mxu0 0
        %739 = vmatpush1.bf16.msra.mxu0 %v722
        %740 = vmatprep.subr.bf16.mxu0 0
        %741 = vmatpush2.bf16.msra.mxu0 0
        %742 = vmatprep.subr.bf16.mxu0 0
        %743 = vmatpush2.bf16.msra.mxu0 0
        %744 = vmatprep.subr.bf16.mxu0 0
        %745 = vmatpush2.bf16.msra.mxu0 0
        %746 = vmatprep.subr.bf16.mxu0 0
        %747 = vmatpush2.bf16.msra.mxu0 0
        %748 = vmatprep.subr.bf16.mxu0 0
        %749 = vmatpush2.bf16.msra.mxu0 0
        %750 = vmatprep.subr.bf16.mxu0 0
        %751 = vmatpush2.bf16.msra.mxu0 0
        %752 = vmatprep.subr.bf16.mxu0 0
        %753 = vmatpush2.bf16.msra.mxu0 0
        %754 = vmatprep.subr.bf16.mxu0 0
        %755 = vmatpush2.bf16.msra.mxu0 0
        %756 = vmatprep.mubr.bf16.mxu0 0
        %757 = vmatmul.mubr.bf16.gmra.mxu0 %v719
        %v758 = vpop.f32.mrf.mxu0
        %v759 = vadd.f32 0.0, %v758
        %v760 = vpop.f32.mrf.mxu0
        %v761 = vpop.f32.mrf.mxu0
        %v762 = vpop.f32.mrf.mxu0
        %763 = vdwg.mxu0
        %v764 = vmul.f32 %v759, %v711
        %v765 = vpack.c.bf16 %v764, %v764
        %v767 = vunpack.c.l.b16 %v765
        %v768 = vpack.c.b16 %v767, %v767
        %769 = vrot.lane.b32.xlu0 %v768, 4
        %v770 = vpop.permute.xlu0 %769
        %vm772 = vcmask 60448
        %773 = vst.msk [vmem:[#allocation4] sm:$0xf] %vm772, %v770
        %v774 = vld [vmem:[#allocation2] sm:$0xf]
        %v775 = vld [vmem:[#allocation3] sm:$0xf]
        %776 = vrot.lane.b32.xlu0 %v533, 120
        %v777 = vpop.permute.xlu0 %776
        %v779 = vunpack.c.l.b16 %v774
        %v780 = vpack.c.b16 %v779, %v779
        %781 = vrot.lane.b32.xlu0 %v780, 120
        %v782 = vpop.permute.xlu0 %781
        %v784 = vsel %vm536, %v777, 0
        %v787 = vsel %vm536, %v782, 0
        %789 = vmatprep.subr.bf16.mxu0 0
        %790 = vmatpush1.bf16.xpose.msra.mxu0 0
        %791 = vmatprep.subr.bf16.mxu0 0
        %792 = vmatpush1.bf16.xpose.msra.mxu0 0
        %793 = vmatprep.subr.bf16.mxu0 0
        %794 = vmatpush1.bf16.xpose.msra.mxu0 0
        %795 = vmatprep.subr.bf16.mxu0 0
        %796 = vmatpush1.bf16.xpose.msra.mxu0 0
        %797 = vmatprep.subr.bf16.mxu0 0
        %798 = vmatpush1.bf16.xpose.msra.mxu0 0
        %799 = vmatprep.subr.bf16.mxu0 0
        %800 = vmatpush1.bf16.xpose.msra.mxu0 0
        %801 = vmatprep.subr.bf16.mxu0 0
        %802 = vmatpush1.bf16.xpose.msra.mxu0 0
        %803 = vmatprep.subr.bf16.mxu0 0
        %804 = vmatpush1.bf16.xpose.msra.mxu0 %v787
        %805 = vmatprep.subr.bf16.mxu0 0
        %806 = vmatpush2.bf16.xpose.msra.mxu0 0
        %807 = vmatprep.subr.bf16.mxu0 0
        %808 = vmatpush2.bf16.xpose.msra.mxu0 0
        %809 = vmatprep.subr.bf16.mxu0 0
        %810 = vmatpush2.bf16.xpose.msra.mxu0 0
        %811 = vmatprep.subr.bf16.mxu0 0
        %812 = vmatpush2.bf16.xpose.msra.mxu0 0
        %813 = vmatprep.subr.bf16.mxu0 0
        %814 = vmatpush2.bf16.xpose.msra.mxu0 0
        %815 = vmatprep.subr.bf16.mxu0 0
        %816 = vmatpush2.bf16.xpose.msra.mxu0 0
        %817 = vmatprep.subr.bf16.mxu0 0
        %818 = vmatpush2.bf16.xpose.msra.mxu0 0
        %819 = vmatprep.subr.bf16.mxu0 0
        %820 = vmatpush2.bf16.xpose.msra.mxu0 0
        %821 = vmatprep.mubr.bf16.mxu0 0
        %822 = vmatmul.mubr.bf16.gmra.mxu0 %v784
        %v823 = vpop.f32.mrf.mxu0
        %v824 = vadd.f32 0.0, %v823
        %v825 = vpop.f32.mrf.mxu0
        %v826 = vpop.f32.mrf.mxu0
        %v827 = vpop.f32.mrf.mxu0
        %828 = vdwg.mxu0
        %v829 = vsel %vm583, %v824, -inf
        %830 = vmax.xlane.f32.xlu0 %v829
        %v831 = vpop.xlane.xlu0 %830
        %v832 = vsub.f32 %v824, %v831
        %v833 = vmul.f32 %v832, 1.442695
        %v834 = vpow.pop %v833
        %v835 = vsel %vm583, %v834, 0.0
        %836 = vadd.xlane.f32.xlu0 %v835
        %v837 = vpop.xlane.xlu0 %836
        %v838 = vrcp.pop %v837
        %v839 = vpack.c.bf16 %v834, %v834
        %v841 = vunpack.c.l.b16 %v775
        %v842 = vpack.c.b16 %v841, %v841
        %843 = vrot.lane.b32.xlu0 %v842, 120
        %v844 = vpop.permute.xlu0 %843
        %v846 = vsel %vm583, %v839, 0
        %v849 = vsel %vm598, %v844, 0
        %851 = vmatprep.subr.bf16.mxu0 0
        %852 = vmatpush1.bf16.msra.mxu0 0
        %853 = vmatprep.subr.bf16.mxu0 0
        %854 = vmatpush1.bf16.msra.mxu0 0
        %855 = vmatprep.subr.bf16.mxu0 0
        %856 = vmatpush1.bf16.msra.mxu0 0
        %857 = vmatprep.subr.bf16.mxu0 0
        %858 = vmatpush1.bf16.msra.mxu0 0
        %859 = vmatprep.subr.bf16.mxu0 0
        %860 = vmatpush1.bf16.msra.mxu0 0
        %861 = vmatprep.subr.bf16.mxu0 0
        %862 = vmatpush1.bf16.msra.mxu0 0
        %863 = vmatprep.subr.bf16.mxu0 0
        %864 = vmatpush1.bf16.msra.mxu0 0
        %865 = vmatprep.subr.bf16.mxu0 0
        %866 = vmatpush1.bf16.msra.mxu0 %v849
        %867 = vmatprep.subr.bf16.mxu0 0
        %868 = vmatpush2.bf16.msra.mxu0 0
        %869 = vmatprep.subr.bf16.mxu0 0
        %870 = vmatpush2.bf16.msra.mxu0 0
        %871 = vmatprep.subr.bf16.mxu0 0
        %872 = vmatpush2.bf16.msra.mxu0 0
        %873 = vmatprep.subr.bf16.mxu0 0
        %874 = vmatpush2.bf16.msra.mxu0 0
        %875 = vmatprep.subr.bf16.mxu0 0
        %876 = vmatpush2.bf16.msra.mxu0 0
        %877 = vmatprep.subr.bf16.mxu0 0
        %878 = vmatpush2.bf16.msra.mxu0 0
        %879 = vmatprep.subr.bf16.mxu0 0
        %880 = vmatpush2.bf16.msra.mxu0 0
        %881 = vmatprep.subr.bf16.mxu0 0
        %882 = vmatpush2.bf16.msra.mxu0 0
        %883 = vmatprep.mubr.bf16.mxu0 0
        %884 = vmatmul.mubr.bf16.gmra.mxu0 %v846
        %v885 = vpop.f32.mrf.mxu0
        %v886 = vadd.f32 0.0, %v885
        %v887 = vpop.f32.mrf.mxu0
        %v888 = vpop.f32.mrf.mxu0
        %v889 = vpop.f32.mrf.mxu0
        %890 = vdwg.mxu0
        %v891 = vmul.f32 %v886, %v838
        %v892 = vpack.c.bf16 %v891, %v891
        %v894 = vunpack.c.l.b16 %v892
        %v895 = vpack.c.b16 %v894, %v894
        %896 = vrot.lane.b32.xlu0 %v895, 8
        %v897 = vpop.permute.xlu0 %896
        %vm899 = vcmask 93248
        %900 = vst.msk [vmem:[#allocation4] sm:$0xf] %vm899, %v897
        %v901 = vld [vmem:[#allocation2] sm:$0xf]
        %v902 = vld [vmem:[#allocation3] sm:$0xf]
        %903 = vrot.lane.b32.xlu0 %v533, 116
        %v904 = vpop.permute.xlu0 %903
        %v906 = vunpack.c.l.b16 %v901
        %v907 = vpack.c.b16 %v906, %v906
        %908 = vrot.lane.b32.xlu0 %v907, 116
        %v909 = vpop.permute.xlu0 %908
        %v911 = vsel %vm536, %v904, 0
        %v914 = vsel %vm536, %v909, 0
        %916 = vmatprep.subr.bf16.mxu0 0
        %917 = vmatpush1.bf16.xpose.msra.mxu0 0
        %918 = vmatprep.subr.bf16.mxu0 0
        %919 = vmatpush1.bf16.xpose.msra.mxu0 0
        %920 = vmatprep.subr.bf16.mxu0 0
        %921 = vmatpush1.bf16.xpose.msra.mxu0 0
        %922 = vmatprep.subr.bf16.mxu0 0
        %923 = vmatpush1.bf16.xpose.msra.mxu0 0
        %924 = vmatprep.subr.bf16.mxu0 0
        %925 = vmatpush1.bf16.xpose.msra.mxu0 0
        %926 = vmatprep.subr.bf16.mxu0 0
        %927 = vmatpush1.bf16.xpose.msra.mxu0 0
        %928 = vmatprep.subr.bf16.mxu0 0
        %929 = vmatpush1.bf16.xpose.msra.mxu0 0
        %930 = vmatprep.subr.bf16.mxu0 0
        %931 = vmatpush1.bf16.xpose.msra.mxu0 %v914
        %932 = vmatprep.subr.bf16.mxu0 0
        %933 = vmatpush2.bf16.xpose.msra.mxu0 0
        %934 = vmatprep.subr.bf16.mxu0 0
        %935 = vmatpush2.bf16.xpose.msra.mxu0 0
        %936 = vmatprep.subr.bf16.mxu0 0
        %937 = vmatpush2.bf16.xpose.msra.mxu0 0
        %938 = vmatprep.subr.bf16.mxu0 0
        %939 = vmatpush2.bf16.xpose.msra.mxu0 0
        %940 = vmatprep.subr.bf16.mxu0 0
        %941 = vmatpush2.bf16.xpose.msra.mxu0 0
        %942 = vmatprep.subr.bf16.mxu0 0
        %943 = vmatpush2.bf16.xpose.msra.mxu0 0
        %944 = vmatprep.subr.bf16.mxu0 0
        %945 = vmatpush2.bf16.xpose.msra.mxu0 0
        %946 = vmatprep.subr.bf16.mxu0 0
        %947 = vmatpush2.bf16.xpose.msra.mxu0 0
        %948 = vmatprep.mubr.bf16.mxu0 0
        %949 = vmatmul.mubr.bf16.gmra.mxu0 %v911
        %v950 = vpop.f32.mrf.mxu0
        %v951 = vadd.f32 0.0, %v950
        %v952 = vpop.f32.mrf.mxu0
        %v953 = vpop.f32.mrf.mxu0
        %v954 = vpop.f32.mrf.mxu0
        %955 = vdwg.mxu0
        %v956 = vsel %vm583, %v951, -inf
        %957 = vmax.xlane.f32.xlu0 %v956
        %v958 = vpop.xlane.xlu0 %957
        %v959 = vsub.f32 %v951, %v958
        %v960 = vmul.f32 %v959, 1.442695
        %v961 = vpow.pop %v960
        %v962 = vsel %vm583, %v961, 0.0
        %963 = vadd.xlane.f32.xlu0 %v962
        %v964 = vpop.xlane.xlu0 %963
        %v965 = vrcp.pop %v964
        %v966 = vpack.c.bf16 %v961, %v961
        %v968 = vunpack.c.l.b16 %v902
        %v969 = vpack.c.b16 %v968, %v968
        %970 = vrot.lane.b32.xlu0 %v969, 116
        %v971 = vpop.permute.xlu0 %970
        %v973 = vsel %vm583, %v966, 0
        %v976 = vsel %vm598, %v971, 0
        %978 = vmatprep.subr.bf16.mxu0 0
        %979 = vmatpush1.bf16.msra.mxu0 0
        %980 = vmatprep.subr.bf16.mxu0 0
        %981 = vmatpush1.bf16.msra.mxu0 0
        %982 = vmatprep.subr.bf16.mxu0 0
        %983 = vmatpush1.bf16.msra.mxu0 0
        %984 = vmatprep.subr.bf16.mxu0 0
        %985 = vmatpush1.bf16.msra.mxu0 0
        %986 = vmatprep.subr.bf16.mxu0 0
        %987 = vmatpush1.bf16.msra.mxu0 0
        %988 = vmatprep.subr.bf16.mxu0 0
        %989 = vmatpush1.bf16.msra.mxu0 0
        %990 = vmatprep.subr.bf16.mxu0 0
        %991 = vmatpush1.bf16.msra.mxu0 0
        %992 = vmatprep.subr.bf16.mxu0 0
        %993 = vmatpush1.bf16.msra.mxu0 %v976
        %994 = vmatprep.subr.bf16.mxu0 0
        %995 = vmatpush2.bf16.msra.mxu0 0
        %996 = vmatprep.subr.bf16.mxu0 0
        %997 = vmatpush2.bf16.msra.mxu0 0
        %998 = vmatprep.subr.bf16.mxu0 0
        %999 = vmatpush2.bf16.msra.mxu0 0
        %1000 = vmatprep.subr.bf16.mxu0 0
        %1001 = vmatpush2.bf16.msra.mxu0 0
        %1002 = vmatprep.subr.bf16.mxu0 0
        %1003 = vmatpush2.bf16.msra.mxu0 0
        %1004 = vmatprep.subr.bf16.mxu0 0
        %1005 = vmatpush2.bf16.msra.mxu0 0
        %1006 = vmatprep.subr.bf16.mxu0 0
        %1007 = vmatpush2.bf16.msra.mxu0 0
        %1008 = vmatprep.subr.bf16.mxu0 0
        %1009 = vmatpush2.bf16.msra.mxu0 0
        %1010 = vmatprep.mubr.bf16.mxu0 0
        %1011 = vmatmul.mubr.bf16.gmra.mxu0 %v973
        %v1012 = vpop.f32.mrf.mxu0
        %v1013 = vadd.f32 0.0, %v1012
        %v1014 = vpop.f32.mrf.mxu0
        %v1015 = vpop.f32.mrf.mxu0
        %v1016 = vpop.f32.mrf.mxu0
        %1017 = vdwg.mxu0
        %v1018 = vmul.f32 %v1013, %v965
        %v1019 = vpack.c.bf16 %v1018, %v1018
        %v1021 = vunpack.c.l.b16 %v1019
        %v1022 = vpack.c.b16 %v1021, %v1021
        %1023 = vrot.lane.b32.xlu0 %v1022, 12
        %v1024 = vpop.permute.xlu0 %1023
        %vm1026 = vcmask 126048
        %1027 = vst.msk [vmem:[#allocation4] sm:$0xf] %vm1026, %v1024
        %v1028 = vld [vmem:[#allocation2] sm:$0xf]
        %v1029 = vld [vmem:[#allocation3] sm:$0xf]
        %1030 = vrot.lane.b32.xlu0 %v533, 112
        %v1031 = vpop.permute.xlu0 %1030
        %v1033 = vunpack.c.l.b16 %v1028
        %v1034 = vpack.c.b16 %v1033, %v1033
        %1035 = vrot.lane.b32.xlu0 %v1034, 112
        %v1036 = vpop.permute.xlu0 %1035
        %v1038 = vsel %vm536, %v1031, 0
        %v1041 = vsel %vm536, %v1036, 0
        %1043 = vmatprep.subr.bf16.mxu0 0
        %1044 = vmatpush1.bf16.xpose.msra.mxu0 0
        %1045 = vmatprep.subr.bf16.mxu0 0
        %1046 = vmatpush1.bf16.xpose.msra.mxu0 0
        %1047 = vmatprep.subr.bf16.mxu0 0
        %1048 = vmatpush1.bf16.xpose.msra.mxu0 0
        %1049 = vmatprep.subr.bf16.mxu0 0
        %1050 = vmatpush1.bf16.xpose.msra.mxu0 0
        %1051 = vmatprep.subr.bf16.mxu0 0
        %1052 = vmatpush1.bf16.xpose.msra.mxu0 0
        %1053 = vmatprep.subr.bf16.mxu0 0
        %1054 = vmatpush1.bf16.xpose.msra.mxu0 0
        %1055 = vmatprep.subr.bf16.mxu0 0
        %1056 = vmatpush1.bf16.xpose.msra.mxu0 0
        %1057 = vmatprep.subr.bf16.mxu0 0
        %1058 = vmatpush1.bf16.xpose.msra.mxu0 %v1041
        %1059 = vmatprep.subr.bf16.mxu0 0
        %1060 = vmatpush2.bf16.xpose.msra.mxu0 0
        %1061 = vmatprep.subr.bf16.mxu0 0
        %1062 = vmatpush2.bf16.xpose.msra.mxu0 0
        %1063 = vmatprep.subr.bf16.mxu0 0
        %1064 = vmatpush2.bf16.xpose.msra.mxu0 0
        %1065 = vmatprep.subr.bf16.mxu0 0
        %1066 = vmatpush2.bf16.xpose.msra.mxu0 0
        %1067 = vmatprep.subr.bf16.mxu0 0
        %1068 = vmatpush2.bf16.xpose.msra.mxu0 0
        %1069 = vmatprep.subr.bf16.mxu0 0
        %1070 = vmatpush2.bf16.xpose.msra.mxu0 0
        %1071 = vmatprep.subr.bf16.mxu0 0
        %1072 = vmatpush2.bf16.xpose.msra.mxu0 0
        %1073 = vmatprep.subr.bf16.mxu0 0
        %1074 = vmatpush2.bf16.xpose.msra.mxu0 0
        %1075 = vmatprep.mubr.bf16.mxu0 0
        %1076 = vmatmul.mubr.bf16.gmra.mxu0 %v1038
        %v1077 = vpop.f32.mrf.mxu0
        %v1078 = vadd.f32 0.0, %v1077
        %v1079 = vpop.f32.mrf.mxu0
        %v1080 = vpop.f32.mrf.mxu0
        %v1081 = vpop.f32.mrf.mxu0
        %1082 = vdwg.mxu0
        %v1083 = vsel %vm583, %v1078, -inf
        %1084 = vmax.xlane.f32.xlu0 %v1083
        %v1085 = vpop.xlane.xlu0 %1084
        %v1086 = vsub.f32 %v1078, %v1085
        %v1087 = vmul.f32 %v1086, 1.442695
        %v1088 = vpow.pop %v1087
        %v1089 = vsel %vm583, %v1088, 0.0
        %1090 = vadd.xlane.f32.xlu0 %v1089
        %v1091 = vpop.xlane.xlu0 %1090
        %v1092 = vrcp.pop %v1091
        %v1093 = vpack.c.bf16 %v1088, %v1088
        %v1095 = vunpack.c.l.b16 %v1029
        %v1096 = vpack.c.b16 %v1095, %v1095
        %1097 = vrot.lane.b32.xlu0 %v1096, 112
        %v1098 = vpop.permute.xlu0 %1097
        %v1100 = vsel %vm583, %v1093, 0
        %v1103 = vsel %vm598, %v1098, 0
        %1105 = vmatprep.subr.bf16.mxu0 0
        %1106 = vmatpush1.bf16.msra.mxu0 0
        %1107 = vmatprep.subr.bf16.mxu0 0
        %1108 = vmatpush1.bf16.msra.mxu0 0
        %1109 = vmatprep.subr.bf16.mxu0 0
        %1110 = vmatpush1.bf16.msra.mxu0 0
        %1111 = vmatprep.subr.bf16.mxu0 0
        %1112 = vmatpush1.bf16.msra.mxu0 0
        %1113 = vmatprep.subr.bf16.mxu0 0
        %1114 = vmatpush1.bf16.msra.mxu0 0
        %1115 = vmatprep.subr.bf16.mxu0 0
        %1116 = vmatpush1.bf16.msra.mxu0 0
        %1117 = vmatprep.subr.bf16.mxu0 0
        %1118 = vmatpush1.bf16.msra.mxu0 0
        %1119 = vmatprep.subr.bf16.mxu0 0
        %1120 = vmatpush1.bf16.msra.mxu0 %v1103
        %1121 = vmatprep.subr.bf16.mxu0 0
        %1122 = vmatpush2.bf16.msra.mxu0 0
        %1123 = vmatprep.subr.bf16.mxu0 0
        %1124 = vmatpush2.bf16.msra.mxu0 0
        %1125 = vmatprep.subr.bf16.mxu0 0
        %1126 = vmatpush2.bf16.msra.mxu0 0
        %1127 = vmatprep.subr.bf16.mxu0 0
        %1128 = vmatpush2.bf16.msra.mxu0 0
        %1129 = vmatprep.subr.bf16.mxu0 0
        %1130 = vmatpush2.bf16.msra.mxu0 0
        %1131 = vmatprep.subr.bf16.mxu0 0
        %1132 = vmatpush2.bf16.msra.mxu0 0
        %1133 = vmatprep.subr.bf16.mxu0 0
        %1134 = vmatpush2.bf16.msra.mxu0 0
        %1135 = vmatprep.subr.bf16.mxu0 0
        %1136 = vmatpush2.bf16.msra.mxu0 0
        %1137 = vmatprep.mubr.bf16.mxu0 0
        %1138 = vmatmul.mubr.bf16.gmra.mxu0 %v1100
        %v1139 = vpop.f32.mrf.mxu0
        %v1140 = vadd.f32 0.0, %v1139
        %v1141 = vpop.f32.mrf.mxu0
        %v1142 = vpop.f32.mrf.mxu0
        %v1143 = vpop.f32.mrf.mxu0
        %1144 = vdwg.mxu0
        %v1145 = vmul.f32 %v1140, %v1092
        %v1146 = vpack.c.bf16 %v1145, %v1145
        %v1148 = vunpack.c.l.b16 %v1146
        %v1149 = vpack.c.b16 %v1148, %v1148
        %1150 = vrot.lane.b32.xlu0 %v1149, 16
        %v1151 = vpop.permute.xlu0 %1150
        %vm1153 = vcmask 158848
        %1154 = vst.msk [vmem:[#allocation4] sm:$0xf] %vm1153, %v1151
        %v1155 = vld [vmem:[#allocation2] sm:$0xf]
        %v1156 = vld [vmem:[#allocation3] sm:$0xf]
        %1157 = vrot.lane.b32.xlu0 %v533, 108
        %v1158 = vpop.permute.xlu0 %1157
        %v1160 = vunpack.c.l.b16 %v1155
        %v1161 = vpack.c.b16 %v1160, %v1160
        %1162 = vrot.lane.b32.xlu0 %v1161, 108
        %v1163 = vpop.permute.xlu0 %1162
        %v1165 = vsel %vm536, %v1158, 0
        %v1168 = vsel %vm536, %v1163, 0
        %1170 = vmatprep.subr.bf16.mxu0 0
        %1171 = vmatpush1.bf16.xpose.msra.mxu0 0
        %1172 = vmatprep.subr.bf16.mxu0 0
        %1173 = vmatpush1.bf16.xpose.msra.mxu0 0
        %1174 = vmatprep.subr.bf16.mxu0 0
        %1175 = vmatpush1.bf16.xpose.msra.mxu0 0
        %1176 = vmatprep.subr.bf16.mxu0 0
        %1177 = vmatpush1.bf16.xpose.msra.mxu0 0
        %1178 = vmatprep.subr.bf16.mxu0 0
        %1179 = vmatpush1.bf16.xpose.msra.mxu0 0
        %1180 = vmatprep.subr.bf16.mxu0 0
        %1181 = vmatpush1.bf16.xpose.msra.mxu0 0
        %1182 = vmatprep.subr.bf16.mxu0 0
        %1183 = vmatpush1.bf16.xpose.msra.mxu0 0
        %1184 = vmatprep.subr.bf16.mxu0 0
        %1185 = vmatpush1.bf16.xpose.msra.mxu0 %v1168
        %1186 = vmatprep.subr.bf16.mxu0 0
        %1187 = vmatpush2.bf16.xpose.msra.mxu0 0
        %1188 = vmatprep.subr.bf16.mxu0 0
        %1189 = vmatpush2.bf16.xpose.msra.mxu0 0
        %1190 = vmatprep.subr.bf16.mxu0 0
        %1191 = vmatpush2.bf16.xpose.msra.mxu0 0
        %1192 = vmatprep.subr.bf16.mxu0 0
        %1193 = vmatpush2.bf16.xpose.msra.mxu0 0
        %1194 = vmatprep.subr.bf16.mxu0 0
        %1195 = vmatpush2.bf16.xpose.msra.mxu0 0
        %1196 = vmatprep.subr.bf16.mxu0 0
        %1197 = vmatpush2.bf16.xpose.msra.mxu0 0
        %1198 = vmatprep.subr.bf16.mxu0 0
        %1199 = vmatpush2.bf16.xpose.msra.mxu0 0
        %1200 = vmatprep.subr.bf16.mxu0 0
        %1201 = vmatpush2.bf16.xpose.msra.mxu0 0
        %1202 = vmatprep.mubr.bf16.mxu0 0
        %1203 = vmatmul.mubr.bf16.gmra.mxu0 %v1165
        %v1204 = vpop.f32.mrf.mxu0
        %v1205 = vadd.f32 0.0, %v1204
        %v1206 = vpop.f32.mrf.mxu0
        %v1207 = vpop.f32.mrf.mxu0
        %v1208 = vpop.f32.mrf.mxu0
        %1209 = vdwg.mxu0
        %v1210 = vsel %vm583, %v1205, -inf
        %1211 = vmax.xlane.f32.xlu0 %v1210
        %v1212 = vpop.xlane.xlu0 %1211
        %v1213 = vsub.f32 %v1205, %v1212
        %v1214 = vmul.f32 %v1213, 1.442695
        %v1215 = vpow.pop %v1214
        %v1216 = vsel %vm583, %v1215, 0.0
        %1217 = vadd.xlane.f32.xlu0 %v1216
        %v1218 = vpop.xlane.xlu0 %1217
        %v1219 = vrcp.pop %v1218
        %v1220 = vpack.c.bf16 %v1215, %v1215
        %v1222 = vunpack.c.l.b16 %v1156
        %v1223 = vpack.c.b16 %v1222, %v1222
        %1224 = vrot.lane.b32.xlu0 %v1223, 108
        %v1225 = vpop.permute.xlu0 %1224
        %v1227 = vsel %vm583, %v1220, 0
        %v1230 = vsel %vm598, %v1225, 0
        %1232 = vmatprep.subr.bf16.mxu0 0
        %1233 = vmatpush1.bf16.msra.mxu0 0
        %1234 = vmatprep.subr.bf16.mxu0 0
        %1235 = vmatpush1.bf16.msra.mxu0 0
        %1236 = vmatprep.subr.bf16.mxu0 0
        %1237 = vmatpush1.bf16.msra.mxu0 0
        %1238 = vmatprep.subr.bf16.mxu0 0
        %1239 = vmatpush1.bf16.msra.mxu0 0
        %1240 = vmatprep.subr.bf16.mxu0 0
        %1241 = vmatpush1.bf16.msra.mxu0 0
        %1242 = vmatprep.subr.bf16.mxu0 0
        %1243 = vmatpush1.bf16.msra.mxu0 0
        %1244 = vmatprep.subr.bf16.mxu0 0
        %1245 = vmatpush1.bf16.msra.mxu0 0
        %1246 = vmatprep.subr.bf16.mxu0 0
        %1247 = vmatpush1.bf16.msra.mxu0 %v1230
        %1248 = vmatprep.subr.bf16.mxu0 0
        %1249 = vmatpush2.bf16.msra.mxu0 0
        %1250 = vmatprep.subr.bf16.mxu0 0
        %1251 = vmatpush2.bf16.msra.mxu0 0
        %1252 = vmatprep.subr.bf16.mxu0 0
        %1253 = vmatpush2.bf16.msra.mxu0 0
        %1254 = vmatprep.subr.bf16.mxu0 0
        %1255 = vmatpush2.bf16.msra.mxu0 0
        %1256 = vmatprep.subr.bf16.mxu0 0
        %1257 = vmatpush2.bf16.msra.mxu0 0
        %1258 = vmatprep.subr.bf16.mxu0 0
        %1259 = vmatpush2.bf16.msra.mxu0 0
        %1260 = vmatprep.subr.bf16.mxu0 0
        %1261 = vmatpush2.bf16.msra.mxu0 0
        %1262 = vmatprep.subr.bf16.mxu0 0
        %1263 = vmatpush2.bf16.msra.mxu0 0
        %1264 = vmatprep.mubr.bf16.mxu0 0
        %1265 = vmatmul.mubr.bf16.gmra.mxu0 %v1227
        %v1266 = vpop.f32.mrf.mxu0
        %v1267 = vadd.f32 0.0, %v1266
        %v1268 = vpop.f32.mrf.mxu0
        %v1269 = vpop.f32.mrf.mxu0
        %v1270 = vpop.f32.mrf.mxu0
        %1271 = vdwg.mxu0
        %v1272 = vmul.f32 %v1267, %v1219
        %v1273 = vpack.c.bf16 %v1272, %v1272
        %v1275 = vunpack.c.l.b16 %v1273
        %v1276 = vpack.c.b16 %v1275, %v1275
        %1277 = vrot.lane.b32.xlu0 %v1276, 20
        %v1278 = vpop.permute.xlu0 %1277
        %vm1280 = vcmask 191648
        %1281 = vst.msk [vmem:[#allocation4] sm:$0xf] %vm1280, %v1278
        %v1282 = vld [vmem:[#allocation2] sm:$0xf]
        %v1283 = vld [vmem:[#allocation3] sm:$0xf]
        %1284 = vrot.lane.b32.xlu0 %v533, 104
        %v1285 = vpop.permute.xlu0 %1284
        %v1287 = vunpack.c.l.b16 %v1282
        %v1288 = vpack.c.b16 %v1287, %v1287
        %1289 = vrot.lane.b32.xlu0 %v1288, 104
        %v1290 = vpop.permute.xlu0 %1289
        %v1292 = vsel %vm536, %v1285, 0
        %v1295 = vsel %vm536, %v1290, 0
        %1297 = vmatprep.subr.bf16.mxu0 0
        %1298 = vmatpush1.bf16.xpose.msra.mxu0 0
        %1299 = vmatprep.subr.bf16.mxu0 0
        %1300 = vmatpush1.bf16.xpose.msra.mxu0 0
        %1301 = vmatprep.subr.bf16.mxu0 0
        %1302 = vmatpush1.bf16.xpose.msra.mxu0 0
        %1303 = vmatprep.subr.bf16.mxu0 0
        %1304 = vmatpush1.bf16.xpose.msra.mxu0 0
        %1305 = vmatprep.subr.bf16.mxu0 0
        %1306 = vmatpush1.bf16.xpose.msra.mxu0 0
        %1307 = vmatprep.subr.bf16.mxu0 0
        %1308 = vmatpush1.bf16.xpose.msra.mxu0 0
        %1309 = vmatprep.subr.bf16.mxu0 0
        %1310 = vmatpush1.bf16.xpose.msra.mxu0 0
        %1311 = vmatprep.subr.bf16.mxu0 0
        %1312 = vmatpush1.bf16.xpose.msra.mxu0 %v1295
        %1313 = vmatprep.subr.bf16.mxu0 0
        %1314 = vmatpush2.bf16.xpose.msra.mxu0 0
        %1315 = vmatprep.subr.bf16.mxu0 0
        %1316 = vmatpush2.bf16.xpose.msra.mxu0 0
        %1317 = vmatprep.subr.bf16.mxu0 0
        %1318 = vmatpush2.bf16.xpose.msra.mxu0 0
        %1319 = vmatprep.subr.bf16.mxu0 0
        %1320 = vmatpush2.bf16.xpose.msra.mxu0 0
        %1321 = vmatprep.subr.bf16.mxu0 0
        %1322 = vmatpush2.bf16.xpose.msra.mxu0 0
        %1323 = vmatprep.subr.bf16.mxu0 0
        %1324 = vmatpush2.bf16.xpose.msra.mxu0 0
        %1325 = vmatprep.subr.bf16.mxu0 0
        %1326 = vmatpush2.bf16.xpose.msra.mxu0 0
        %1327 = vmatprep.subr.bf16.mxu0 0
        %1328 = vmatpush2.bf16.xpose.msra.mxu0 0
        %1329 = vmatprep.mubr.bf16.mxu0 0
        %1330 = vmatmul.mubr.bf16.gmra.mxu0 %v1292
        %v1331 = vpop.f32.mrf.mxu0
        %v1332 = vadd.f32 0.0, %v1331
        %v1333 = vpop.f32.mrf.mxu0
        %v1334 = vpop.f32.mrf.mxu0
        %v1335 = vpop.f32.mrf.mxu0
        %1336 = vdwg.mxu0
        %v1337 = vsel %vm583, %v1332, -inf
        %1338 = vmax.xlane.f32.xlu0 %v1337
        %v1339 = vpop.xlane.xlu0 %1338
        %v1340 = vsub.f32 %v1332, %v1339
        %v1341 = vmul.f32 %v1340, 1.442695
        %v1342 = vpow.pop %v1341
        %v1343 = vsel %vm583, %v1342, 0.0
        %1344 = vadd.xlane.f32.xlu0 %v1343
        %v1345 = vpop.xlane.xlu0 %1344
        %v1346 = vrcp.pop %v1345
        %v1347 = vpack.c.bf16 %v1342, %v1342
        %v1349 = vunpack.c.l.b16 %v1283
        %v1350 = vpack.c.b16 %v1349, %v1349
        %1351 = vrot.lane.b32.xlu0 %v1350, 104
        %v1352 = vpop.permute.xlu0 %1351
        %v1354 = vsel %vm583, %v1347, 0
        %v1357 = vsel %vm598, %v1352, 0
        %1359 = vmatprep.subr.bf16.mxu0 0
        %1360 = vmatpush1.bf16.msra.mxu0 0
        %1361 = vmatprep.subr.bf16.mxu0 0
        %1362 = vmatpush1.bf16.msra.mxu0 0
        %1363 = vmatprep.subr.bf16.mxu0 0
        %1364 = vmatpush1.bf16.msra.mxu0 0
        %1365 = vmatprep.subr.bf16.mxu0 0
        %1366 = vmatpush1.bf16.msra.mxu0 0
        %1367 = vmatprep.subr.bf16.mxu0 0
        %1368 = vmatpush1.bf16.msra.mxu0 0
        %1369 = vmatprep.subr.bf16.mxu0 0
        %1370 = vmatpush1.bf16.msra.mxu0 0
        %1371 = vmatprep.subr.bf16.mxu0 0
        %1372 = vmatpush1.bf16.msra.mxu0 0
        %1373 = vmatprep.subr.bf16.mxu0 0
        %1374 = vmatpush1.bf16.msra.mxu0 %v1357
        %1375 = vmatprep.subr.bf16.mxu0 0
        %1376 = vmatpush2.bf16.msra.mxu0 0
        %1377 = vmatprep.subr.bf16.mxu0 0
        %1378 = vmatpush2.bf16.msra.mxu0 0
        %1379 = vmatprep.subr.bf16.mxu0 0
        %1380 = vmatpush2.bf16.msra.mxu0 0
        %1381 = vmatprep.subr.bf16.mxu0 0
        %1382 = vmatpush2.bf16.msra.mxu0 0
        %1383 = vmatprep.subr.bf16.mxu0 0
        %1384 = vmatpush2.bf16.msra.mxu0 0
        %1385 = vmatprep.subr.bf16.mxu0 0
        %1386 = vmatpush2.bf16.msra.mxu0 0
        %1387 = vmatprep.subr.bf16.mxu0 0
        %1388 = vmatpush2.bf16.msra.mxu0 0
        %1389 = vmatprep.subr.bf16.mxu0 0
        %1390 = vmatpush2.bf16.msra.mxu0 0
        %1391 = vmatprep.mubr.bf16.mxu0 0
        %1392 = vmatmul.mubr.bf16.gmra.mxu0 %v1354
        %v1393 = vpop.f32.mrf.mxu0
        %v1394 = vadd.f32 0.0, %v1393
        %v1395 = vpop.f32.mrf.mxu0
        %v1396 = vpop.f32.mrf.mxu0
        %v1397 = vpop.f32.mrf.mxu0
        %1398 = vdwg.mxu0
        %v1399 = vmul.f32 %v1394, %v1346
        %v1400 = vpack.c.bf16 %v1399, %v1399
        %v1402 = vunpack.c.l.b16 %v1400
        %v1403 = vpack.c.b16 %v1402, %v1402
        %1404 = vrot.lane.b32.xlu0 %v1403, 24
        %v1405 = vpop.permute.xlu0 %1404
        %vm1407 = vcmask 224448
        %1408 = vst.msk [vmem:[#allocation4] sm:$0xf] %vm1407, %v1405
        %v1409 = vld [vmem:[#allocation2] sm:$0xf]
        %v1410 = vld [vmem:[#allocation3] sm:$0xf]
        %1411 = vrot.lane.b32.xlu0 %v533, 100
        %v1412 = vpop.permute.xlu0 %1411
        %v1414 = vunpack.c.l.b16 %v1409
        %v1415 = vpack.c.b16 %v1414, %v1414
        %1416 = vrot.lane.b32.xlu0 %v1415, 100
        %v1417 = vpop.permute.xlu0 %1416
        %v1419 = vsel %vm536, %v1412, 0
        %v1422 = vsel %vm536, %v1417, 0
        %1424 = vmatprep.subr.bf16.mxu0 0
        %1425 = vmatpush1.bf16.xpose.msra.mxu0 0
        %1426 = vmatprep.subr.bf16.mxu0 0
        %1427 = vmatpush1.bf16.xpose.msra.mxu0 0
        %1428 = vmatprep.subr.bf16.mxu0 0
        %1429 = vmatpush1.bf16.xpose.msra.mxu0 0
        %1430 = vmatprep.subr.bf16.mxu0 0
        %1431 = vmatpush1.bf16.xpose.msra.mxu0 0
        %1432 = vmatprep.subr.bf16.mxu0 0
        %1433 = vmatpush1.bf16.xpose.msra.mxu0 0
        %1434 = vmatprep.subr.bf16.mxu0 0
        %1435 = vmatpush1.bf16.xpose.msra.mxu0 0
        %1436 = vmatprep.subr.bf16.mxu0 0
        %1437 = vmatpush1.bf16.xpose.msra.mxu0 0
        %1438 = vmatprep.subr.bf16.mxu0 0
        %1439 = vmatpush1.bf16.xpose.msra.mxu0 %v1422
        %1440 = vmatprep.subr.bf16.mxu0 0
        %1441 = vmatpush2.bf16.xpose.msra.mxu0 0
        %1442 = vmatprep.subr.bf16.mxu0 0
        %1443 = vmatpush2.bf16.xpose.msra.mxu0 0
        %1444 = vmatprep.subr.bf16.mxu0 0
        %1445 = vmatpush2.bf16.xpose.msra.mxu0 0
        %1446 = vmatprep.subr.bf16.mxu0 0
        %1447 = vmatpush2.bf16.xpose.msra.mxu0 0
        %1448 = vmatprep.subr.bf16.mxu0 0
        %1449 = vmatpush2.bf16.xpose.msra.mxu0 0
        %1450 = vmatprep.subr.bf16.mxu0 0
        %1451 = vmatpush2.bf16.xpose.msra.mxu0 0
        %1452 = vmatprep.subr.bf16.mxu0 0
        %1453 = vmatpush2.bf16.xpose.msra.mxu0 0
        %1454 = vmatprep.subr.bf16.mxu0 0
        %1455 = vmatpush2.bf16.xpose.msra.mxu0 0
        %1456 = vmatprep.mubr.bf16.mxu0 0
        %1457 = vmatmul.mubr.bf16.gmra.mxu0 %v1419
        %v1458 = vpop.f32.mrf.mxu0
        %v1459 = vadd.f32 0.0, %v1458
        %v1460 = vpop.f32.mrf.mxu0
        %v1461 = vpop.f32.mrf.mxu0
        %v1462 = vpop.f32.mrf.mxu0
        %1463 = vdwg.mxu0
        %v1464 = vsel %vm583, %v1459, -inf
        %1465 = vmax.xlane.f32.xlu0 %v1464
        %v1466 = vpop.xlane.xlu0 %1465
        %v1467 = vsub.f32 %v1459, %v1466
        %v1468 = vmul.f32 %v1467, 1.442695
        %v1469 = vpow.pop %v1468
        %v1470 = vsel %vm583, %v1469, 0.0
        %1471 = vadd.xlane.f32.xlu0 %v1470
        %v1472 = vpop.xlane.xlu0 %1471
        %v1473 = vrcp.pop %v1472
        %v1474 = vpack.c.bf16 %v1469, %v1469
        %v1476 = vunpack.c.l.b16 %v1410
        %v1477 = vpack.c.b16 %v1476, %v1476
        %1478 = vrot.lane.b32.xlu0 %v1477, 100
        %v1479 = vpop.permute.xlu0 %1478
        %v1481 = vsel %vm583, %v1474, 0
        %v1484 = vsel %vm598, %v1479, 0
        %1486 = vmatprep.subr.bf16.mxu0 0
        %1487 = vmatpush1.bf16.msra.mxu0 0
        %1488 = vmatprep.subr.bf16.mxu0 0
        %1489 = vmatpush1.bf16.msra.mxu0 0
        %1490 = vmatprep.subr.bf16.mxu0 0
        %1491 = vmatpush1.bf16.msra.mxu0 0
        %1492 = vmatprep.subr.bf16.mxu0 0
        %1493 = vmatpush1.bf16.msra.mxu0 0
        %1494 = vmatprep.subr.bf16.mxu0 0
        %1495 = vmatpush1.bf16.msra.mxu0 0
        %1496 = vmatprep.subr.bf16.mxu0 0
        %1497 = vmatpush1.bf16.msra.mxu0 0
        %1498 = vmatprep.subr.bf16.mxu0 0
        %1499 = vmatpush1.bf16.msra.mxu0 0
        %1500 = vmatprep.subr.bf16.mxu0 0
        %1501 = vmatpush1.bf16.msra.mxu0 %v1484
        %1502 = vmatprep.subr.bf16.mxu0 0
        %1503 = vmatpush2.bf16.msra.mxu0 0
        %1504 = vmatprep.subr.bf16.mxu0 0
        %1505 = vmatpush2.bf16.msra.mxu0 0
        %1506 = vmatprep.subr.bf16.mxu0 0
        %1507 = vmatpush2.bf16.msra.mxu0 0
        %1508 = vmatprep.subr.bf16.mxu0 0
        %1509 = vmatpush2.bf16.msra.mxu0 0
        %1510 = vmatprep.subr.bf16.mxu0 0
        %1511 = vmatpush2.bf16.msra.mxu0 0
        %1512 = vmatprep.subr.bf16.mxu0 0
        %1513 = vmatpush2.bf16.msra.mxu0 0
        %1514 = vmatprep.subr.bf16.mxu0 0
        %1515 = vmatpush2.bf16.msra.mxu0 0
        %1516 = vmatprep.subr.bf16.mxu0 0
        %1517 = vmatpush2.bf16.msra.mxu0 0
        %1518 = vmatprep.mubr.bf16.mxu0 0
        %1519 = vmatmul.mubr.bf16.gmra.mxu0 %v1481
        %v1520 = vpop.f32.mrf.mxu0
        %v1521 = vadd.f32 0.0, %v1520
        %v1522 = vpop.f32.mrf.mxu0
        %v1523 = vpop.f32.mrf.mxu0
        %v1524 = vpop.f32.mrf.mxu0
        %1525 = vdwg.mxu0
        %v1526 = vmul.f32 %v1521, %v1473
        %v1527 = vpack.c.bf16 %v1526, %v1526
        %v1529 = vunpack.c.l.b16 %v1527
        %v1530 = vpack.c.b16 %v1529, %v1529
        %1531 = vrot.lane.b32.xlu0 %v1530, 28
        %v1532 = vpop.permute.xlu0 %1531
        %vm1534 = vcmask 257248
        %1535 = vst.msk [vmem:[#allocation4] sm:$0xf] %vm1534, %v1532
        %v1536 = vld [vmem:[#allocation4] sm:$0xf]
        %v1537 = vld [vmem:[#allocation13] sm:$0xf]
        %v1538 = vld [vmem:[#allocation13 + $0x4] sm:$0xf]
        %v1539 = vld [vmem:[#allocation13 + $0x8] sm:$0xf]
        %v1540 = vld [vmem:[#allocation13 + $0xc] sm:$0xf]
        %v1541 = vld [vmem:[%s5] sm:$0x1]
        %v1543 = vlaneseq
        %v1544 = vshrl.u32 %v1543, 7
        %v1545 = vsub.s32 0, %v1544
        %v1546 = vrot.slane %v1541, %v1545
        %v1552 = vunpack.c.l.b16 %v1537
        %v1553 = vunpack.c.l.b16 %v1538
        %v1554 = vunpack.c.l.b16 %v1539
        %v1555 = vunpack.c.l.b16 %v1540
        %v1556 = vpack.c.b16 %v1553, %v1552
        %v1557 = vpack.c.b16 %v1555, %v1554
        %v1561 = vsel %vm488, %v1536, 0
        %1563 = vmatprep.subr.bf16.mxu0 0
        %1564 = vmatpush1.bf16.msra.mxu0 0
        %1565 = vmatprep.subr.bf16.mxu0 0
        %1566 = vmatpush1.bf16.msra.mxu0 0
        %1567 = vmatprep.subr.bf16.mxu0 0
        %1568 = vmatpush1.bf16.msra.mxu0 0
        %1569 = vmatprep.subr.bf16.mxu0 0
        %1570 = vmatpush1.bf16.msra.mxu0 0
        %1571 = vmatprep.subr.bf16.mxu0 0
        %1572 = vmatpush1.bf16.msra.mxu0 0
        %1573 = vmatprep.subr.bf16.mxu0 0
        %1574 = vmatpush1.bf16.msra.mxu0 0
        %1575 = vmatprep.subr.bf16.mxu0 0
        %1576 = vmatpush1.bf16.msra.mxu0 %v1557
        %1577 = vmatprep.subr.bf16.mxu0 0
        %1578 = vmatpush1.bf16.msra.mxu0 %v1556
        %1579 = vmatprep.subr.bf16.mxu0 0
        %1580 = vmatpush2.bf16.msra.mxu0 0
        %1581 = vmatprep.subr.bf16.mxu0 0
        %1582 = vmatpush2.bf16.msra.mxu0 0
        %1583 = vmatprep.subr.bf16.mxu0 0
        %1584 = vmatpush2.bf16.msra.mxu0 0
        %1585 = vmatprep.subr.bf16.mxu0 0
        %1586 = vmatpush2.bf16.msra.mxu0 0
        %1587 = vmatprep.subr.bf16.mxu0 0
        %1588 = vmatpush2.bf16.msra.mxu0 0
        %1589 = vmatprep.subr.bf16.mxu0 0
        %1590 = vmatpush2.bf16.msra.mxu0 0
        %1591 = vmatprep.subr.bf16.mxu0 0
        %1592 = vmatpush2.bf16.msra.mxu0 0
        %1593 = vmatprep.subr.bf16.mxu0 0
        %1594 = vmatpush2.bf16.msra.mxu0 0
        %1595 = vmatprep.mubr.bf16.mxu0 0
        %1596 = vmatmul.mubr.bf16.gmra.mxu0 %v1561
        %v1597 = vpop.f32.mrf.mxu0
        %v1598 = vadd.f32 %v1546, %v1597
        %v1599 = vpop.f32.mrf.mxu0
        %v1600 = vpop.f32.mrf.mxu0
        %v1601 = vpop.f32.mrf.mxu0
        %1602 = vdwg.mxu0
        %1603 = vst.msk [vmem:[%s338] sm:$0xff] %vm488, %v1598
        %s1604 = sand.u32 %s178, 1
        %s1605 = scalar_lea.sflag [#allocation7], %s1604
        %s1606 = sand.u32 %s178, 1
        %s1607 = smul.addr %s1606, 8
        %s1608 = scalar_lea.vmem [#allocation14], %s1607
        // Predicated region
        $region69: #{tpu_custom_call.1} parent=43 // pred_check
          %p1609 = pneg %p188
        $region70: #{tpu_custom_call.1} parent=43 // pred_check_branch
          %1611 = sbr.rel (%p1609) target = $region72
        $region71: #{tpu_custom_call.1} parent=43 // pred_region
          %s1613 = ssub.s32 128, 128
          %1614 = vsyncadd %s1605, %s1613
          %s1615 = sadd.s32 %s30, %s29
          %s1616 = smul.addr %s1615, 128
          %s1617 = scalar_lea.hbm %s6, %s1616
          %s1619 = sshll.u32 %s1608, 4
          %s1620 = int_to_ptr.vmem [resolvable:$true] %s1619
          %1622 = dma.vmem_to_hbm [thread:$0]  %s1620, 128, %s1617, %s1605
        $region72: #{tpu_custom_call.1} parent=43 // pred_fallthru
          _
      $region44: #{tpu_custom_call.1} parent=5 // pred_fallthru
        _
      %p1623 = scmp.le.s32.totalorder 2, %s20
      // Predicated region
      $region73: #{tpu_custom_call.1} parent=5 // pred_check
        %p1624 = pneg %p1623
      $region74: #{tpu_custom_call.1} parent=5 // pred_check_branch
        %1626 = sbr.rel (%p1624) target = $region76
      $region75: #{tpu_custom_call.1} parent=5 // pred_region
        %s1627 = ssub.s32 %s20, 2
        // Predicated region
        $region77: #{tpu_custom_call.1} parent=75 // pred_check
          %p1628 = pneg %p194
        $region78: #{tpu_custom_call.1} parent=75 // pred_check_branch
          %1630 = sbr.rel (%p1628) target = $region80
        $region79: #{tpu_custom_call.1} parent=75 // pred_region
          %s1631 = sand.u32 %s179, 1
          %s1632 = scalar_lea.sflag [#allocation7], %s1631
          %s1633 = sand.u32 %s179, 1
          %s1634 = smul.addr %s1633, 8
          %s1635 = scalar_lea.vmem [#allocation14], %s1634
          %1636 = dma.done %s1632, 128
        $region80: #{tpu_custom_call.1} parent=75 // pred_fallthru
          _
      $region76: #{tpu_custom_call.1} parent=5 // pred_fallthru
        _
    $region6: #{tpu_custom_call.1} parent=1 // loop_footer
      %s24 = sadd.s32 1, %s20
    $region7: #{tpu_custom_call.1} parent=1 // loop_footer_branch
      %19 = sbr.rel target = $region3
    $region8: #{tpu_custom_call.1} parent=1 // loop_exit
      _
    %1637 = vsyncpa [#allocation6], 1
    %s1638 = scalar_lea.sflag [#allocation6], 1
    %1639 = vsyncpa %s1638, 1
    %1640 = vsyncpa [#allocation9], 1
    %1641 = vsyncpa [#allocation12], 1
    %1642 = vsyncpa [#allocation7], 1
    %s1643 = scalar_lea.sflag [#allocation7], 1
    %1644 = vsyncpa %s1643, 1

</llo_original>
